<compile_context>
chip_gen: v6e
topology: v6e:2x2x1
jax: 0.10.0
libtpu: 0.0.40
codegen_flags: <defaults>
</compile_context>

<pallas_src>
import jax
import jax.numpy as jnp
from jax.experimental import pallas as pl
from jax.experimental.pallas import tpu as pltpu


def _round_up(n, m):
    return ((n + m - 1) // m) * m


# ---------------------------------------------------------------------------
# Kernel 1: fused matmul + bias  (used for every conv layer after im2col)
# ---------------------------------------------------------------------------
def _matmul_bias_kernel(x_ref, w_ref, b_ref, o_ref):
    acc = jnp.dot(x_ref[...], w_ref[...], preferred_element_type=jnp.float32)
    o_ref[...] = (acc + b_ref[...]).astype(o_ref.dtype)


def matmul_bias(x, w, b, *, tile_m=256):
    """(M,K) @ (K,N) + (N,), padded to lane/sublane multiples; returns (M,N)."""
    m, k = x.shape
    k2, n = w.shape
    assert k == k2
    kp = _round_up(k, 128)
    np_ = _round_up(n, 128)
    tm = tile_m if m >= tile_m else _round_up(m, 8)
    mp = _round_up(m, tm)

    xp = jnp.zeros((mp, kp), x.dtype).at[:m, :k].set(x)
    wp = jnp.zeros((kp, np_), w.dtype).at[:k, :n].set(w)
    bp = jnp.zeros((1, np_), b.dtype).at[0, :n].set(b)

    cost = pl.CostEstimate(
        flops=2 * mp * kp * np_,
        transcendentals=0,
        bytes_accessed=4 * (mp * kp + kp * np_ + np_ + mp * np_),
    )
    out = pl.pallas_call(
        _matmul_bias_kernel,
        out_shape=jax.ShapeDtypeStruct((mp, np_), x.dtype),
        grid=(mp // tm,),
        in_specs=[
            pl.BlockSpec((tm, kp), lambda i: (i, 0)),    # activations: tiled rows
            pl.BlockSpec((kp, np_), lambda i: (0, 0)),   # weights: VMEM-resident
            pl.BlockSpec((1, np_), lambda i: (0, 0)),    # bias:    VMEM-resident
        ],
        out_specs=pl.BlockSpec((tm, np_), lambda i: (i, 0)),
        compiler_params=pltpu.CompilerParams(
            dimension_semantics=("parallel",)),
        cost_estimate=cost,
    )(xp, wp, bp)
    return out[:m, :n]


# ---------------------------------------------------------------------------
# Kernel 2: fused FC head  fc1->tanh->fc2->tanh->fc3->clamp->pred->clamp
# ---------------------------------------------------------------------------
def _head_kernel(x_ref, w1_ref, b1_ref, w2_ref, b2_ref, w3_ref, b3_ref,
                 w4_ref, b4_ref, o_ref):
    h = jnp.dot(x_ref[...], w1_ref[...], preferred_element_type=jnp.float32)
    h = jnp.tanh(h + b1_ref[...])
    h = jnp.dot(h, w2_ref[...], preferred_element_type=jnp.float32)
    h = jnp.tanh(h + b2_ref[...])
    h = jnp.dot(h, w3_ref[...], preferred_element_type=jnp.float32)
    h = jnp.clip(h + b3_ref[...], -1.0, 1.0)
    out = jnp.dot(h, w4_ref[...], preferred_element_type=jnp.float32)
    out = jnp.clip(out + b4_ref[...], -1.0, 1.0)
    # PyTorch clamps the prediction twice more; clamp is idempotent.
    o_ref[...] = out.astype(o_ref.dtype)


def head_mlp(feat, params):
    bsz, f = feat.shape
    mp = _round_up(bsz, 8)
    fp = _round_up(f, 128)

    def pad_w(w):
        k, n = w.shape
        return jnp.zeros((_round_up(k, 128), _round_up(n, 128)),
                         w.dtype).at[:k, :n].set(w)

    def pad_b(v):
        n = v.shape[0]
        return jnp.zeros((1, _round_up(n, 128)), v.dtype).at[0, :n].set(v)

    xp = jnp.zeros((mp, fp), feat.dtype).at[:bsz, :f].set(feat)
    args = [xp]
    for name in ("fc1", "fc2", "fc3", "pred"):
        args.append(pad_w(params[f"{name}_w"]))
        args.append(pad_b(params[f"{name}_b"]))

    out_dim = params["pred_w"].shape[1]
    np_ = _round_up(out_dim, 128)
    full = lambda shape: pl.BlockSpec(shape, lambda: (0,) * len(shape))

    out = pl.pallas_call(
        _head_kernel,
        out_shape=jax.ShapeDtypeStruct((mp, np_), feat.dtype),
        grid=(),
        in_specs=[full(a.shape) for a in args],
        out_specs=full((mp, np_)),
        cost_estimate=pl.CostEstimate(
            flops=2 * mp * (fp * 128 + 3 * 128 * 128),
            transcendentals=2 * mp * 128,
            bytes_accessed=4 * (sum(a.size for a in args) + mp * np_),
        ),
    )(*args)
    return out[:bsz, :out_dim]


# ---------------------------------------------------------------------------
# Wrapper: im2col (layout plumbing in XLA) + the two Pallas kernels
# ---------------------------------------------------------------------------
_CONV_CFG = ((5, 2), (5, 2), (5, 2), (3, 1), (3, 1))   # (kernel, stride)


def _im2col(x, k, s):
    """NHWC -> (B*OH*OW, k*k*C) patch matrix, feature order (kh, kw, c)."""
    bsz, h, w, c = x.shape
    oh = (h - k) // s + 1
    ow = (w - k) // s + 1
    cols = []
    for kh in range(k):
        for kw in range(k):
            cols.append(jax.lax.slice(
                x,
                (0, kh, kw, 0),
                (bsz, kh + (oh - 1) * s + 1, kw + (ow - 1) * s + 1, c),
                (1, s, s, 1)))
    patches = jnp.concatenate(cols, axis=-1)            # (B, OH, OW, k*k*C)
    return patches.reshape(bsz * oh * ow, k * k * c), (oh, ow)


def pilotnet_forward(x_nchw, params):
    x = jnp.transpose(x_nchw, (0, 2, 3, 1))             # NHWC
    for idx, (k, s) in enumerate(_CONV_CFG, start=1):
        w = params[f"conv{idx}_w"]                      # (k, k, Cin, Cout) HWIO
        b = params[f"conv{idx}_b"]
        bsz, _, _, cin = x.shape
        cout = w.shape[-1]
        patches, (oh, ow) = _im2col(x, k, s)
        y = matmul_bias(patches, w.reshape(k * k * cin, cout), b)
        x = y.reshape(bsz, oh, ow, cout)
    bsz = x.shape[0]
    # Flatten in PyTorch NCHW order so fc1's weight layout matches the original.
    feat = jnp.transpose(x, (0, 3, 1, 2)).reshape(bsz, -1)   # (B, 64*1*18)
    return head_mlp(feat, params)


# ---------------------------------------------------------------------------
# Params (PyTorch default U(-1/sqrt(fan_in), 1/sqrt(fan_in))) and reference
# ---------------------------------------------------------------------------
def init_params(key, input_channels=3, output_dim=1):
    conv_cfg = [(input_channels, 24, 5), (24, 36, 5), (36, 48, 5),
                (48, 64, 3), (64, 64, 3)]
    fc_cfg = [("fc1", 64 * 1 * 18, 100), ("fc2", 100, 50),
              ("fc3", 50, 10), ("pred", 10, output_dim)]
    keys = jax.random.split(key, 2 * (len(conv_cfg) + len(fc_cfg)))
    params, ki = {}, 0
    for i, (cin, cout, k) in enumerate(conv_cfg, start=1):
        bound = 1.0 / ((cin * k * k) ** 0.5)
        params[f"conv{i}_w"] = jax.random.uniform(
            keys[ki], (k, k, cin, cout), jnp.float32, minval=-bound, maxval=bound)
        ki += 1
        params[f"conv{i}_b"] = jax.random.uniform(
            keys[ki], (cout,), jnp.float32, minval=-bound, maxval=bound)
        ki += 1
    for name, din, dout in fc_cfg:
        bound = 1.0 / (din ** 0.5)
        params[f"{name}_w"] = jax.random.uniform(
            keys[ki], (din, dout), jnp.float32, minval=-bound, maxval=bound)
        ki += 1
        params[f"{name}_b"] = jax.random.uniform(
            keys[ki], (dout,), jnp.float32, minval=-bound, maxval=bound)
        ki += 1
    return params


def reference_forward(x_nchw, params):
    """Pure-JAX/XLA reference matching the PyTorch forward."""
    hp = jax.lax.Precision.HIGHEST
    x = jnp.transpose(x_nchw, (0, 2, 3, 1))
    for idx, (k, s) in enumerate(_CONV_CFG, start=1):
        x = jax.lax.conv_general_dilated(
            x, params[f"conv{idx}_w"], window_strides=(s, s), padding="VALID",
            dimension_numbers=("NHWC", "HWIO", "NHWC"),
            precision=hp) + params[f"conv{idx}_b"]
    bsz = x.shape[0]
    feat = jnp.transpose(x, (0, 3, 1, 2)).reshape(bsz, -1)
    h = jnp.tanh(jnp.dot(feat, params["fc1_w"], precision=hp) + params["fc1_b"])
    h = jnp.tanh(jnp.dot(h, params["fc2_w"], precision=hp) + params["fc2_b"])
    h = jnp.clip(jnp.dot(h, params["fc3_w"], precision=hp) + params["fc3_b"],
                 -1.0, 1.0)
    out = jnp.clip(jnp.dot(h, params["pred_w"], precision=hp) + params["pred_b"],
                   -1.0, 1.0)
    return jnp.clip(out, -1.0, 1.0)


if __name__ == "__main__":
    batch = 2
    input_channels = 3
    output_dim = 1
    # PilotNet's canonical input resolution: fc1 hardcodes 64*1*18, which
    # requires a 66x200 input through the five VALID convs.
    height, width = 66, 200

    key = jax.random.PRNGKey(0)
    kx, kp = jax.random.split(key)
    x = jax.random.normal(kx, (batch, input_channels, height, width), jnp.float32)
    params = init_params(kp, input_channels, output_dim)

    y = jax.block_until_ready(jax.jit(pilotnet_forward)(x, params))
    y_ref = reference_forward(x, params)

    assert y.shape == (batch, output_dim)
    assert bool(jnp.all(jnp.abs(y) <= 1.0 + 1e-6))
    assert jnp.allclose(y, y_ref, atol=1e-3, rtol=1e-3), \
        float(jnp.max(jnp.abs(y - y_ref)))
    print("KERNEL_OK")
</pallas_src>

<mosaic_0001>
module attributes {stable_mosaic.version = 11 : i64} {
  func.func @_matmul_bias_kernel(%arg0: i32, %arg1: memref<256x128xf32, #tpu.memory_space<vmem>>, %arg2: memref<128x128xf32, #tpu.memory_space<vmem>>, %arg3: memref<1x128xf32, #tpu.memory_space<vmem>>, %arg4: memref<256x128xf32, #tpu.memory_space<vmem>>) attributes {dimension_semantics = [#tpu.dimension_semantics<parallel>], iteration_bounds = array<i64: 24>, scalar_prefetch = 0 : i64, scratch_operands = 0 : i64, tpu.core_type = #tpu.core_type<tc>, window_params = [{transform_indices = @transform_0, window_bounds = array<i64: 256, 128>}, {pipeline_mode = #tpu.pipeline_mode<synchronous>, transform_indices = @transform_1, window_bounds = array<i64: 128, 128>}, {pipeline_mode = #tpu.pipeline_mode<synchronous>, transform_indices = @transform_2, window_bounds = array<i64: 1, 128>}, {transform_indices = @transform_3, window_bounds = array<i64: 256, 128>}]} {
    %c0 = arith.constant 0 : index
    %c0_0 = arith.constant 0 : index
    %0 = vector.load %arg1[%c0, %c0_0] : memref<256x128xf32, #tpu.memory_space<vmem>>, vector<256x128xf32>
    %c0_1 = arith.constant 0 : index
    %c0_2 = arith.constant 0 : index
    %1 = vector.load %arg2[%c0_1, %c0_2] : memref<128x128xf32, #tpu.memory_space<vmem>>, vector<128x128xf32>
    %cst = arith.constant dense<0.000000e+00> : vector<256x128xf32>
    %2 = tpu.matmul %0, %1, %cst {dimension_numbers = #tpu.dot_dimension_numbers<[1], [0], [0], [1], [0, 0, 1, 1], [], []>} : vector<256x128xf32>, vector<128x128xf32>, vector<256x128xf32> -> vector<256x128xf32>
    %c0_3 = arith.constant 0 : index
    %c0_4 = arith.constant 0 : index
    %3 = vector.load %arg3[%c0_3, %c0_4] : memref<1x128xf32, #tpu.memory_space<vmem>>, vector<1x128xf32>
    %4 = vector.broadcast %3 : vector<1x128xf32> to vector<256x128xf32>
    %5 = arith.addf %2, %4 : vector<256x128xf32>
    %c0_5 = arith.constant 0 : index
    %c0_6 = arith.constant 0 : index
    %6 = vector.load %arg4[%c0_5, %c0_6] : memref<256x128xf32, #tpu.memory_space<vmem>>, vector<256x128xf32>
    tpu.vector_store %arg4[%c0_5, %c0_6], %5 {strides = array<i32>} : memref<256x128xf32, #tpu.memory_space<vmem>>, vector<256x128xf32>,
    return
  }
  func.func @transform_0(%arg0: i32) -> (i32, i32) {
    %c0_i32 = arith.constant 0 : i32
    %c0_i32_0 = arith.constant 0 : i32
    return %arg0, %c0_i32 : i32, i32
  }
  func.func @transform_1(%arg0: i32) -> (i32, i32) {
    %c0_i32 = arith.constant 0 : i32
    %c0_i32_0 = arith.constant 0 : i32
    %c0_i32_1 = arith.constant 0 : i32
    return %c0_i32, %c0_i32_0 : i32, i32
  }
  func.func @transform_2(%arg0: i32) -> (i32, i32) {
    %c0_i32 = arith.constant 0 : i32
    %c0_i32_0 = arith.constant 0 : i32
    %c0_i32_1 = arith.constant 0 : i32
    return %c0_i32, %c0_i32_0 : i32, i32
  }
  func.func @transform_3(%arg0: i32) -> (i32, i32) {
    %c0_i32 = arith.constant 0 : i32
    %c0_i32_0 = arith.constant 0 : i32
    return %arg0, %c0_i32 : i32, i32
  }
}

module attributes {stable_mosaic.version = 11 : i64} {
  func.func @_matmul_bias_kernel(%arg0: i32, %arg1: memref<256x640xf32, #tpu.memory_space<vmem>>, %arg2: memref<640x128xf32, #tpu.memory_space<vmem>>, %arg3: memref<1x128xf32, #tpu.memory_space<vmem>>, %arg4: memref<256x128xf32, #tpu.memory_space<vmem>>) attributes {dimension_semantics = [#tpu.dimension_semantics<parallel>], iteration_bounds = array<i64: 6>, scalar_prefetch = 0 : i64, scratch_operands = 0 : i64, tpu.core_type = #tpu.core_type<tc>, window_params = [{transform_indices = @transform_0, window_bounds = array<i64: 256, 640>}, {pipeline_mode = #tpu.pipeline_mode<synchronous>, transform_indices = @transform_1, window_bounds = array<i64: 640, 128>}, {pipeline_mode = #tpu.pipeline_mode<synchronous>, transform_indices = @transform_2, window_bounds = array<i64: 1, 128>}, {transform_indices = @transform_3, window_bounds = array<i64: 256, 128>}]} {
    %c0 = arith.constant 0 : index
    %c0_0 = arith.constant 0 : index
    %0 = vector.load %arg1[%c0, %c0_0] : memref<256x640xf32, #tpu.memory_space<vmem>>, vector<256x640xf32>
    %c0_1 = arith.constant 0 : index
    %c0_2 = arith.constant 0 : index
    %1 = vector.load %arg2[%c0_1, %c0_2] : memref<640x128xf32, #tpu.memory_space<vmem>>, vector<640x128xf32>
    %cst = arith.constant dense<0.000000e+00> : vector<256x128xf32>
    %2 = tpu.matmul %0, %1, %cst {dimension_numbers = #tpu.dot_dimension_numbers<[1], [0], [0], [1], [0, 0, 1, 1], [], []>} : vector<256x640xf32>, vector<640x128xf32>, vector<256x128xf32> -> vector<256x128xf32>
    %c0_3 = arith.constant 0 : index
    %c0_4 = arith.constant 0 : index
    %3 = vector.load %arg3[%c0_3, %c0_4] : memref<1x128xf32, #tpu.memory_space<vmem>>, vector<1x128xf32>
    %4 = vector.broadcast %3 : vector<1x128xf32> to vector<256x128xf32>
    %5 = arith.addf %2, %4 : vector<256x128xf32>
    %c0_5 = arith.constant 0 : index
    %c0_6 = arith.constant 0 : index
    %6 = vector.load %arg4[%c0_5, %c0_6] : memref<256x128xf32, #tpu.memory_space<vmem>>, vector<256x128xf32>
    tpu.vector_store %arg4[%c0_5, %c0_6], %5 {strides = array<i32>} : memref<256x128xf32, #tpu.memory_space<vmem>>, vector<256x128xf32>,
    return
  }
  func.func @transform_0(%arg0: i32) -> (i32, i32) {
    %c0_i32 = arith.constant 0 : i32
    %c0_i32_0 = arith.constant 0 : i32
    return %arg0, %c0_i32 : i32, i32
  }
  func.func @transform_1(%arg0: i32) -> (i32, i32) {
    %c0_i32 = arith.constant 0 : i32
    %c0_i32_0 = arith.constant 0 : i32
    %c0_i32_1 = arith.constant 0 : i32
    return %c0_i32, %c0_i32_0 : i32, i32
  }
  func.func @transform_2(%arg0: i32) -> (i32, i32) {
    %c0_i32 = arith.constant 0 : i32
    %c0_i32_0 = arith.constant 0 : i32
    %c0_i32_1 = arith.constant 0 : i32
    return %c0_i32, %c0_i32_0 : i32, i32
  }
  func.func @transform_3(%arg0: i32) -> (i32, i32) {
    %c0_i32 = arith.constant 0 : i32
    %c0_i32_0 = arith.constant 0 : i32
    return %arg0, %c0_i32 : i32, i32
  }
}

module attributes {stable_mosaic.version = 11 : i64} {
  func.func @_matmul_bias_kernel(%arg0: i32, %arg1: memref<224x1024xf32, #tpu.memory_space<vmem>>, %arg2: memref<1024x128xf32, #tpu.memory_space<vmem>>, %arg3: memref<1x128xf32, #tpu.memory_space<vmem>>, %arg4: memref<224x128xf32, #tpu.memory_space<vmem>>) attributes {dimension_semantics = [#tpu.dimension_semantics<parallel>], iteration_bounds = array<i64: 1>, scalar_prefetch = 0 : i64, scratch_operands = 0 : i64, tpu.core_type = #tpu.core_type<tc>, window_params = [{transform_indices = @transform_0, window_bounds = array<i64: 224, 1024>}, {pipeline_mode = #tpu.pipeline_mode<synchronous>, transform_indices = @transform_1, window_bounds = array<i64: 1024, 128>}, {pipeline_mode = #tpu.pipeline_mode<synchronous>, transform_indices = @transform_2, window_bounds = array<i64: 1, 128>}, {transform_indices = @transform_3, window_bounds = array<i64: 224, 128>}]} {
    %c0 = arith.constant 0 : index
    %c0_0 = arith.constant 0 : index
    %0 = vector.load %arg1[%c0, %c0_0] : memref<224x1024xf32, #tpu.memory_space<vmem>>, vector<224x1024xf32>
    %c0_1 = arith.constant 0 : index
    %c0_2 = arith.constant 0 : index
    %1 = vector.load %arg2[%c0_1, %c0_2] : memref<1024x128xf32, #tpu.memory_space<vmem>>, vector<1024x128xf32>
    %cst = arith.constant dense<0.000000e+00> : vector<224x128xf32>
    %2 = tpu.matmul %0, %1, %cst {dimension_numbers = #tpu.dot_dimension_numbers<[1], [0], [0], [1], [0, 0, 1, 1], [], []>} : vector<224x1024xf32>, vector<1024x128xf32>, vector<224x128xf32> -> vector<224x128xf32>
    %c0_3 = arith.constant 0 : index
    %c0_4 = arith.constant 0 : index
    %3 = vector.load %arg3[%c0_3, %c0_4] : memref<1x128xf32, #tpu.memory_space<vmem>>, vector<1x128xf32>
    %4 = vector.broadcast %3 : vector<1x128xf32> to vector<224x128xf32>
    %5 = arith.addf %2, %4 : vector<224x128xf32>
    %c0_5 = arith.constant 0 : index
    %c0_6 = arith.constant 0 : index
    %6 = vector.load %arg4[%c0_5, %c0_6] : memref<224x128xf32, #tpu.memory_space<vmem>>, vector<224x128xf32>
    tpu.vector_store %arg4[%c0_5, %c0_6], %5 {strides = array<i32>} : memref<224x128xf32, #tpu.memory_space<vmem>>, vector<224x128xf32>,
    return
  }
  func.func @transform_0(%arg0: i32) -> (i32, i32) {
    %c0_i32 = arith.constant 0 : i32
    %c0_i32_0 = arith.constant 0 : i32
    return %arg0, %c0_i32 : i32, i32
  }
  func.func @transform_1(%arg0: i32) -> (i32, i32) {
    %c0_i32 = arith.constant 0 : i32
    %c0_i32_0 = arith.constant 0 : i32
    %c0_i32_1 = arith.constant 0 : i32
    return %c0_i32, %c0_i32_0 : i32, i32
  }
  func.func @transform_2(%arg0: i32) -> (i32, i32) {
    %c0_i32 = arith.constant 0 : i32
    %c0_i32_0 = arith.constant 0 : i32
    %c0_i32_1 = arith.constant 0 : i32
    return %c0_i32, %c0_i32_0 : i32, i32
  }
  func.func @transform_3(%arg0: i32) -> (i32, i32) {
    %c0_i32 = arith.constant 0 : i32
    %c0_i32_0 = arith.constant 0 : i32
    return %arg0, %c0_i32 : i32, i32
  }
}

module attributes {stable_mosaic.version = 11 : i64} {
  func.func @_matmul_bias_kernel(%arg0: i32, %arg1: memref<120x512xf32, #tpu.memory_space<vmem>>, %arg2: memref<512x128xf32, #tpu.memory_space<vmem>>, %arg3: memref<1x128xf32, #tpu.memory_space<vmem>>, %arg4: memref<120x128xf32, #tpu.memory_space<vmem>>) attributes {dimension_semantics = [#tpu.dimension_semantics<parallel>], iteration_bounds = array<i64: 1>, scalar_prefetch = 0 : i64, scratch_operands = 0 : i64, tpu.core_type = #tpu.core_type<tc>, window_params = [{transform_indices = @transform_0, window_bounds = array<i64: 120, 512>}, {pipeline_mode = #tpu.pipeline_mode<synchronous>, transform_indices = @transform_1, window_bounds = array<i64: 512, 128>}, {pipeline_mode = #tpu.pipeline_mode<synchronous>, transform_indices = @transform_2, window_bounds = array<i64: 1, 128>}, {transform_indices = @transform_3, window_bounds = array<i64: 120, 128>}]} {
    %c0 = arith.constant 0 : index
    %c0_0 = arith.constant 0 : index
    %0 = vector.load %arg1[%c0, %c0_0] : memref<120x512xf32, #tpu.memory_space<vmem>>, vector<120x512xf32>
    %c0_1 = arith.constant 0 : index
    %c0_2 = arith.constant 0 : index
    %1 = vector.load %arg2[%c0_1, %c0_2] : memref<512x128xf32, #tpu.memory_space<vmem>>, vector<512x128xf32>
    %cst = arith.constant dense<0.000000e+00> : vector<120x128xf32>
    %2 = tpu.matmul %0, %1, %cst {dimension_numbers = #tpu.dot_dimension_numbers<[1], [0], [0], [1], [0, 0, 1, 1], [], []>} : vector<120x512xf32>, vector<512x128xf32>, vector<120x128xf32> -> vector<120x128xf32>
    %c0_3 = arith.constant 0 : index
    %c0_4 = arith.constant 0 : index
    %3 = vector.load %arg3[%c0_3, %c0_4] : memref<1x128xf32, #tpu.memory_space<vmem>>, vector<1x128xf32>
    %4 = vector.broadcast %3 : vector<1x128xf32> to vector<120x128xf32>
    %5 = arith.addf %2, %4 : vector<120x128xf32>
    %c0_5 = arith.constant 0 : index
    %c0_6 = arith.constant 0 : index
    %6 = vector.load %arg4[%c0_5, %c0_6] : memref<120x128xf32, #tpu.memory_space<vmem>>, vector<120x128xf32>
    tpu.vector_store %arg4[%c0_5, %c0_6], %5 {strides = array<i32>} : memref<120x128xf32, #tpu.memory_space<vmem>>, vector<120x128xf32>,
    return
  }
  func.func @transform_0(%arg0: i32) -> (i32, i32) {
    %c0_i32 = arith.constant 0 : i32
    %c0_i32_0 = arith.constant 0 : i32
    return %arg0, %c0_i32 : i32, i32
  }
  func.func @transform_1(%arg0: i32) -> (i32, i32) {
    %c0_i32 = arith.constant 0 : i32
    %c0_i32_0 = arith.constant 0 : i32
    %c0_i32_1 = arith.constant 0 : i32
    return %c0_i32, %c0_i32_0 : i32, i32
  }
  func.func @transform_2(%arg0: i32) -> (i32, i32) {
    %c0_i32 = arith.constant 0 : i32
    %c0_i32_0 = arith.constant 0 : i32
    %c0_i32_1 = arith.constant 0 : i32
    return %c0_i32, %c0_i32_0 : i32, i32
  }
  func.func @transform_3(%arg0: i32) -> (i32, i32) {
    %c0_i32 = arith.constant 0 : i32
    %c0_i32_0 = arith.constant 0 : i32
    return %arg0, %c0_i32 : i32, i32
  }
}

module attributes {stable_mosaic.version = 11 : i64} {
  func.func @_matmul_bias_kernel(%arg0: i32, %arg1: memref<40x640xf32, #tpu.memory_space<vmem>>, %arg2: memref<640x128xf32, #tpu.memory_space<vmem>>, %arg3: memref<1x128xf32, #tpu.memory_space<vmem>>, %arg4: memref<40x128xf32, #tpu.memory_space<vmem>>) attributes {dimension_semantics = [#tpu.dimension_semantics<parallel>], iteration_bounds = array<i64: 1>, scalar_prefetch = 0 : i64, scratch_operands = 0 : i64, tpu.core_type = #tpu.core_type<tc>, window_params = [{transform_indices = @transform_0, window_bounds = array<i64: 40, 640>}, {pipeline_mode = #tpu.pipeline_mode<synchronous>, transform_indices = @transform_1, window_bounds = array<i64: 640, 128>}, {pipeline_mode = #tpu.pipeline_mode<synchronous>, transform_indices = @transform_2, window_bounds = array<i64: 1, 128>}, {transform_indices = @transform_3, window_bounds = array<i64: 40, 128>}]} {
    %c0 = arith.constant 0 : index
    %c0_0 = arith.constant 0 : index
    %0 = vector.load %arg1[%c0, %c0_0] : memref<40x640xf32, #tpu.memory_space<vmem>>, vector<40x640xf32>
    %c0_1 = arith.constant 0 : index
    %c0_2 = arith.constant 0 : index
    %1 = vector.load %arg2[%c0_1, %c0_2] : memref<640x128xf32, #tpu.memory_space<vmem>>, vector<640x128xf32>
    %cst = arith.constant dense<0.000000e+00> : vector<40x128xf32>
    %2 = tpu.matmul %0, %1, %cst {dimension_numbers = #tpu.dot_dimension_numbers<[1], [0], [0], [1], [0, 0, 1, 1], [], []>} : vector<40x640xf32>, vector<640x128xf32>, vector<40x128xf32> -> vector<40x128xf32>
    %c0_3 = arith.constant 0 : index
    %c0_4 = arith.constant 0 : index
    %3 = vector.load %arg3[%c0_3, %c0_4] : memref<1x128xf32, #tpu.memory_space<vmem>>, vector<1x128xf32>
    %4 = vector.broadcast %3 : vector<1x128xf32> to vector<40x128xf32>
    %5 = arith.addf %2, %4 : vector<40x128xf32>
    %c0_5 = arith.constant 0 : index
    %c0_6 = arith.constant 0 : index
    %6 = vector.load %arg4[%c0_5, %c0_6] : memref<40x128xf32, #tpu.memory_space<vmem>>, vector<40x128xf32>
    tpu.vector_store %arg4[%c0_5, %c0_6], %5 {strides = array<i32>} : memref<40x128xf32, #tpu.memory_space<vmem>>, vector<40x128xf32>,
    return
  }
  func.func @transform_0(%arg0: i32) -> (i32, i32) {
    %c0_i32 = arith.constant 0 : i32
    %c0_i32_0 = arith.constant 0 : i32
    return %arg0, %c0_i32 : i32, i32
  }
  func.func @transform_1(%arg0: i32) -> (i32, i32) {
    %c0_i32 = arith.constant 0 : i32
    %c0_i32_0 = arith.constant 0 : i32
    %c0_i32_1 = arith.constant 0 : i32
    return %c0_i32, %c0_i32_0 : i32, i32
  }
  func.func @transform_2(%arg0: i32) -> (i32, i32) {
    %c0_i32 = arith.constant 0 : i32
    %c0_i32_0 = arith.constant 0 : i32
    %c0_i32_1 = arith.constant 0 : i32
    return %c0_i32, %c0_i32_0 : i32, i32
  }
  func.func @transform_3(%arg0: i32) -> (i32, i32) {
    %c0_i32 = arith.constant 0 : i32
    %c0_i32_0 = arith.constant 0 : i32
    return %arg0, %c0_i32 : i32, i32
  }
}

module attributes {stable_mosaic.version = 11 : i64} {
  func.func @_head_kernel(%arg0: memref<8x1152xf32, #tpu.memory_space<vmem>>, %arg1: memref<1152x128xf32, #tpu.memory_space<vmem>>, %arg2: memref<1x128xf32, #tpu.memory_space<vmem>>, %arg3: memref<128x128xf32, #tpu.memory_space<vmem>>, %arg4: memref<1x128xf32, #tpu.memory_space<vmem>>, %arg5: memref<128x128xf32, #tpu.memory_space<vmem>>, %arg6: memref<1x128xf32, #tpu.memory_space<vmem>>, %arg7: memref<128x128xf32, #tpu.memory_space<vmem>>, %arg8: memref<1x128xf32, #tpu.memory_space<vmem>>, %arg9: memref<8x128xf32, #tpu.memory_space<vmem>>) attributes {dimension_semantics = [], scalar_prefetch = 0 : i64, scratch_operands = 0 : i64, tpu.core_type = #tpu.core_type<tc>} {
    %c0 = arith.constant 0 : index
    %c0_0 = arith.constant 0 : index
    %0 = vector.load %arg0[%c0, %c0_0] : memref<8x1152xf32, #tpu.memory_space<vmem>>, vector<8x1152xf32>
    %c0_1 = arith.constant 0 : index
    %c0_2 = arith.constant 0 : index
    %1 = vector.load %arg1[%c0_1, %c0_2] : memref<1152x128xf32, #tpu.memory_space<vmem>>, vector<1152x128xf32>
    %cst = arith.constant dense<0.000000e+00> : vector<8x128xf32>
    %2 = tpu.matmul %0, %1, %cst {dimension_numbers = #tpu.dot_dimension_numbers<[1], [0], [0], [1], [0, 0, 1, 1], [], []>} : vector<8x1152xf32>, vector<1152x128xf32>, vector<8x128xf32> -> vector<8x128xf32>
    %c0_3 = arith.constant 0 : index
    %c0_4 = arith.constant 0 : index
    %3 = vector.load %arg2[%c0_3, %c0_4] : memref<1x128xf32, #tpu.memory_space<vmem>>, vector<1x128xf32>
    %4 = vector.broadcast %3 : vector<1x128xf32> to vector<8x128xf32>
    %5 = arith.addf %2, %4 : vector<8x128xf32>
    %6 = math.tanh %5 : vector<8x128xf32>
    %c0_5 = arith.constant 0 : index
    %c0_6 = arith.constant 0 : index
    %7 = vector.load %arg3[%c0_5, %c0_6] : memref<128x128xf32, #tpu.memory_space<vmem>>, vector<128x128xf32>
    %cst_7 = arith.constant dense<0.000000e+00> : vector<8x128xf32>
    %8 = tpu.matmul %6, %7, %cst_7 {dimension_numbers = #tpu.dot_dimension_numbers<[1], [0], [0], [1], [0, 0, 1, 1], [], []>} : vector<8x128xf32>, vector<128x128xf32>, vector<8x128xf32> -> vector<8x128xf32>
    %c0_8 = arith.constant 0 : index
    %c0_9 = arith.constant 0 : index
    %9 = vector.load %arg4[%c0_8, %c0_9] : memref<1x128xf32, #tpu.memory_space<vmem>>, vector<1x128xf32>
    %10 = vector.broadcast %9 : vector<1x128xf32> to vector<8x128xf32>
    %11 = arith.addf %8, %10 : vector<8x128xf32>
    %12 = math.tanh %11 : vector<8x128xf32>
    %c0_10 = arith.constant 0 : index
    %c0_11 = arith.constant 0 : index
    %13 = vector.load %arg5[%c0_10, %c0_11] : memref<128x128xf32, #tpu.memory_space<vmem>>, vector<128x128xf32>
    %cst_12 = arith.constant dense<0.000000e+00> : vector<8x128xf32>
    %14 = tpu.matmul %12, %13, %cst_12 {dimension_numbers = #tpu.dot_dimension_numbers<[1], [0], [0], [1], [0, 0, 1, 1], [], []>} : vector<8x128xf32>, vector<128x128xf32>, vector<8x128xf32> -> vector<8x128xf32>
    %c0_13 = arith.constant 0 : index
    %c0_14 = arith.constant 0 : index
    %15 = vector.load %arg6[%c0_13, %c0_14] : memref<1x128xf32, #tpu.memory_space<vmem>>, vector<1x128xf32>
    %16 = vector.broadcast %15 : vector<1x128xf32> to vector<8x128xf32>
    %17 = arith.addf %14, %16 : vector<8x128xf32>
    %cst_15 = arith.constant -1.000000e+00 : f32
    %cst_16 = arith.constant 1.000000e+00 : f32
    %18 = vector.broadcast %cst_15 : f32 to vector<8x128xf32>
    %19 = arith.maximumf %18, %17 : vector<8x128xf32>
    %20 = vector.broadcast %cst_16 : f32 to vector<8x128xf32>
    %21 = arith.minimumf %20, %19 : vector<8x128xf32>
    %c0_17 = arith.constant 0 : index
    %c0_18 = arith.constant 0 : index
    %22 = vector.load %arg7[%c0_17, %c0_18] : memref<128x128xf32, #tpu.memory_space<vmem>>, vector<128x128xf32>
    %cst_19 = arith.constant dense<0.000000e+00> : vector<8x128xf32>
    %23 = tpu.matmul %21, %22, %cst_19 {dimension_numbers = #tpu.dot_dimension_numbers<[1], [0], [0], [1], [0, 0, 1, 1], [], []>} : vector<8x128xf32>, vector<128x128xf32>, vector<8x128xf32> -> vector<8x128xf32>
    %c0_20 = arith.constant 0 : index
    %c0_21 = arith.constant 0 : index
    %24 = vector.load %arg8[%c0_20, %c0_21] : memref<1x128xf32, #tpu.memory_space<vmem>>, vector<1x128xf32>
    %25 = vector.broadcast %24 : vector<1x128xf32> to vector<8x128xf32>
    %26 = arith.addf %23, %25 : vector<8x128xf32>
    %cst_22 = arith.constant -1.000000e+00 : f32
    %cst_23 = arith.constant 1.000000e+00 : f32
    %27 = vector.broadcast %cst_22 : f32 to vector<8x128xf32>
    %28 = arith.maximumf %27, %26 : vector<8x128xf32>
    %29 = vector.broadcast %cst_23 : f32 to vector<8x128xf32>
    %30 = arith.minimumf %29, %28 : vector<8x128xf32>
    %c0_24 = arith.constant 0 : index
    %c0_25 = arith.constant 0 : index
    %31 = vector.load %arg9[%c0_24, %c0_25] : memref<8x128xf32, #tpu.memory_space<vmem>>, vector<8x128xf32>
    tpu.vector_store %arg9[%c0_24, %c0_25], %30 {strides = array<i32>} : memref<8x128xf32, #tpu.memory_space<vmem>>, vector<8x128xf32>,
    return
  }
}

</mosaic_0001>

<llo_original>
// kernel: pilotnet_forward.6
$region0: #{pilotnet_forward.6}
  #allocation0 [shape = 'u32[]', space=smem, size = 0x4, offset = 0x4, fixed_abs, tag = 'smem constant byte address 0x4 - core index']
  #allocation1 [shape = 'u32[144,128]{1,0:T(1,128)}', space=vmem, size = 0x12000, scoped, tag = 'internal scratch']
  %s0 = inlined_call_operand.vmem [shape: f32[6144,128], index: 0, kind: input, shape index: {}]
  %s1 = inlined_call_operand.vmem [shape: f32[128,128], index: 1, kind: input, shape index: {}]
  %s2 = inlined_call_operand.vmem [shape: f32[1,128], index: 2, kind: input, shape index: {}]
  %s3 = inlined_call_operand.vmem [shape: f32[6144,128], index: 3, kind: output, shape index: {}]
  %s4 = sld [smem:[#allocation0]]
  $region45: #{pilotnet_forward.6} parent=0
    _
  %s6 = ssub.s32 1, %s4
  %s7 = scalar_select 0, %s6, %s4
  loop: start=0, step=1, limit=26
  $region2: #{pilotnet_forward.6} parent=0 // loop_pre_header
    _
  $region3: #{pilotnet_forward.6} parent=0 // loop_header
    %s9 = sphi 0, %s13
    %p10 = scmp.ge.s32.totalorder %s9, 26
    %s19 = sphi 0, %s21
    %s22 = sphi 0, %s19
    %s23 = sphi 0, %s22
    %s39 = sphi 0, %s23
    %s43 = sphi 0, %s43
    %s45 = sphi 0, %s43
    %s46 = sphi 0, %s45
    %s60 = sphi 0, %s46
    %s64 = sphi 0, %s64
    %s66 = sphi 0, %s64
    %s67 = sphi 0, %s66
    %s81 = sphi 0, %s67
    %s87 = sphi 0, %s89
    %s90 = sphi 0, %s87
    %s91 = sphi 0, %s90
    %s107 = sphi 0, %s91
  $region4: #{pilotnet_forward.6} parent=0 // loop_header_branch
    %12 = sbr.rel (%p10) target = $region8
  $region5: #{pilotnet_forward.6} parent=0 // loop_body
    %s14 = ssub.s32 %s9, 1
    %s15 = ssub.s32 %s9, 2
    %s16 = sadd.s32 %s9, 1
    %s17 = ssub.s32 %s9, %s16
    %p18 = scmp.eq.s32.totalorder %s17, 0
    %s20 = sadd.s32 %s19, 1
    %s21 = scalar_select %p18, %s19, %s20
    %p24 = pneg %p18
    %p25 = scmp.eq.s32.totalorder %s9, 23
    %p26 = por %p24, %p25
    %p27 = scmp.ne.s32.totalorder %s19, %s22
    %p28 = scmp.eq.s32.totalorder %s9, 0
    %p29 = por %p27, %p28
    %p30 = scmp.ne.s32.totalorder %s19, %s22
    %p31 = scmp.eq.s32.totalorder %s14, 23
    %p32 = por %p30, %p31
    %p33 = scmp.ne.s32.totalorder %s22, %s23
    %p34 = scmp.eq.s32.totalorder %s14, 0
    %p35 = por %p33, %p34
    %p36 = scmp.ne.s32.totalorder %s22, %s23
    %p37 = scmp.eq.s32.totalorder %s15, 23
    %p38 = por %p36, %p37
    %p40 = scmp.ne.s32.totalorder %s23, %s39
    %p41 = scmp.eq.s32.totalorder %s15, 0
    %p42 = por %p40, %p41
    %s44 = sadd.s32 %s43, 1
    %p47 = scmp.eq.s32.totalorder %s9, 23
    %p48 = scmp.ne.s32.totalorder %s43, %s45
    %p49 = scmp.eq.s32.totalorder %s9, 0
    %p50 = por %p48, %p49
    %p51 = scmp.ne.s32.totalorder %s43, %s45
    %p52 = scmp.eq.s32.totalorder %s14, 23
    %p53 = por %p51, %p52
    %p54 = scmp.ne.s32.totalorder %s45, %s46
    %p55 = scmp.eq.s32.totalorder %s14, 0
    %p56 = por %p54, %p55
    %p57 = scmp.ne.s32.totalorder %s45, %s46
    %p58 = scmp.eq.s32.totalorder %s15, 23
    %p59 = por %p57, %p58
    %p61 = scmp.ne.s32.totalorder %s46, %s60
    %p62 = scmp.eq.s32.totalorder %s15, 0
    %p63 = por %p61, %p62
    %s65 = sadd.s32 %s64, 1
    %p68 = scmp.eq.s32.totalorder %s9, 23
    %p69 = scmp.ne.s32.totalorder %s64, %s66
    %p70 = scmp.eq.s32.totalorder %s9, 0
    %p71 = por %p69, %p70
    %p72 = scmp.ne.s32.totalorder %s64, %s66
    %p73 = scmp.eq.s32.totalorder %s14, 23
    %p74 = por %p72, %p73
    %p75 = scmp.ne.s32.totalorder %s66, %s67
    %p76 = scmp.eq.s32.totalorder %s14, 0
    %p77 = por %p75, %p76
    %p78 = scmp.ne.s32.totalorder %s66, %s67
    %p79 = scmp.eq.s32.totalorder %s15, 23
    %p80 = por %p78, %p79
    %p82 = scmp.ne.s32.totalorder %s67, %s81
    %p83 = scmp.eq.s32.totalorder %s15, 0
    %p84 = por %p82, %p83
    %s85 = ssub.s32 %s9, %s16
    %p86 = scmp.eq.s32.totalorder %s85, 0
    %s88 = sadd.s32 %s87, 1
    %s89 = scalar_select %p86, %s87, %s88
    %p92 = pneg %p86
    %p93 = scmp.eq.s32.totalorder %s9, 23
    %p94 = por %p92, %p93
    %p95 = scmp.ne.s32.totalorder %s87, %s90
    %p96 = scmp.eq.s32.totalorder %s9, 0
    %p97 = por %p95, %p96
    %p98 = scmp.ne.s32.totalorder %s87, %s90
    %p99 = scmp.eq.s32.totalorder %s14, 23
    %p100 = por %p98, %p99
    %p101 = scmp.ne.s32.totalorder %s90, %s91
    %p102 = scmp.eq.s32.totalorder %s14, 0
    %p103 = por %p101, %p102
    %p104 = scmp.ne.s32.totalorder %s90, %s91
    %p105 = scmp.eq.s32.totalorder %s15, 23
    %p106 = por %p104, %p105
    %p108 = scmp.ne.s32.totalorder %s91, %s107
    %p109 = scmp.eq.s32.totalorder %s15, 0
    %p110 = por %p108, %p109
    %p111 = scmp.le.s32.totalorder 1, %s9
    %p112 = scmp.lt.s32.totalorder %s9, 25
    %p113 = pnand %p111, %p112
    %p114 = pneg %p113
    // Predicated region
    $region9: #{pilotnet_forward.6} parent=5 // pred_check
      _
    $region10: #{pilotnet_forward.6} parent=5 // pred_check_branch
      %116 = sbr.rel (%p113) target = $region12
    $region11: #{pilotnet_forward.6} parent=5 // pred_region
      %s117 = ssub.s32 %s9, 1
      // Predicated region
      $region13: #{pilotnet_forward.6} parent=11 // pred_check
        %p118 = pneg %p56
      $region14: #{pilotnet_forward.6} parent=11 // pred_check_branch
        %120 = sbr.rel (%p118) target = $region16
      $region15: #{pilotnet_forward.6} parent=11 // pred_region
        _
      $region16: #{pilotnet_forward.6} parent=11 // pred_fallthru
        _
      // Predicated region
      $region17: #{pilotnet_forward.6} parent=11 // pred_check
        %p121 = pneg %p77
      $region18: #{pilotnet_forward.6} parent=11 // pred_check_branch
        %123 = sbr.rel (%p121) target = $region20
      $region19: #{pilotnet_forward.6} parent=11 // pred_region
        _
      $region20: #{pilotnet_forward.6} parent=11 // pred_fallthru
        _
    $region12: #{pilotnet_forward.6} parent=5 // pred_fallthru
      _
    %p124 = scmp.lt.s32.totalorder %s9, 24
    // Predicated region
    $region21: #{pilotnet_forward.6} parent=5 // pred_check
      %p125 = pneg %p124
    $region22: #{pilotnet_forward.6} parent=5 // pred_check_branch
      %127 = sbr.rel (%p125) target = $region24
    $region23: #{pilotnet_forward.6} parent=5 // pred_region
      // Predicated region
      $region25: #{pilotnet_forward.6} parent=23 // pred_check
        %p128 = pneg %p29
      $region26: #{pilotnet_forward.6} parent=23 // pred_check_branch
        %130 = sbr.rel (%p128) target = $region28
      $region27: #{pilotnet_forward.6} parent=23 // pred_region
        %s131 = smul.u32 32, %s9
        %p132 = scmp.lt.s32.totalorder %s131, 767
        %s133 = scalar_select %p132, %s131, 767
        %s134 = smul.addr %s133, 8
        %s135 = scalar_lea.vmem %s0, %s134
        %s136 = smul.u32 32, %s9
      $region28: #{pilotnet_forward.6} parent=23 // pred_fallthru
        _
    $region24: #{pilotnet_forward.6} parent=5 // pred_fallthru
      _
    %p137 = scmp.le.s32.totalorder 1, %s9
    %p138 = scmp.lt.s32.totalorder %s9, 25
    %p139 = pnand %p137, %p138
    %p140 = pneg %p139
    // Predicated region
    $region29: #{pilotnet_forward.6} parent=5 // pred_check
      _
    $region30: #{pilotnet_forward.6} parent=5 // pred_check_branch
      %142 = sbr.rel (%p139) target = $region32
    $region31: #{pilotnet_forward.6} parent=5 // pred_region
      %s143 = ssub.s32 %s9, 1
      %s144 = smul.u32 32, %s14
      %p145 = scmp.lt.s32.totalorder %s144, 767
      %s146 = scalar_select %p145, %s144, 767
      %s147 = smul.addr %s146, 8
      %s148 = scalar_lea.vmem %s0, %s147
      %p149 = pneg %p35
      %p150 = pneg %p32
      %p151 = pneg %p56
      %p152 = pneg %p53
      %p153 = pneg %p77
      %p154 = pneg %p74
      %p155 = pneg %p103
      %p156 = pneg %p100
      %s157 = smul.u32 32, %s14
      %p158 = scmp.lt.s32.totalorder %s157, 767
      %s159 = scalar_select %p158, %s157, 767
      %s160 = smul.addr %s159, 8
      %s161 = scalar_lea.vmem %s3, %s160
      %s162 = smul.u32 32, %s14
      %p163 = scmp.lt.s32.totalorder %s162, 767
      %s164 = scalar_select %p163, %s162, 767
      %s165 = smul.addr %s164, 8
      %s166 = scalar_lea.vmem %s0, %s165
      %s167 = smul.u32 32, %s14
      %s168 = smul.u32 32, %s14
      %p169 = scmp.lt.s32.totalorder %s168, 767
      %s170 = scalar_select %p169, %s168, 767
      %s171 = smul.addr %s170, 8
      %s172 = scalar_lea.vmem %s3, %s171
      %s173 = smul.u32 32, %s14
      %v174 = vld [vmem:[%s166] sm:$0xff]
      %v175 = vld [vmem:[%s166 + $0x8] sm:$0xff]
      %v176 = vld [vmem:[%s166 + $0x10] sm:$0xff]
      %v177 = vld [vmem:[%s166 + $0x18] sm:$0xff]
      %v178 = vld [vmem:[%s166 + $0x20] sm:$0xff]
      %v179 = vld [vmem:[%s166 + $0x28] sm:$0xff]
      %v180 = vld [vmem:[%s166 + $0x30] sm:$0xff]
      %v181 = vld [vmem:[%s166 + $0x38] sm:$0xff]
      %v182 = vld [vmem:[%s166 + $0x40] sm:$0xff]
      %v183 = vld [vmem:[%s166 + $0x48] sm:$0xff]
      %v184 = vld [vmem:[%s166 + $0x50] sm:$0xff]
      %v185 = vld [vmem:[%s166 + $0x58] sm:$0xff]
      %v186 = vld [vmem:[%s166 + $0x60] sm:$0xff]
      %v187 = vld [vmem:[%s166 + $0x68] sm:$0xff]
      %v188 = vld [vmem:[%s166 + $0x70] sm:$0xff]
      %v189 = vld [vmem:[%s166 + $0x78] sm:$0xff]
      %v190 = vld [vmem:[%s166 + $0x80] sm:$0xff]
      %v191 = vld [vmem:[%s166 + $0x88] sm:$0xff]
      %v192 = vld [vmem:[%s166 + $0x90] sm:$0xff]
      %v193 = vld [vmem:[%s166 + $0x98] sm:$0xff]
      %v194 = vld [vmem:[%s166 + $0xa0] sm:$0xff]
      %v195 = vld [vmem:[%s166 + $0xa8] sm:$0xff]
      %v196 = vld [vmem:[%s166 + $0xb0] sm:$0xff]
      %v197 = vld [vmem:[%s166 + $0xb8] sm:$0xff]
      %v198 = vld [vmem:[%s166 + $0xc0] sm:$0xff]
      %v199 = vld [vmem:[%s166 + $0xc8] sm:$0xff]
      %v200 = vld [vmem:[%s166 + $0xd0] sm:$0xff]
      %v201 = vld [vmem:[%s166 + $0xd8] sm:$0xff]
      %v202 = vld [vmem:[%s166 + $0xe0] sm:$0xff]
      %v203 = vld [vmem:[%s166 + $0xe8] sm:$0xff]
      %v204 = vld [vmem:[%s166 + $0xf0] sm:$0xff]
      %v205 = vld [vmem:[%s166 + $0xf8] sm:$0xff]
      %v206 = vld [vmem:[%s1] sm:$0xff]
      %v207 = vld [vmem:[%s1 + $0x8] sm:$0xff]
      %v208 = vld [vmem:[%s1 + $0x10] sm:$0xff]
      %v209 = vld [vmem:[%s1 + $0x18] sm:$0xff]
      %v210 = vld [vmem:[%s1 + $0x20] sm:$0xff]
      %v211 = vld [vmem:[%s1 + $0x28] sm:$0xff]
      %v212 = vld [vmem:[%s1 + $0x30] sm:$0xff]
      %v213 = vld [vmem:[%s1 + $0x38] sm:$0xff]
      %v214 = vld [vmem:[%s1 + $0x40] sm:$0xff]
      %v215 = vld [vmem:[%s1 + $0x48] sm:$0xff]
      %v216 = vld [vmem:[%s1 + $0x50] sm:$0xff]
      %v217 = vld [vmem:[%s1 + $0x58] sm:$0xff]
      %v218 = vld [vmem:[%s1 + $0x60] sm:$0xff]
      %v219 = vld [vmem:[%s1 + $0x68] sm:$0xff]
      %v220 = vld [vmem:[%s1 + $0x70] sm:$0xff]
      %v221 = vld [vmem:[%s1 + $0x78] sm:$0xff]
      %v222 = vld [vmem:[%s2] sm:$0x1]
      %v224 = vlaneseq
      %v225 = vshrl.u32 %v224, 7
      %v226 = vsub.s32 0, %v225
      %v227 = vrot.slane %v222, %v226
      %229 = vmatprep.subr.mxu0 0.0
      %230 = vmatpush1.msra.mxu0 %v221
      %231 = vmatprep.subr.mxu0 0.0
      %232 = vmatpush1.msra.mxu0 %v220
      %233 = vmatprep.subr.mxu0 0.0
      %234 = vmatpush1.msra.mxu0 %v219
      %235 = vmatprep.subr.mxu0 0.0
      %236 = vmatpush1.msra.mxu0 %v218
      %237 = vmatprep.subr.mxu0 0.0
      %238 = vmatpush1.msra.mxu0 %v217
      %239 = vmatprep.subr.mxu0 0.0
      %240 = vmatpush1.msra.mxu0 %v216
      %241 = vmatprep.subr.mxu0 0.0
      %242 = vmatpush1.msra.mxu0 %v215
      %243 = vmatprep.subr.mxu0 0.0
      %244 = vmatpush1.msra.mxu0 %v214
      %245 = vmatprep.subr.mxu0 0.0
      %246 = vmatpush1.msra.mxu0 %v213
      %247 = vmatprep.subr.mxu0 0.0
      %248 = vmatpush1.msra.mxu0 %v212
      %249 = vmatprep.subr.mxu0 0.0
      %250 = vmatpush1.msra.mxu0 %v211
      %251 = vmatprep.subr.mxu0 0.0
      %252 = vmatpush1.msra.mxu0 %v210
      %253 = vmatprep.subr.mxu0 0.0
      %254 = vmatpush1.msra.mxu0 %v209
      %255 = vmatprep.subr.mxu0 0.0
      %256 = vmatpush1.msra.mxu0 %v208
      %257 = vmatprep.subr.mxu0 0.0
      %258 = vmatpush1.msra.mxu0 %v207
      %259 = vmatprep.subr.mxu0 0.0
      %260 = vmatpush1.msra.mxu0 %v206
      %261 = vmatprep.subr.mxu0 0.0
      %262 = vmatpush2.msra.mxu0 0.0
      %263 = vmatprep.subr.mxu0 0.0
      %264 = vmatpush2.msra.mxu0 0.0
      %265 = vmatprep.subr.mxu0 0.0
      %266 = vmatpush2.msra.mxu0 0.0
      %267 = vmatprep.subr.mxu0 0.0
      %268 = vmatpush2.msra.mxu0 0.0
      %269 = vmatprep.subr.mxu0 0.0
      %270 = vmatpush2.msra.mxu0 0.0
      %271 = vmatprep.subr.mxu0 0.0
      %272 = vmatpush2.msra.mxu0 0.0
      %273 = vmatprep.subr.mxu0 0.0
      %274 = vmatpush2.msra.mxu0 0.0
      %275 = vmatprep.subr.mxu0 0.0
      %276 = vmatpush2.msra.mxu0 0.0
      %277 = vmatprep.subr.mxu0 0.0
      %278 = vmatpush2.msra.mxu0 0.0
      %279 = vmatprep.subr.mxu0 0.0
      %280 = vmatpush2.msra.mxu0 0.0
      %281 = vmatprep.subr.mxu0 0.0
      %282 = vmatpush2.msra.mxu0 0.0
      %283 = vmatprep.subr.mxu0 0.0
      %284 = vmatpush2.msra.mxu0 0.0
      %285 = vmatprep.subr.mxu0 0.0
      %286 = vmatpush2.msra.mxu0 0.0
      %287 = vmatprep.subr.mxu0 0.0
      %288 = vmatpush2.msra.mxu0 0.0
      %289 = vmatprep.subr.mxu0 0.0
      %290 = vmatpush2.msra.mxu0 0.0
      %291 = vmatprep.subr.mxu0 0.0
      %292 = vmatpush2.msra.mxu0 0.0
      %293 = vmatprep.mubr.f32.mxu0 0.0
      %294 = vmatmul.mubr.f32.gmra.mxu0 %v174
      %v295 = vpop.f32.mrf.mxu0
      %v296 = vadd.f32 %v227, %v295
      %v297 = vpop.f32.mrf.mxu0
      %298 = vmatprep.mubr.f32.mxu0 0.0
      %299 = vmatmul.mubr.f32.gmra.mxu0 %v175
      %v300 = vpop.f32.mrf.mxu0
      %v301 = vadd.f32 %v227, %v300
      %v302 = vpop.f32.mrf.mxu0
      %303 = vmatprep.mubr.f32.mxu0 0.0
      %304 = vmatmul.mubr.f32.gmra.mxu0 %v176
      %v305 = vpop.f32.mrf.mxu0
      %v306 = vadd.f32 %v227, %v305
      %v307 = vpop.f32.mrf.mxu0
      %308 = vmatprep.mubr.f32.mxu0 0.0
      %309 = vmatmul.mubr.f32.gmra.mxu0 %v177
      %v310 = vpop.f32.mrf.mxu0
      %v311 = vadd.f32 %v227, %v310
      %v312 = vpop.f32.mrf.mxu0
      %313 = vmatprep.mubr.f32.mxu0 0.0
      %314 = vmatmul.mubr.f32.gmra.mxu0 %v178
      %v315 = vpop.f32.mrf.mxu0
      %v316 = vadd.f32 %v227, %v315
      %v317 = vpop.f32.mrf.mxu0
      %318 = vmatprep.mubr.f32.mxu0 0.0
      %319 = vmatmul.mubr.f32.gmra.mxu0 %v179
      %v320 = vpop.f32.mrf.mxu0
      %v321 = vadd.f32 %v227, %v320
      %v322 = vpop.f32.mrf.mxu0
      %323 = vmatprep.mubr.f32.mxu0 0.0
      %324 = vmatmul.mubr.f32.gmra.mxu0 %v180
      %v325 = vpop.f32.mrf.mxu0
      %v326 = vadd.f32 %v227, %v325
      %v327 = vpop.f32.mrf.mxu0
      %328 = vmatprep.mubr.f32.mxu0 0.0
      %329 = vmatmul.mubr.f32.gmra.mxu0 %v181
      %v330 = vpop.f32.mrf.mxu0
      %v331 = vadd.f32 %v227, %v330
      %v332 = vpop.f32.mrf.mxu0
      %333 = vmatprep.mubr.f32.mxu0 0.0
      %334 = vmatmul.mubr.f32.gmra.mxu0 %v182
      %v335 = vpop.f32.mrf.mxu0
      %v336 = vadd.f32 %v227, %v335
      %v337 = vpop.f32.mrf.mxu0
      %338 = vmatprep.mubr.f32.mxu0 0.0
      %339 = vmatmul.mubr.f32.gmra.mxu0 %v183
      %v340 = vpop.f32.mrf.mxu0
      %v341 = vadd.f32 %v227, %v340
      %v342 = vpop.f32.mrf.mxu0
      %343 = vmatprep.mubr.f32.mxu0 0.0
      %344 = vmatmul.mubr.f32.gmra.mxu0 %v184
      %v345 = vpop.f32.mrf.mxu0
      %v346 = vadd.f32 %v227, %v345
      %v347 = vpop.f32.mrf.mxu0
      %348 = vmatprep.mubr.f32.mxu0 0.0
      %349 = vmatmul.mubr.f32.gmra.mxu0 %v185
      %v350 = vpop.f32.mrf.mxu0
      %v351 = vadd.f32 %v227, %v350
      %v352 = vpop.f32.mrf.mxu0
      %353 = vmatprep.mubr.f32.mxu0 0.0
      %354 = vmatmul.mubr.f32.gmra.mxu0 %v186
      %v355 = vpop.f32.mrf.mxu0
      %v356 = vadd.f32 %v227, %v355
      %v357 = vpop.f32.mrf.mxu0
      %358 = vmatprep.mubr.f32.mxu0 0.0
      %359 = vmatmul.mubr.f32.gmra.mxu0 %v187
      %v360 = vpop.f32.mrf.mxu0
      %v361 = vadd.f32 %v227, %v360
      %v362 = vpop.f32.mrf.mxu0
      %363 = vmatprep.mubr.f32.mxu0 0.0
      %364 = vmatmul.mubr.f32.gmra.mxu0 %v188
      %v365 = vpop.f32.mrf.mxu0
      %v366 = vadd.f32 %v227, %v365
      %v367 = vpop.f32.mrf.mxu0
      %368 = vmatprep.mubr.f32.mxu0 0.0
      %369 = vmatmul.mubr.f32.gmra.mxu0 %v189
      %v370 = vpop.f32.mrf.mxu0
      %v371 = vadd.f32 %v227, %v370
      %v372 = vpop.f32.mrf.mxu0
      %373 = vmatprep.mubr.f32.mxu0 0.0
      %374 = vmatmul.mubr.f32.gmra.mxu0 %v190
      %v375 = vpop.f32.mrf.mxu0
      %v376 = vadd.f32 %v227, %v375
      %v377 = vpop.f32.mrf.mxu0
      %378 = vmatprep.mubr.f32.mxu0 0.0
      %379 = vmatmul.mubr.f32.gmra.mxu0 %v191
      %v380 = vpop.f32.mrf.mxu0
      %v381 = vadd.f32 %v227, %v380
      %v382 = vpop.f32.mrf.mxu0
      %383 = vmatprep.mubr.f32.mxu0 0.0
      %384 = vmatmul.mubr.f32.gmra.mxu0 %v192
      %v385 = vpop.f32.mrf.mxu0
      %v386 = vadd.f32 %v227, %v385
      %v387 = vpop.f32.mrf.mxu0
      %388 = vmatprep.mubr.f32.mxu0 0.0
      %389 = vmatmul.mubr.f32.gmra.mxu0 %v193
      %v390 = vpop.f32.mrf.mxu0
      %v391 = vadd.f32 %v227, %v390
      %v392 = vpop.f32.mrf.mxu0
      %393 = vmatprep.mubr.f32.mxu0 0.0
      %394 = vmatmul.mubr.f32.gmra.mxu0 %v194
      %v395 = vpop.f32.mrf.mxu0
      %v396 = vadd.f32 %v227, %v395
      %v397 = vpop.f32.mrf.mxu0
      %398 = vmatprep.mubr.f32.mxu0 0.0
      %399 = vmatmul.mubr.f32.gmra.mxu0 %v195
      %v400 = vpop.f32.mrf.mxu0
      %v401 = vadd.f32 %v227, %v400
      %v402 = vpop.f32.mrf.mxu0
      %403 = vmatprep.mubr.f32.mxu0 0.0
      %404 = vmatmul.mubr.f32.gmra.mxu0 %v196
      %v405 = vpop.f32.mrf.mxu0
      %v406 = vadd.f32 %v227, %v405
      %v407 = vpop.f32.mrf.mxu0
      %408 = vmatprep.mubr.f32.mxu0 0.0
      %409 = vmatmul.mubr.f32.gmra.mxu0 %v197
      %v410 = vpop.f32.mrf.mxu0
      %v411 = vadd.f32 %v227, %v410
      %v412 = vpop.f32.mrf.mxu0
      %413 = vmatprep.mubr.f32.mxu0 0.0
      %414 = vmatmul.mubr.f32.gmra.mxu0 %v198
      %v415 = vpop.f32.mrf.mxu0
      %v416 = vadd.f32 %v227, %v415
      %v417 = vpop.f32.mrf.mxu0
      %418 = vmatprep.mubr.f32.mxu0 0.0
      %419 = vmatmul.mubr.f32.gmra.mxu0 %v199
      %v420 = vpop.f32.mrf.mxu0
      %v421 = vadd.f32 %v227, %v420
      %v422 = vpop.f32.mrf.mxu0
      %423 = vmatprep.mubr.f32.mxu0 0.0
      %424 = vmatmul.mubr.f32.gmra.mxu0 %v200
      %v425 = vpop.f32.mrf.mxu0
      %v426 = vadd.f32 %v227, %v425
      %v427 = vpop.f32.mrf.mxu0
      %428 = vmatprep.mubr.f32.mxu0 0.0
      %429 = vmatmul.mubr.f32.gmra.mxu0 %v201
      %v430 = vpop.f32.mrf.mxu0
      %v431 = vadd.f32 %v227, %v430
      %v432 = vpop.f32.mrf.mxu0
      %433 = vmatprep.mubr.f32.mxu0 0.0
      %434 = vmatmul.mubr.f32.gmra.mxu0 %v202
      %v435 = vpop.f32.mrf.mxu0
      %v436 = vadd.f32 %v227, %v435
      %v437 = vpop.f32.mrf.mxu0
      %438 = vmatprep.mubr.f32.mxu0 0.0
      %439 = vmatmul.mubr.f32.gmra.mxu0 %v203
      %v440 = vpop.f32.mrf.mxu0
      %v441 = vadd.f32 %v227, %v440
      %v442 = vpop.f32.mrf.mxu0
      %443 = vmatprep.mubr.f32.mxu0 0.0
      %444 = vmatmul.mubr.f32.gmra.mxu0 %v204
      %v445 = vpop.f32.mrf.mxu0
      %v446 = vadd.f32 %v227, %v445
      %v447 = vpop.f32.mrf.mxu0
      %448 = vmatprep.mubr.f32.mxu0 0.0
      %449 = vmatmul.mubr.f32.gmra.mxu0 %v205
      %v450 = vpop.f32.mrf.mxu0
      %v451 = vadd.f32 %v227, %v450
      %v452 = vpop.f32.mrf.mxu0
      %453 = vdwg.mxu0
      %454 = vst [vmem:[%s172] sm:$0xff] %v296
      %455 = vst [vmem:[%s172 + $0x8] sm:$0xff] %v301
      %456 = vst [vmem:[%s172 + $0x10] sm:$0xff] %v306
      %457 = vst [vmem:[%s172 + $0x18] sm:$0xff] %v311
      %458 = vst [vmem:[%s172 + $0x20] sm:$0xff] %v316
      %459 = vst [vmem:[%s172 + $0x28] sm:$0xff] %v321
      %460 = vst [vmem:[%s172 + $0x30] sm:$0xff] %v326
      %461 = vst [vmem:[%s172 + $0x38] sm:$0xff] %v331
      %462 = vst [vmem:[%s172 + $0x40] sm:$0xff] %v336
      %463 = vst [vmem:[%s172 + $0x48] sm:$0xff] %v341
      %464 = vst [vmem:[%s172 + $0x50] sm:$0xff] %v346
      %465 = vst [vmem:[%s172 + $0x58] sm:$0xff] %v351
      %466 = vst [vmem:[%s172 + $0x60] sm:$0xff] %v356
      %467 = vst [vmem:[%s172 + $0x68] sm:$0xff] %v361
      %468 = vst [vmem:[%s172 + $0x70] sm:$0xff] %v366
      %469 = vst [vmem:[%s172 + $0x78] sm:$0xff] %v371
      %470 = vst [vmem:[%s172 + $0x80] sm:$0xff] %v376
      %471 = vst [vmem:[%s172 + $0x88] sm:$0xff] %v381
      %472 = vst [vmem:[%s172 + $0x90] sm:$0xff] %v386
      %473 = vst [vmem:[%s172 + $0x98] sm:$0xff] %v391
      %474 = vst [vmem:[%s172 + $0xa0] sm:$0xff] %v396
      %475 = vst [vmem:[%s172 + $0xa8] sm:$0xff] %v401
      %476 = vst [vmem:[%s172 + $0xb0] sm:$0xff] %v406
      %477 = vst [vmem:[%s172 + $0xb8] sm:$0xff] %v411
      %478 = vst [vmem:[%s172 + $0xc0] sm:$0xff] %v416
      %479 = vst [vmem:[%s172 + $0xc8] sm:$0xff] %v421
      %480 = vst [vmem:[%s172 + $0xd0] sm:$0xff] %v426
      %481 = vst [vmem:[%s172 + $0xd8] sm:$0xff] %v431
      %482 = vst [vmem:[%s172 + $0xe0] sm:$0xff] %v436
      %483 = vst [vmem:[%s172 + $0xe8] sm:$0xff] %v441
      %484 = vst [vmem:[%s172 + $0xf0] sm:$0xff] %v446
      %485 = vst [vmem:[%s172 + $0xf8] sm:$0xff] %v451
      %s486 = smul.u32 32, %s14
      %p487 = scmp.lt.s32.totalorder %s486, 767
      %s488 = scalar_select %p487, %s486, 767
      %s489 = smul.addr %s488, 8
      %s490 = scalar_lea.vmem %s3, %s489
      // Predicated region
      $region33: #{pilotnet_forward.6} parent=31 // pred_check
        %p491 = pneg %p100
      $region34: #{pilotnet_forward.6} parent=31 // pred_check_branch
        %493 = sbr.rel (%p491) target = $region36
      $region35: #{pilotnet_forward.6} parent=31 // pred_region
        %s494 = smul.u32 32, %s14
      $region36: #{pilotnet_forward.6} parent=31 // pred_fallthru
        _
    $region32: #{pilotnet_forward.6} parent=5 // pred_fallthru
      _
    %p495 = scmp.le.s32.totalorder 2, %s9
    // Predicated region
    $region37: #{pilotnet_forward.6} parent=5 // pred_check
      %p496 = pneg %p495
    $region38: #{pilotnet_forward.6} parent=5 // pred_check_branch
      %498 = sbr.rel (%p496) target = $region40
    $region39: #{pilotnet_forward.6} parent=5 // pred_region
      %s499 = ssub.s32 %s9, 2
      // Predicated region
      $region41: #{pilotnet_forward.6} parent=39 // pred_check
        %p500 = pneg %p106
      $region42: #{pilotnet_forward.6} parent=39 // pred_check_branch
        %502 = sbr.rel (%p500) target = $region44
      $region43: #{pilotnet_forward.6} parent=39 // pred_region
        %s503 = smul.u32 32, %s15
        %p504 = scmp.lt.s32.totalorder %s503, 767
        %s505 = scalar_select %p504, %s503, 767
        %s506 = smul.addr %s505, 8
        %s507 = scalar_lea.vmem %s3, %s506
      $region44: #{pilotnet_forward.6} parent=39 // pred_fallthru
        _
    $region40: #{pilotnet_forward.6} parent=5 // pred_fallthru
      _
  $region6: #{pilotnet_forward.6} parent=0 // loop_footer
    %s13 = sadd.s32 1, %s9
  $region7: #{pilotnet_forward.6} parent=0 // loop_footer_branch
    %8 = sbr.rel target = $region3
  $region8: #{pilotnet_forward.6} parent=0 // loop_exit
    _

// kernel: pilotnet_forward.7
$region0: #{pilotnet_forward.7}
  #allocation0 [shape = 'u32[]', space=smem, size = 0x4, offset = 0x4, fixed_abs, tag = 'smem constant byte address 0x4 - core index']
  #allocation1 [shape = 'u32[144,128]{1,0:T(1,128)}', space=vmem, size = 0x12000, scoped, tag = 'internal scratch']
  %s0 = inlined_call_operand.vmem [shape: f32[1536,640], index: 0, kind: input, shape index: {}]
  %s1 = inlined_call_operand.vmem [shape: f32[640,128], index: 1, kind: input, shape index: {}]
  %s2 = inlined_call_operand.vmem [shape: f32[1,128], index: 2, kind: input, shape index: {}]
  %s3 = inlined_call_operand.vmem [shape: f32[1536,128], index: 3, kind: output, shape index: {}]
  %s4 = sld [smem:[#allocation0]]
  $region45: #{pilotnet_forward.7} parent=0
    _
  %s6 = ssub.s32 1, %s4
  %s7 = scalar_select 0, %s6, %s4
  loop: start=0, step=1, limit=8
  $region2: #{pilotnet_forward.7} parent=0 // loop_pre_header
    _
  $region3: #{pilotnet_forward.7} parent=0 // loop_header
    %s9 = sphi 0, %s13
    %p10 = scmp.ge.s32.totalorder %s9, 8
    %s19 = sphi 0, %s21
    %s22 = sphi 0, %s19
    %s23 = sphi 0, %s22
    %s39 = sphi 0, %s23
    %s43 = sphi 0, %s43
    %s45 = sphi 0, %s43
    %s46 = sphi 0, %s45
    %s60 = sphi 0, %s46
    %s64 = sphi 0, %s64
    %s66 = sphi 0, %s64
    %s67 = sphi 0, %s66
    %s81 = sphi 0, %s67
    %s87 = sphi 0, %s89
    %s90 = sphi 0, %s87
    %s91 = sphi 0, %s90
    %s107 = sphi 0, %s91
  $region4: #{pilotnet_forward.7} parent=0 // loop_header_branch
    %12 = sbr.rel (%p10) target = $region8
  $region5: #{pilotnet_forward.7} parent=0 // loop_body
    %s14 = ssub.s32 %s9, 1
    %s15 = ssub.s32 %s9, 2
    %s16 = sadd.s32 %s9, 1
    %s17 = ssub.s32 %s9, %s16
    %p18 = scmp.eq.s32.totalorder %s17, 0
    %s20 = sadd.s32 %s19, 1
    %s21 = scalar_select %p18, %s19, %s20
    %p24 = pneg %p18
    %p25 = scmp.eq.s32.totalorder %s9, 5
    %p26 = por %p24, %p25
    %p27 = scmp.ne.s32.totalorder %s19, %s22
    %p28 = scmp.eq.s32.totalorder %s9, 0
    %p29 = por %p27, %p28
    %p30 = scmp.ne.s32.totalorder %s19, %s22
    %p31 = scmp.eq.s32.totalorder %s14, 5
    %p32 = por %p30, %p31
    %p33 = scmp.ne.s32.totalorder %s22, %s23
    %p34 = scmp.eq.s32.totalorder %s14, 0
    %p35 = por %p33, %p34
    %p36 = scmp.ne.s32.totalorder %s22, %s23
    %p37 = scmp.eq.s32.totalorder %s15, 5
    %p38 = por %p36, %p37
    %p40 = scmp.ne.s32.totalorder %s23, %s39
    %p41 = scmp.eq.s32.totalorder %s15, 0
    %p42 = por %p40, %p41
    %s44 = sadd.s32 %s43, 1
    %p47 = scmp.eq.s32.totalorder %s9, 5
    %p48 = scmp.ne.s32.totalorder %s43, %s45
    %p49 = scmp.eq.s32.totalorder %s9, 0
    %p50 = por %p48, %p49
    %p51 = scmp.ne.s32.totalorder %s43, %s45
    %p52 = scmp.eq.s32.totalorder %s14, 5
    %p53 = por %p51, %p52
    %p54 = scmp.ne.s32.totalorder %s45, %s46
    %p55 = scmp.eq.s32.totalorder %s14, 0
    %p56 = por %p54, %p55
    %p57 = scmp.ne.s32.totalorder %s45, %s46
    %p58 = scmp.eq.s32.totalorder %s15, 5
    %p59 = por %p57, %p58
    %p61 = scmp.ne.s32.totalorder %s46, %s60
    %p62 = scmp.eq.s32.totalorder %s15, 0
    %p63 = por %p61, %p62
    %s65 = sadd.s32 %s64, 1
    %p68 = scmp.eq.s32.totalorder %s9, 5
    %p69 = scmp.ne.s32.totalorder %s64, %s66
    %p70 = scmp.eq.s32.totalorder %s9, 0
    %p71 = por %p69, %p70
    %p72 = scmp.ne.s32.totalorder %s64, %s66
    %p73 = scmp.eq.s32.totalorder %s14, 5
    %p74 = por %p72, %p73
    %p75 = scmp.ne.s32.totalorder %s66, %s67
    %p76 = scmp.eq.s32.totalorder %s14, 0
    %p77 = por %p75, %p76
    %p78 = scmp.ne.s32.totalorder %s66, %s67
    %p79 = scmp.eq.s32.totalorder %s15, 5
    %p80 = por %p78, %p79
    %p82 = scmp.ne.s32.totalorder %s67, %s81
    %p83 = scmp.eq.s32.totalorder %s15, 0
    %p84 = por %p82, %p83
    %s85 = ssub.s32 %s9, %s16
    %p86 = scmp.eq.s32.totalorder %s85, 0
    %s88 = sadd.s32 %s87, 1
    %s89 = scalar_select %p86, %s87, %s88
    %p92 = pneg %p86
    %p93 = scmp.eq.s32.totalorder %s9, 5
    %p94 = por %p92, %p93
    %p95 = scmp.ne.s32.totalorder %s87, %s90
    %p96 = scmp.eq.s32.totalorder %s9, 0
    %p97 = por %p95, %p96
    %p98 = scmp.ne.s32.totalorder %s87, %s90
    %p99 = scmp.eq.s32.totalorder %s14, 5
    %p100 = por %p98, %p99
    %p101 = scmp.ne.s32.totalorder %s90, %s91
    %p102 = scmp.eq.s32.totalorder %s14, 0
    %p103 = por %p101, %p102
    %p104 = scmp.ne.s32.totalorder %s90, %s91
    %p105 = scmp.eq.s32.totalorder %s15, 5
    %p106 = por %p104, %p105
    %p108 = scmp.ne.s32.totalorder %s91, %s107
    %p109 = scmp.eq.s32.totalorder %s15, 0
    %p110 = por %p108, %p109
    %p111 = scmp.le.s32.totalorder 1, %s9
    %p112 = scmp.lt.s32.totalorder %s9, 7
    %p113 = pnand %p111, %p112
    %p114 = pneg %p113
    // Predicated region
    $region9: #{pilotnet_forward.7} parent=5 // pred_check
      _
    $region10: #{pilotnet_forward.7} parent=5 // pred_check_branch
      %116 = sbr.rel (%p113) target = $region12
    $region11: #{pilotnet_forward.7} parent=5 // pred_region
      %s117 = ssub.s32 %s9, 1
      // Predicated region
      $region13: #{pilotnet_forward.7} parent=11 // pred_check
        %p118 = pneg %p56
      $region14: #{pilotnet_forward.7} parent=11 // pred_check_branch
        %120 = sbr.rel (%p118) target = $region16
      $region15: #{pilotnet_forward.7} parent=11 // pred_region
        _
      $region16: #{pilotnet_forward.7} parent=11 // pred_fallthru
        _
      // Predicated region
      $region17: #{pilotnet_forward.7} parent=11 // pred_check
        %p121 = pneg %p77
      $region18: #{pilotnet_forward.7} parent=11 // pred_check_branch
        %123 = sbr.rel (%p121) target = $region20
      $region19: #{pilotnet_forward.7} parent=11 // pred_region
        _
      $region20: #{pilotnet_forward.7} parent=11 // pred_fallthru
        _
    $region12: #{pilotnet_forward.7} parent=5 // pred_fallthru
      _
    %p124 = scmp.lt.s32.totalorder %s9, 6
    // Predicated region
    $region21: #{pilotnet_forward.7} parent=5 // pred_check
      %p125 = pneg %p124
    $region22: #{pilotnet_forward.7} parent=5 // pred_check_branch
      %127 = sbr.rel (%p125) target = $region24
    $region23: #{pilotnet_forward.7} parent=5 // pred_region
      // Predicated region
      $region25: #{pilotnet_forward.7} parent=23 // pred_check
        %p128 = pneg %p29
      $region26: #{pilotnet_forward.7} parent=23 // pred_check_branch
        %130 = sbr.rel (%p128) target = $region28
      $region27: #{pilotnet_forward.7} parent=23 // pred_region
        %s131 = smul.u32 32, %s9
        %p132 = scmp.lt.s32.totalorder %s131, 191
        %s133 = scalar_select %p132, %s131, 191
        %s134 = smul.addr %s133, 5
        %s135 = smul.addr %s134, 8
        %s136 = scalar_lea.vmem %s0, %s135
        %s137 = smul.u32 32, %s9
      $region28: #{pilotnet_forward.7} parent=23 // pred_fallthru
        _
    $region24: #{pilotnet_forward.7} parent=5 // pred_fallthru
      _
    %p138 = scmp.le.s32.totalorder 1, %s9
    %p139 = scmp.lt.s32.totalorder %s9, 7
    %p140 = pnand %p138, %p139
    %p141 = pneg %p140
    // Predicated region
    $region29: #{pilotnet_forward.7} parent=5 // pred_check
      _
    $region30: #{pilotnet_forward.7} parent=5 // pred_check_branch
      %143 = sbr.rel (%p140) target = $region32
    $region31: #{pilotnet_forward.7} parent=5 // pred_region
      %s144 = ssub.s32 %s9, 1
      %s145 = smul.u32 32, %s14
      %p146 = scmp.lt.s32.totalorder %s145, 191
      %s147 = scalar_select %p146, %s145, 191
      %s148 = smul.addr %s147, 5
      %s149 = smul.addr %s148, 8
      %s150 = scalar_lea.vmem %s0, %s149
      %p151 = pneg %p35
      %p152 = pneg %p32
      %p153 = pneg %p56
      %p154 = pneg %p53
      %p155 = pneg %p77
      %p156 = pneg %p74
      %p157 = pneg %p103
      %p158 = pneg %p100
      %s159 = smul.u32 32, %s14
      %p160 = scmp.lt.s32.totalorder %s159, 191
      %s161 = scalar_select %p160, %s159, 191
      %s162 = smul.addr %s161, 8
      %s163 = scalar_lea.vmem %s3, %s162
      %s164 = smul.u32 32, %s14
      %p165 = scmp.lt.s32.totalorder %s164, 191
      %s166 = scalar_select %p165, %s164, 191
      %s167 = smul.addr %s166, 5
      %s168 = smul.addr %s167, 8
      %s169 = scalar_lea.vmem %s0, %s168
      %s170 = smul.u32 32, %s14
      %s171 = smul.u32 32, %s14
      %p172 = scmp.lt.s32.totalorder %s171, 191
      %s173 = scalar_select %p172, %s171, 191
      %s174 = smul.addr %s173, 8
      %s175 = scalar_lea.vmem %s3, %s174
      %s176 = smul.u32 32, %s14
      %v177 = vld [vmem:[%s169] sm:$0xff]
      %v178 = vld [vmem:[%s169 + $0x8] sm:$0xff]
      %v179 = vld [vmem:[%s169 + $0x10] sm:$0xff]
      %v180 = vld [vmem:[%s169 + $0x18] sm:$0xff]
      %v181 = vld [vmem:[%s169 + $0x20] sm:$0xff]
      %v182 = vld [vmem:[%s169 + $0x28] sm:$0xff]
      %v183 = vld [vmem:[%s169 + $0x30] sm:$0xff]
      %v184 = vld [vmem:[%s169 + $0x38] sm:$0xff]
      %v185 = vld [vmem:[%s169 + $0x40] sm:$0xff]
      %v186 = vld [vmem:[%s169 + $0x48] sm:$0xff]
      %v187 = vld [vmem:[%s169 + $0x50] sm:$0xff]
      %v188 = vld [vmem:[%s169 + $0x58] sm:$0xff]
      %v189 = vld [vmem:[%s169 + $0x60] sm:$0xff]
      %v190 = vld [vmem:[%s169 + $0x68] sm:$0xff]
      %v191 = vld [vmem:[%s169 + $0x70] sm:$0xff]
      %v192 = vld [vmem:[%s169 + $0x78] sm:$0xff]
      %v193 = vld [vmem:[%s169 + $0x80] sm:$0xff]
      %v194 = vld [vmem:[%s169 + $0x88] sm:$0xff]
      %v195 = vld [vmem:[%s169 + $0x90] sm:$0xff]
      %v196 = vld [vmem:[%s169 + $0x98] sm:$0xff]
      %v197 = vld [vmem:[%s169 + $0xa0] sm:$0xff]
      %v198 = vld [vmem:[%s169 + $0xa8] sm:$0xff]
      %v199 = vld [vmem:[%s169 + $0xb0] sm:$0xff]
      %v200 = vld [vmem:[%s169 + $0xb8] sm:$0xff]
      %v201 = vld [vmem:[%s169 + $0xc0] sm:$0xff]
      %v202 = vld [vmem:[%s169 + $0xc8] sm:$0xff]
      %v203 = vld [vmem:[%s169 + $0xd0] sm:$0xff]
      %v204 = vld [vmem:[%s169 + $0xd8] sm:$0xff]
      %v205 = vld [vmem:[%s169 + $0xe0] sm:$0xff]
      %v206 = vld [vmem:[%s169 + $0xe8] sm:$0xff]
      %v207 = vld [vmem:[%s169 + $0xf0] sm:$0xff]
      %v208 = vld [vmem:[%s169 + $0xf8] sm:$0xff]
      %v209 = vld [vmem:[%s169 + $0x100] sm:$0xff]
      %v210 = vld [vmem:[%s169 + $0x108] sm:$0xff]
      %v211 = vld [vmem:[%s169 + $0x110] sm:$0xff]
      %v212 = vld [vmem:[%s169 + $0x118] sm:$0xff]
      %v213 = vld [vmem:[%s169 + $0x120] sm:$0xff]
      %v214 = vld [vmem:[%s169 + $0x128] sm:$0xff]
      %v215 = vld [vmem:[%s169 + $0x130] sm:$0xff]
      %v216 = vld [vmem:[%s169 + $0x138] sm:$0xff]
      %v217 = vld [vmem:[%s169 + $0x140] sm:$0xff]
      %v218 = vld [vmem:[%s169 + $0x148] sm:$0xff]
      %v219 = vld [vmem:[%s169 + $0x150] sm:$0xff]
      %v220 = vld [vmem:[%s169 + $0x158] sm:$0xff]
      %v221 = vld [vmem:[%s169 + $0x160] sm:$0xff]
      %v222 = vld [vmem:[%s169 + $0x168] sm:$0xff]
      %v223 = vld [vmem:[%s169 + $0x170] sm:$0xff]
      %v224 = vld [vmem:[%s169 + $0x178] sm:$0xff]
      %v225 = vld [vmem:[%s169 + $0x180] sm:$0xff]
      %v226 = vld [vmem:[%s169 + $0x188] sm:$0xff]
      %v227 = vld [vmem:[%s169 + $0x190] sm:$0xff]
      %v228 = vld [vmem:[%s169 + $0x198] sm:$0xff]
      %v229 = vld [vmem:[%s169 + $0x1a0] sm:$0xff]
      %v230 = vld [vmem:[%s169 + $0x1a8] sm:$0xff]
      %v231 = vld [vmem:[%s169 + $0x1b0] sm:$0xff]
      %v232 = vld [vmem:[%s169 + $0x1b8] sm:$0xff]
      %v233 = vld [vmem:[%s169 + $0x1c0] sm:$0xff]
      %v234 = vld [vmem:[%s169 + $0x1c8] sm:$0xff]
      %v235 = vld [vmem:[%s169 + $0x1d0] sm:$0xff]
      %v236 = vld [vmem:[%s169 + $0x1d8] sm:$0xff]
      %v237 = vld [vmem:[%s169 + $0x1e0] sm:$0xff]
      %v238 = vld [vmem:[%s169 + $0x1e8] sm:$0xff]
      %v239 = vld [vmem:[%s169 + $0x1f0] sm:$0xff]
      %v240 = vld [vmem:[%s169 + $0x1f8] sm:$0xff]
      %v241 = vld [vmem:[%s169 + $0x200] sm:$0xff]
      %v242 = vld [vmem:[%s169 + $0x208] sm:$0xff]
      %v243 = vld [vmem:[%s169 + $0x210] sm:$0xff]
      %v244 = vld [vmem:[%s169 + $0x218] sm:$0xff]
      %v245 = vld [vmem:[%s169 + $0x220] sm:$0xff]
      %v246 = vld [vmem:[%s169 + $0x228] sm:$0xff]
      %v247 = vld [vmem:[%s169 + $0x230] sm:$0xff]
      %v248 = vld [vmem:[%s169 + $0x238] sm:$0xff]
      %v249 = vld [vmem:[%s169 + $0x240] sm:$0xff]
      %v250 = vld [vmem:[%s169 + $0x248] sm:$0xff]
      %v251 = vld [vmem:[%s169 + $0x250] sm:$0xff]
      %v252 = vld [vmem:[%s169 + $0x258] sm:$0xff]
      %v253 = vld [vmem:[%s169 + $0x260] sm:$0xff]
      %v254 = vld [vmem:[%s169 + $0x268] sm:$0xff]
      %v255 = vld [vmem:[%s169 + $0x270] sm:$0xff]
      %v256 = vld [vmem:[%s169 + $0x278] sm:$0xff]
      %v257 = vld [vmem:[%s169 + $0x280] sm:$0xff]
      %v258 = vld [vmem:[%s169 + $0x288] sm:$0xff]
      %v259 = vld [vmem:[%s169 + $0x290] sm:$0xff]
      %v260 = vld [vmem:[%s169 + $0x298] sm:$0xff]
      %v261 = vld [vmem:[%s169 + $0x2a0] sm:$0xff]
      %v262 = vld [vmem:[%s169 + $0x2a8] sm:$0xff]
      %v263 = vld [vmem:[%s169 + $0x2b0] sm:$0xff]
      %v264 = vld [vmem:[%s169 + $0x2b8] sm:$0xff]
      %v265 = vld [vmem:[%s169 + $0x2c0] sm:$0xff]
      %v266 = vld [vmem:[%s169 + $0x2c8] sm:$0xff]
      %v267 = vld [vmem:[%s169 + $0x2d0] sm:$0xff]
      %v268 = vld [vmem:[%s169 + $0x2d8] sm:$0xff]
      %v269 = vld [vmem:[%s169 + $0x2e0] sm:$0xff]
      %v270 = vld [vmem:[%s169 + $0x2e8] sm:$0xff]
      %v271 = vld [vmem:[%s169 + $0x2f0] sm:$0xff]
      %v272 = vld [vmem:[%s169 + $0x2f8] sm:$0xff]
      %v273 = vld [vmem:[%s169 + $0x300] sm:$0xff]
      %v274 = vld [vmem:[%s169 + $0x308] sm:$0xff]
      %v275 = vld [vmem:[%s169 + $0x310] sm:$0xff]
      %v276 = vld [vmem:[%s169 + $0x318] sm:$0xff]
      %v277 = vld [vmem:[%s169 + $0x320] sm:$0xff]
      %v278 = vld [vmem:[%s169 + $0x328] sm:$0xff]
      %v279 = vld [vmem:[%s169 + $0x330] sm:$0xff]
      %v280 = vld [vmem:[%s169 + $0x338] sm:$0xff]
      %v281 = vld [vmem:[%s169 + $0x340] sm:$0xff]
      %v282 = vld [vmem:[%s169 + $0x348] sm:$0xff]
      %v283 = vld [vmem:[%s169 + $0x350] sm:$0xff]
      %v284 = vld [vmem:[%s169 + $0x358] sm:$0xff]
      %v285 = vld [vmem:[%s169 + $0x360] sm:$0xff]
      %v286 = vld [vmem:[%s169 + $0x368] sm:$0xff]
      %v287 = vld [vmem:[%s169 + $0x370] sm:$0xff]
      %v288 = vld [vmem:[%s169 + $0x378] sm:$0xff]
      %v289 = vld [vmem:[%s169 + $0x380] sm:$0xff]
      %v290 = vld [vmem:[%s169 + $0x388] sm:$0xff]
      %v291 = vld [vmem:[%s169 + $0x390] sm:$0xff]
      %v292 = vld [vmem:[%s169 + $0x398] sm:$0xff]
      %v293 = vld [vmem:[%s169 + $0x3a0] sm:$0xff]
      %v294 = vld [vmem:[%s169 + $0x3a8] sm:$0xff]
      %v295 = vld [vmem:[%s169 + $0x3b0] sm:$0xff]
      %v296 = vld [vmem:[%s169 + $0x3b8] sm:$0xff]
      %v297 = vld [vmem:[%s169 + $0x3c0] sm:$0xff]
      %v298 = vld [vmem:[%s169 + $0x3c8] sm:$0xff]
      %v299 = vld [vmem:[%s169 + $0x3d0] sm:$0xff]
      %v300 = vld [vmem:[%s169 + $0x3d8] sm:$0xff]
      %v301 = vld [vmem:[%s169 + $0x3e0] sm:$0xff]
      %v302 = vld [vmem:[%s169 + $0x3e8] sm:$0xff]
      %v303 = vld [vmem:[%s169 + $0x3f0] sm:$0xff]
      %v304 = vld [vmem:[%s169 + $0x3f8] sm:$0xff]
      %v305 = vld [vmem:[%s169 + $0x400] sm:$0xff]
      %v306 = vld [vmem:[%s169 + $0x408] sm:$0xff]
      %v307 = vld [vmem:[%s169 + $0x410] sm:$0xff]
      %v308 = vld [vmem:[%s169 + $0x418] sm:$0xff]
      %v309 = vld [vmem:[%s169 + $0x420] sm:$0xff]
      %v310 = vld [vmem:[%s169 + $0x428] sm:$0xff]
      %v311 = vld [vmem:[%s169 + $0x430] sm:$0xff]
      %v312 = vld [vmem:[%s169 + $0x438] sm:$0xff]
      %v313 = vld [vmem:[%s169 + $0x440] sm:$0xff]
      %v314 = vld [vmem:[%s169 + $0x448] sm:$0xff]
      %v315 = vld [vmem:[%s169 + $0x450] sm:$0xff]
      %v316 = vld [vmem:[%s169 + $0x458] sm:$0xff]
      %v317 = vld [vmem:[%s169 + $0x460] sm:$0xff]
      %v318 = vld [vmem:[%s169 + $0x468] sm:$0xff]
      %v319 = vld [vmem:[%s169 + $0x470] sm:$0xff]
      %v320 = vld [vmem:[%s169 + $0x478] sm:$0xff]
      %v321 = vld [vmem:[%s169 + $0x480] sm:$0xff]
      %v322 = vld [vmem:[%s169 + $0x488] sm:$0xff]
      %v323 = vld [vmem:[%s169 + $0x490] sm:$0xff]
      %v324 = vld [vmem:[%s169 + $0x498] sm:$0xff]
      %v325 = vld [vmem:[%s169 + $0x4a0] sm:$0xff]
      %v326 = vld [vmem:[%s169 + $0x4a8] sm:$0xff]
      %v327 = vld [vmem:[%s169 + $0x4b0] sm:$0xff]
      %v328 = vld [vmem:[%s169 + $0x4b8] sm:$0xff]
      %v329 = vld [vmem:[%s169 + $0x4c0] sm:$0xff]
      %v330 = vld [vmem:[%s169 + $0x4c8] sm:$0xff]
      %v331 = vld [vmem:[%s169 + $0x4d0] sm:$0xff]
      %v332 = vld [vmem:[%s169 + $0x4d8] sm:$0xff]
      %v333 = vld [vmem:[%s169 + $0x4e0] sm:$0xff]
      %v334 = vld [vmem:[%s169 + $0x4e8] sm:$0xff]
      %v335 = vld [vmem:[%s169 + $0x4f0] sm:$0xff]
      %v336 = vld [vmem:[%s169 + $0x4f8] sm:$0xff]
      %v337 = vld [vmem:[%s1] sm:$0xff]
      %v338 = vld [vmem:[%s1 + $0x8] sm:$0xff]
      %v339 = vld [vmem:[%s1 + $0x10] sm:$0xff]
      %v340 = vld [vmem:[%s1 + $0x18] sm:$0xff]
      %v341 = vld [vmem:[%s1 + $0x20] sm:$0xff]
      %v342 = vld [vmem:[%s1 + $0x28] sm:$0xff]
      %v343 = vld [vmem:[%s1 + $0x30] sm:$0xff]
      %v344 = vld [vmem:[%s1 + $0x38] sm:$0xff]
      %v345 = vld [vmem:[%s1 + $0x40] sm:$0xff]
      %v346 = vld [vmem:[%s1 + $0x48] sm:$0xff]
      %v347 = vld [vmem:[%s1 + $0x50] sm:$0xff]
      %v348 = vld [vmem:[%s1 + $0x58] sm:$0xff]
      %v349 = vld [vmem:[%s1 + $0x60] sm:$0xff]
      %v350 = vld [vmem:[%s1 + $0x68] sm:$0xff]
      %v351 = vld [vmem:[%s1 + $0x70] sm:$0xff]
      %v352 = vld [vmem:[%s1 + $0x78] sm:$0xff]
      %v353 = vld [vmem:[%s1 + $0x80] sm:$0xff]
      %v354 = vld [vmem:[%s1 + $0x88] sm:$0xff]
      %v355 = vld [vmem:[%s1 + $0x90] sm:$0xff]
      %v356 = vld [vmem:[%s1 + $0x98] sm:$0xff]
      %v357 = vld [vmem:[%s1 + $0xa0] sm:$0xff]
      %v358 = vld [vmem:[%s1 + $0xa8] sm:$0xff]
      %v359 = vld [vmem:[%s1 + $0xb0] sm:$0xff]
      %v360 = vld [vmem:[%s1 + $0xb8] sm:$0xff]
      %v361 = vld [vmem:[%s1 + $0xc0] sm:$0xff]
      %v362 = vld [vmem:[%s1 + $0xc8] sm:$0xff]
      %v363 = vld [vmem:[%s1 + $0xd0] sm:$0xff]
      %v364 = vld [vmem:[%s1 + $0xd8] sm:$0xff]
      %v365 = vld [vmem:[%s1 + $0xe0] sm:$0xff]
      %v366 = vld [vmem:[%s1 + $0xe8] sm:$0xff]
      %v367 = vld [vmem:[%s1 + $0xf0] sm:$0xff]
      %v368 = vld [vmem:[%s1 + $0xf8] sm:$0xff]
      %v369 = vld [vmem:[%s1 + $0x100] sm:$0xff]
      %v370 = vld [vmem:[%s1 + $0x108] sm:$0xff]
      %v371 = vld [vmem:[%s1 + $0x110] sm:$0xff]
      %v372 = vld [vmem:[%s1 + $0x118] sm:$0xff]
      %v373 = vld [vmem:[%s1 + $0x120] sm:$0xff]
      %v374 = vld [vmem:[%s1 + $0x128] sm:$0xff]
      %v375 = vld [vmem:[%s1 + $0x130] sm:$0xff]
      %v376 = vld [vmem:[%s1 + $0x138] sm:$0xff]
      %v377 = vld [vmem:[%s1 + $0x140] sm:$0xff]
      %v378 = vld [vmem:[%s1 + $0x148] sm:$0xff]
      %v379 = vld [vmem:[%s1 + $0x150] sm:$0xff]
      %v380 = vld [vmem:[%s1 + $0x158] sm:$0xff]
      %v381 = vld [vmem:[%s1 + $0x160] sm:$0xff]
      %v382 = vld [vmem:[%s1 + $0x168] sm:$0xff]
      %v383 = vld [vmem:[%s1 + $0x170] sm:$0xff]
      %v384 = vld [vmem:[%s1 + $0x178] sm:$0xff]
      %v385 = vld [vmem:[%s1 + $0x180] sm:$0xff]
      %v386 = vld [vmem:[%s1 + $0x188] sm:$0xff]
      %v387 = vld [vmem:[%s1 + $0x190] sm:$0xff]
      %v388 = vld [vmem:[%s1 + $0x198] sm:$0xff]
      %v389 = vld [vmem:[%s1 + $0x1a0] sm:$0xff]
      %v390 = vld [vmem:[%s1 + $0x1a8] sm:$0xff]
      %v391 = vld [vmem:[%s1 + $0x1b0] sm:$0xff]
      %v392 = vld [vmem:[%s1 + $0x1b8] sm:$0xff]
      %v393 = vld [vmem:[%s1 + $0x1c0] sm:$0xff]
      %v394 = vld [vmem:[%s1 + $0x1c8] sm:$0xff]
      %v395 = vld [vmem:[%s1 + $0x1d0] sm:$0xff]
      %v396 = vld [vmem:[%s1 + $0x1d8] sm:$0xff]
      %v397 = vld [vmem:[%s1 + $0x1e0] sm:$0xff]
      %v398 = vld [vmem:[%s1 + $0x1e8] sm:$0xff]
      %v399 = vld [vmem:[%s1 + $0x1f0] sm:$0xff]
      %v400 = vld [vmem:[%s1 + $0x1f8] sm:$0xff]
      %v401 = vld [vmem:[%s1 + $0x200] sm:$0xff]
      %v402 = vld [vmem:[%s1 + $0x208] sm:$0xff]
      %v403 = vld [vmem:[%s1 + $0x210] sm:$0xff]
      %v404 = vld [vmem:[%s1 + $0x218] sm:$0xff]
      %v405 = vld [vmem:[%s1 + $0x220] sm:$0xff]
      %v406 = vld [vmem:[%s1 + $0x228] sm:$0xff]
      %v407 = vld [vmem:[%s1 + $0x230] sm:$0xff]
      %v408 = vld [vmem:[%s1 + $0x238] sm:$0xff]
      %v409 = vld [vmem:[%s1 + $0x240] sm:$0xff]
      %v410 = vld [vmem:[%s1 + $0x248] sm:$0xff]
      %v411 = vld [vmem:[%s1 + $0x250] sm:$0xff]
      %v412 = vld [vmem:[%s1 + $0x258] sm:$0xff]
      %v413 = vld [vmem:[%s1 + $0x260] sm:$0xff]
      %v414 = vld [vmem:[%s1 + $0x268] sm:$0xff]
      %v415 = vld [vmem:[%s1 + $0x270] sm:$0xff]
      %v416 = vld [vmem:[%s1 + $0x278] sm:$0xff]
      %v417 = vld [vmem:[%s2] sm:$0x1]
      %v419 = vlaneseq
      %v420 = vshrl.u32 %v419, 7
      %v421 = vsub.s32 0, %v420
      %v422 = vrot.slane %v417, %v421
      %424 = vmatprep.subr.mxu0 0.0
      %425 = vmatpush1.msra.mxu0 %v352
      %426 = vmatprep.subr.mxu0 0.0
      %427 = vmatpush1.msra.mxu0 %v351
      %428 = vmatprep.subr.mxu0 0.0
      %429 = vmatpush1.msra.mxu0 %v350
      %430 = vmatprep.subr.mxu0 0.0
      %431 = vmatpush1.msra.mxu0 %v349
      %432 = vmatprep.subr.mxu0 0.0
      %433 = vmatpush1.msra.mxu0 %v348
      %434 = vmatprep.subr.mxu0 0.0
      %435 = vmatpush1.msra.mxu0 %v347
      %436 = vmatprep.subr.mxu0 0.0
      %437 = vmatpush1.msra.mxu0 %v346
      %438 = vmatprep.subr.mxu0 0.0
      %439 = vmatpush1.msra.mxu0 %v345
      %440 = vmatprep.subr.mxu0 0.0
      %441 = vmatpush1.msra.mxu0 %v344
      %442 = vmatprep.subr.mxu0 0.0
      %443 = vmatpush1.msra.mxu0 %v343
      %444 = vmatprep.subr.mxu0 0.0
      %445 = vmatpush1.msra.mxu0 %v342
      %446 = vmatprep.subr.mxu0 0.0
      %447 = vmatpush1.msra.mxu0 %v341
      %448 = vmatprep.subr.mxu0 0.0
      %449 = vmatpush1.msra.mxu0 %v340
      %450 = vmatprep.subr.mxu0 0.0
      %451 = vmatpush1.msra.mxu0 %v339
      %452 = vmatprep.subr.mxu0 0.0
      %453 = vmatpush1.msra.mxu0 %v338
      %454 = vmatprep.subr.mxu0 0.0
      %455 = vmatpush1.msra.mxu0 %v337
      %456 = vmatprep.subr.mxu0 0.0
      %457 = vmatpush2.msra.mxu0 %v368
      %458 = vmatprep.subr.mxu0 0.0
      %459 = vmatpush2.msra.mxu0 %v367
      %460 = vmatprep.subr.mxu0 0.0
      %461 = vmatpush2.msra.mxu0 %v366
      %462 = vmatprep.subr.mxu0 0.0
      %463 = vmatpush2.msra.mxu0 %v365
      %464 = vmatprep.subr.mxu0 0.0
      %465 = vmatpush2.msra.mxu0 %v364
      %466 = vmatprep.subr.mxu0 0.0
      %467 = vmatpush2.msra.mxu0 %v363
      %468 = vmatprep.subr.mxu0 0.0
      %469 = vmatpush2.msra.mxu0 %v362
      %470 = vmatprep.subr.mxu0 0.0
      %471 = vmatpush2.msra.mxu0 %v361
      %472 = vmatprep.subr.mxu0 0.0
      %473 = vmatpush2.msra.mxu0 %v360
      %474 = vmatprep.subr.mxu0 0.0
      %475 = vmatpush2.msra.mxu0 %v359
      %476 = vmatprep.subr.mxu0 0.0
      %477 = vmatpush2.msra.mxu0 %v358
      %478 = vmatprep.subr.mxu0 0.0
      %479 = vmatpush2.msra.mxu0 %v357
      %480 = vmatprep.subr.mxu0 0.0
      %481 = vmatpush2.msra.mxu0 %v356
      %482 = vmatprep.subr.mxu0 0.0
      %483 = vmatpush2.msra.mxu0 %v355
      %484 = vmatprep.subr.mxu0 0.0
      %485 = vmatpush2.msra.mxu0 %v354
      %486 = vmatprep.subr.mxu0 0.0
      %487 = vmatpush2.msra.mxu0 %v353
      %488 = vmatprep.mubr.f32.mxu0 %v178
      %489 = vmatmul.mubr.f32.gmra.mxu0 %v177
      %v490 = vpop.f32.mrf.mxu0
      %v491 = vadd.f32 %v422, %v490
      %v492 = vpop.f32.mrf.mxu0
      %493 = vmatprep.mubr.f32.mxu0 %v183
      %494 = vmatmul.mubr.f32.gmra.mxu0 %v182
      %v495 = vpop.f32.mrf.mxu0
      %v496 = vadd.f32 %v422, %v495
      %v497 = vpop.f32.mrf.mxu0
      %498 = vmatprep.mubr.f32.mxu0 %v188
      %499 = vmatmul.mubr.f32.gmra.mxu0 %v187
      %v500 = vpop.f32.mrf.mxu0
      %v501 = vadd.f32 %v422, %v500
      %v502 = vpop.f32.mrf.mxu0
      %503 = vmatprep.mubr.f32.mxu0 %v193
      %504 = vmatmul.mubr.f32.gmra.mxu0 %v192
      %v505 = vpop.f32.mrf.mxu0
      %v506 = vadd.f32 %v422, %v505
      %v507 = vpop.f32.mrf.mxu0
      %508 = vmatprep.mubr.f32.mxu0 %v198
      %509 = vmatmul.mubr.f32.gmra.mxu0 %v197
      %v510 = vpop.f32.mrf.mxu0
      %v511 = vadd.f32 %v422, %v510
      %v512 = vpop.f32.mrf.mxu0
      %513 = vmatprep.mubr.f32.mxu0 %v203
      %514 = vmatmul.mubr.f32.gmra.mxu0 %v202
      %v515 = vpop.f32.mrf.mxu0
      %v516 = vadd.f32 %v422, %v515
      %v517 = vpop.f32.mrf.mxu0
      %518 = vmatprep.mubr.f32.mxu0 %v208
      %519 = vmatmul.mubr.f32.gmra.mxu0 %v207
      %v520 = vpop.f32.mrf.mxu0
      %v521 = vadd.f32 %v422, %v520
      %v522 = vpop.f32.mrf.mxu0
      %523 = vmatprep.mubr.f32.mxu0 %v213
      %524 = vmatmul.mubr.f32.gmra.mxu0 %v212
      %v525 = vpop.f32.mrf.mxu0
      %v526 = vadd.f32 %v422, %v525
      %v527 = vpop.f32.mrf.mxu0
      %528 = vmatprep.mubr.f32.mxu0 %v218
      %529 = vmatmul.mubr.f32.gmra.mxu0 %v217
      %v530 = vpop.f32.mrf.mxu0
      %v531 = vadd.f32 %v422, %v530
      %v532 = vpop.f32.mrf.mxu0
      %533 = vmatprep.mubr.f32.mxu0 %v223
      %534 = vmatmul.mubr.f32.gmra.mxu0 %v222
      %v535 = vpop.f32.mrf.mxu0
      %v536 = vadd.f32 %v422, %v535
      %v537 = vpop.f32.mrf.mxu0
      %538 = vmatprep.mubr.f32.mxu0 %v228
      %539 = vmatmul.mubr.f32.gmra.mxu0 %v227
      %v540 = vpop.f32.mrf.mxu0
      %v541 = vadd.f32 %v422, %v540
      %v542 = vpop.f32.mrf.mxu0
      %543 = vmatprep.mubr.f32.mxu0 %v233
      %544 = vmatmul.mubr.f32.gmra.mxu0 %v232
      %v545 = vpop.f32.mrf.mxu0
      %v546 = vadd.f32 %v422, %v545
      %v547 = vpop.f32.mrf.mxu0
      %548 = vmatprep.mubr.f32.mxu0 %v238
      %549 = vmatmul.mubr.f32.gmra.mxu0 %v237
      %v550 = vpop.f32.mrf.mxu0
      %v551 = vadd.f32 %v422, %v550
      %v552 = vpop.f32.mrf.mxu0
      %553 = vmatprep.mubr.f32.mxu0 %v243
      %554 = vmatmul.mubr.f32.gmra.mxu0 %v242
      %v555 = vpop.f32.mrf.mxu0
      %v556 = vadd.f32 %v422, %v555
      %v557 = vpop.f32.mrf.mxu0
      %558 = vmatprep.mubr.f32.mxu0 %v248
      %559 = vmatmul.mubr.f32.gmra.mxu0 %v247
      %v560 = vpop.f32.mrf.mxu0
      %v561 = vadd.f32 %v422, %v560
      %v562 = vpop.f32.mrf.mxu0
      %563 = vmatprep.mubr.f32.mxu0 %v253
      %564 = vmatmul.mubr.f32.gmra.mxu0 %v252
      %v565 = vpop.f32.mrf.mxu0
      %v566 = vadd.f32 %v422, %v565
      %v567 = vpop.f32.mrf.mxu0
      %568 = vmatprep.mubr.f32.mxu0 %v258
      %569 = vmatmul.mubr.f32.gmra.mxu0 %v257
      %v570 = vpop.f32.mrf.mxu0
      %v571 = vadd.f32 %v422, %v570
      %v572 = vpop.f32.mrf.mxu0
      %573 = vmatprep.mubr.f32.mxu0 %v263
      %574 = vmatmul.mubr.f32.gmra.mxu0 %v262
      %v575 = vpop.f32.mrf.mxu0
      %v576 = vadd.f32 %v422, %v575
      %v577 = vpop.f32.mrf.mxu0
      %578 = vmatprep.mubr.f32.mxu0 %v268
      %579 = vmatmul.mubr.f32.gmra.mxu0 %v267
      %v580 = vpop.f32.mrf.mxu0
      %v581 = vadd.f32 %v422, %v580
      %v582 = vpop.f32.mrf.mxu0
      %583 = vmatprep.mubr.f32.mxu0 %v273
      %584 = vmatmul.mubr.f32.gmra.mxu0 %v272
      %v585 = vpop.f32.mrf.mxu0
      %v586 = vadd.f32 %v422, %v585
      %v587 = vpop.f32.mrf.mxu0
      %588 = vmatprep.mubr.f32.mxu0 %v278
      %589 = vmatmul.mubr.f32.gmra.mxu0 %v277
      %v590 = vpop.f32.mrf.mxu0
      %v591 = vadd.f32 %v422, %v590
      %v592 = vpop.f32.mrf.mxu0
      %593 = vmatprep.mubr.f32.mxu0 %v283
      %594 = vmatmul.mubr.f32.gmra.mxu0 %v282
      %v595 = vpop.f32.mrf.mxu0
      %v596 = vadd.f32 %v422, %v595
      %v597 = vpop.f32.mrf.mxu0
      %598 = vmatprep.mubr.f32.mxu0 %v288
      %599 = vmatmul.mubr.f32.gmra.mxu0 %v287
      %v600 = vpop.f32.mrf.mxu0
      %v601 = vadd.f32 %v422, %v600
      %v602 = vpop.f32.mrf.mxu0
      %603 = vmatprep.mubr.f32.mxu0 %v293
      %604 = vmatmul.mubr.f32.gmra.mxu0 %v292
      %v605 = vpop.f32.mrf.mxu0
      %v606 = vadd.f32 %v422, %v605
      %v607 = vpop.f32.mrf.mxu0
      %608 = vmatprep.mubr.f32.mxu0 %v298
      %609 = vmatmul.mubr.f32.gmra.mxu0 %v297
      %v610 = vpop.f32.mrf.mxu0
      %v611 = vadd.f32 %v422, %v610
      %v612 = vpop.f32.mrf.mxu0
      %613 = vmatprep.mubr.f32.mxu0 %v303
      %614 = vmatmul.mubr.f32.gmra.mxu0 %v302
      %v615 = vpop.f32.mrf.mxu0
      %v616 = vadd.f32 %v422, %v615
      %v617 = vpop.f32.mrf.mxu0
      %618 = vmatprep.mubr.f32.mxu0 %v308
      %619 = vmatmul.mubr.f32.gmra.mxu0 %v307
      %v620 = vpop.f32.mrf.mxu0
      %v621 = vadd.f32 %v422, %v620
      %v622 = vpop.f32.mrf.mxu0
      %623 = vmatprep.mubr.f32.mxu0 %v313
      %624 = vmatmul.mubr.f32.gmra.mxu0 %v312
      %v625 = vpop.f32.mrf.mxu0
      %v626 = vadd.f32 %v422, %v625
      %v627 = vpop.f32.mrf.mxu0
      %628 = vmatprep.mubr.f32.mxu0 %v318
      %629 = vmatmul.mubr.f32.gmra.mxu0 %v317
      %v630 = vpop.f32.mrf.mxu0
      %v631 = vadd.f32 %v422, %v630
      %v632 = vpop.f32.mrf.mxu0
      %633 = vmatprep.mubr.f32.mxu0 %v323
      %634 = vmatmul.mubr.f32.gmra.mxu0 %v322
      %v635 = vpop.f32.mrf.mxu0
      %v636 = vadd.f32 %v422, %v635
      %v637 = vpop.f32.mrf.mxu0
      %638 = vmatprep.mubr.f32.mxu0 %v328
      %639 = vmatmul.mubr.f32.gmra.mxu0 %v327
      %v640 = vpop.f32.mrf.mxu0
      %v641 = vadd.f32 %v422, %v640
      %v642 = vpop.f32.mrf.mxu0
      %643 = vmatprep.mubr.f32.mxu0 %v333
      %644 = vmatmul.mubr.f32.gmra.mxu0 %v332
      %v645 = vpop.f32.mrf.mxu0
      %v646 = vadd.f32 %v422, %v645
      %v647 = vpop.f32.mrf.mxu0
      %648 = vdwg.mxu0
      %649 = vmatprep.subr.mxu0 0.0
      %650 = vmatpush1.msra.mxu0 %v384
      %651 = vmatprep.subr.mxu0 0.0
      %652 = vmatpush1.msra.mxu0 %v383
      %653 = vmatprep.subr.mxu0 0.0
      %654 = vmatpush1.msra.mxu0 %v382
      %655 = vmatprep.subr.mxu0 0.0
      %656 = vmatpush1.msra.mxu0 %v381
      %657 = vmatprep.subr.mxu0 0.0
      %658 = vmatpush1.msra.mxu0 %v380
      %659 = vmatprep.subr.mxu0 0.0
      %660 = vmatpush1.msra.mxu0 %v379
      %661 = vmatprep.subr.mxu0 0.0
      %662 = vmatpush1.msra.mxu0 %v378
      %663 = vmatprep.subr.mxu0 0.0
      %664 = vmatpush1.msra.mxu0 %v377
      %665 = vmatprep.subr.mxu0 0.0
      %666 = vmatpush1.msra.mxu0 %v376
      %667 = vmatprep.subr.mxu0 0.0
      %668 = vmatpush1.msra.mxu0 %v375
      %669 = vmatprep.subr.mxu0 0.0
      %670 = vmatpush1.msra.mxu0 %v374
      %671 = vmatprep.subr.mxu0 0.0
      %672 = vmatpush1.msra.mxu0 %v373
      %673 = vmatprep.subr.mxu0 0.0
      %674 = vmatpush1.msra.mxu0 %v372
      %675 = vmatprep.subr.mxu0 0.0
      %676 = vmatpush1.msra.mxu0 %v371
      %677 = vmatprep.subr.mxu0 0.0
      %678 = vmatpush1.msra.mxu0 %v370
      %679 = vmatprep.subr.mxu0 0.0
      %680 = vmatpush1.msra.mxu0 %v369
      %681 = vmatprep.subr.mxu0 0.0
      %682 = vmatpush2.msra.mxu0 %v400
      %683 = vmatprep.subr.mxu0 0.0
      %684 = vmatpush2.msra.mxu0 %v399
      %685 = vmatprep.subr.mxu0 0.0
      %686 = vmatpush2.msra.mxu0 %v398
      %687 = vmatprep.subr.mxu0 0.0
      %688 = vmatpush2.msra.mxu0 %v397
      %689 = vmatprep.subr.mxu0 0.0
      %690 = vmatpush2.msra.mxu0 %v396
      %691 = vmatprep.subr.mxu0 0.0
      %692 = vmatpush2.msra.mxu0 %v395
      %693 = vmatprep.subr.mxu0 0.0
      %694 = vmatpush2.msra.mxu0 %v394
      %695 = vmatprep.subr.mxu0 0.0
      %696 = vmatpush2.msra.mxu0 %v393
      %697 = vmatprep.subr.mxu0 0.0
      %698 = vmatpush2.msra.mxu0 %v392
      %699 = vmatprep.subr.mxu0 0.0
      %700 = vmatpush2.msra.mxu0 %v391
      %701 = vmatprep.subr.mxu0 0.0
      %702 = vmatpush2.msra.mxu0 %v390
      %703 = vmatprep.subr.mxu0 0.0
      %704 = vmatpush2.msra.mxu0 %v389
      %705 = vmatprep.subr.mxu0 0.0
      %706 = vmatpush2.msra.mxu0 %v388
      %707 = vmatprep.subr.mxu0 0.0
      %708 = vmatpush2.msra.mxu0 %v387
      %709 = vmatprep.subr.mxu0 0.0
      %710 = vmatpush2.msra.mxu0 %v386
      %711 = vmatprep.subr.mxu0 0.0
      %712 = vmatpush2.msra.mxu0 %v385
      %713 = vmatprep.mubr.f32.mxu0 %v180
      %714 = vmatmul.mubr.f32.gmra.mxu0 %v179
      %v715 = vpop.f32.mrf.mxu0
      %v716 = vadd.f32 %v491, %v715
      %v717 = vpop.f32.mrf.mxu0
      %718 = vmatprep.mubr.f32.mxu0 %v185
      %719 = vmatmul.mubr.f32.gmra.mxu0 %v184
      %v720 = vpop.f32.mrf.mxu0
      %v721 = vadd.f32 %v496, %v720
      %v722 = vpop.f32.mrf.mxu0
      %723 = vmatprep.mubr.f32.mxu0 %v190
      %724 = vmatmul.mubr.f32.gmra.mxu0 %v189
      %v725 = vpop.f32.mrf.mxu0
      %v726 = vadd.f32 %v501, %v725
      %v727 = vpop.f32.mrf.mxu0
      %728 = vmatprep.mubr.f32.mxu0 %v195
      %729 = vmatmul.mubr.f32.gmra.mxu0 %v194
      %v730 = vpop.f32.mrf.mxu0
      %v731 = vadd.f32 %v506, %v730
      %v732 = vpop.f32.mrf.mxu0
      %733 = vmatprep.mubr.f32.mxu0 %v200
      %734 = vmatmul.mubr.f32.gmra.mxu0 %v199
      %v735 = vpop.f32.mrf.mxu0
      %v736 = vadd.f32 %v511, %v735
      %v737 = vpop.f32.mrf.mxu0
      %738 = vmatprep.mubr.f32.mxu0 %v205
      %739 = vmatmul.mubr.f32.gmra.mxu0 %v204
      %v740 = vpop.f32.mrf.mxu0
      %v741 = vadd.f32 %v516, %v740
      %v742 = vpop.f32.mrf.mxu0
      %743 = vmatprep.mubr.f32.mxu0 %v210
      %744 = vmatmul.mubr.f32.gmra.mxu0 %v209
      %v745 = vpop.f32.mrf.mxu0
      %v746 = vadd.f32 %v521, %v745
      %v747 = vpop.f32.mrf.mxu0
      %748 = vmatprep.mubr.f32.mxu0 %v215
      %749 = vmatmul.mubr.f32.gmra.mxu0 %v214
      %v750 = vpop.f32.mrf.mxu0
      %v751 = vadd.f32 %v526, %v750
      %v752 = vpop.f32.mrf.mxu0
      %753 = vmatprep.mubr.f32.mxu0 %v220
      %754 = vmatmul.mubr.f32.gmra.mxu0 %v219
      %v755 = vpop.f32.mrf.mxu0
      %v756 = vadd.f32 %v531, %v755
      %v757 = vpop.f32.mrf.mxu0
      %758 = vmatprep.mubr.f32.mxu0 %v225
      %759 = vmatmul.mubr.f32.gmra.mxu0 %v224
      %v760 = vpop.f32.mrf.mxu0
      %v761 = vadd.f32 %v536, %v760
      %v762 = vpop.f32.mrf.mxu0
      %763 = vmatprep.mubr.f32.mxu0 %v230
      %764 = vmatmul.mubr.f32.gmra.mxu0 %v229
      %v765 = vpop.f32.mrf.mxu0
      %v766 = vadd.f32 %v541, %v765
      %v767 = vpop.f32.mrf.mxu0
      %768 = vmatprep.mubr.f32.mxu0 %v235
      %769 = vmatmul.mubr.f32.gmra.mxu0 %v234
      %v770 = vpop.f32.mrf.mxu0
      %v771 = vadd.f32 %v546, %v770
      %v772 = vpop.f32.mrf.mxu0
      %773 = vmatprep.mubr.f32.mxu0 %v240
      %774 = vmatmul.mubr.f32.gmra.mxu0 %v239
      %v775 = vpop.f32.mrf.mxu0
      %v776 = vadd.f32 %v551, %v775
      %v777 = vpop.f32.mrf.mxu0
      %778 = vmatprep.mubr.f32.mxu0 %v245
      %779 = vmatmul.mubr.f32.gmra.mxu0 %v244
      %v780 = vpop.f32.mrf.mxu0
      %v781 = vadd.f32 %v556, %v780
      %v782 = vpop.f32.mrf.mxu0
      %783 = vmatprep.mubr.f32.mxu0 %v250
      %784 = vmatmul.mubr.f32.gmra.mxu0 %v249
      %v785 = vpop.f32.mrf.mxu0
      %v786 = vadd.f32 %v561, %v785
      %v787 = vpop.f32.mrf.mxu0
      %788 = vmatprep.mubr.f32.mxu0 %v255
      %789 = vmatmul.mubr.f32.gmra.mxu0 %v254
      %v790 = vpop.f32.mrf.mxu0
      %v791 = vadd.f32 %v566, %v790
      %v792 = vpop.f32.mrf.mxu0
      %793 = vmatprep.mubr.f32.mxu0 %v260
      %794 = vmatmul.mubr.f32.gmra.mxu0 %v259
      %v795 = vpop.f32.mrf.mxu0
      %v796 = vadd.f32 %v571, %v795
      %v797 = vpop.f32.mrf.mxu0
      %798 = vmatprep.mubr.f32.mxu0 %v265
      %799 = vmatmul.mubr.f32.gmra.mxu0 %v264
      %v800 = vpop.f32.mrf.mxu0
      %v801 = vadd.f32 %v576, %v800
      %v802 = vpop.f32.mrf.mxu0
      %803 = vmatprep.mubr.f32.mxu0 %v270
      %804 = vmatmul.mubr.f32.gmra.mxu0 %v269
      %v805 = vpop.f32.mrf.mxu0
      %v806 = vadd.f32 %v581, %v805
      %v807 = vpop.f32.mrf.mxu0
      %808 = vmatprep.mubr.f32.mxu0 %v275
      %809 = vmatmul.mubr.f32.gmra.mxu0 %v274
      %v810 = vpop.f32.mrf.mxu0
      %v811 = vadd.f32 %v586, %v810
      %v812 = vpop.f32.mrf.mxu0
      %813 = vmatprep.mubr.f32.mxu0 %v280
      %814 = vmatmul.mubr.f32.gmra.mxu0 %v279
      %v815 = vpop.f32.mrf.mxu0
      %v816 = vadd.f32 %v591, %v815
      %v817 = vpop.f32.mrf.mxu0
      %818 = vmatprep.mubr.f32.mxu0 %v285
      %819 = vmatmul.mubr.f32.gmra.mxu0 %v284
      %v820 = vpop.f32.mrf.mxu0
      %v821 = vadd.f32 %v596, %v820
      %v822 = vpop.f32.mrf.mxu0
      %823 = vmatprep.mubr.f32.mxu0 %v290
      %824 = vmatmul.mubr.f32.gmra.mxu0 %v289
      %v825 = vpop.f32.mrf.mxu0
      %v826 = vadd.f32 %v601, %v825
      %v827 = vpop.f32.mrf.mxu0
      %828 = vmatprep.mubr.f32.mxu0 %v295
      %829 = vmatmul.mubr.f32.gmra.mxu0 %v294
      %v830 = vpop.f32.mrf.mxu0
      %v831 = vadd.f32 %v606, %v830
      %v832 = vpop.f32.mrf.mxu0
      %833 = vmatprep.mubr.f32.mxu0 %v300
      %834 = vmatmul.mubr.f32.gmra.mxu0 %v299
      %v835 = vpop.f32.mrf.mxu0
      %v836 = vadd.f32 %v611, %v835
      %v837 = vpop.f32.mrf.mxu0
      %838 = vmatprep.mubr.f32.mxu0 %v305
      %839 = vmatmul.mubr.f32.gmra.mxu0 %v304
      %v840 = vpop.f32.mrf.mxu0
      %v841 = vadd.f32 %v616, %v840
      %v842 = vpop.f32.mrf.mxu0
      %843 = vmatprep.mubr.f32.mxu0 %v310
      %844 = vmatmul.mubr.f32.gmra.mxu0 %v309
      %v845 = vpop.f32.mrf.mxu0
      %v846 = vadd.f32 %v621, %v845
      %v847 = vpop.f32.mrf.mxu0
      %848 = vmatprep.mubr.f32.mxu0 %v315
      %849 = vmatmul.mubr.f32.gmra.mxu0 %v314
      %v850 = vpop.f32.mrf.mxu0
      %v851 = vadd.f32 %v626, %v850
      %v852 = vpop.f32.mrf.mxu0
      %853 = vmatprep.mubr.f32.mxu0 %v320
      %854 = vmatmul.mubr.f32.gmra.mxu0 %v319
      %v855 = vpop.f32.mrf.mxu0
      %v856 = vadd.f32 %v631, %v855
      %v857 = vpop.f32.mrf.mxu0
      %858 = vmatprep.mubr.f32.mxu0 %v325
      %859 = vmatmul.mubr.f32.gmra.mxu0 %v324
      %v860 = vpop.f32.mrf.mxu0
      %v861 = vadd.f32 %v636, %v860
      %v862 = vpop.f32.mrf.mxu0
      %863 = vmatprep.mubr.f32.mxu0 %v330
      %864 = vmatmul.mubr.f32.gmra.mxu0 %v329
      %v865 = vpop.f32.mrf.mxu0
      %v866 = vadd.f32 %v641, %v865
      %v867 = vpop.f32.mrf.mxu0
      %868 = vmatprep.mubr.f32.mxu0 %v335
      %869 = vmatmul.mubr.f32.gmra.mxu0 %v334
      %v870 = vpop.f32.mrf.mxu0
      %v871 = vadd.f32 %v646, %v870
      %v872 = vpop.f32.mrf.mxu0
      %873 = vdwg.mxu0
      %874 = vmatprep.subr.mxu0 0.0
      %875 = vmatpush1.msra.mxu0 %v416
      %876 = vmatprep.subr.mxu0 0.0
      %877 = vmatpush1.msra.mxu0 %v415
      %878 = vmatprep.subr.mxu0 0.0
      %879 = vmatpush1.msra.mxu0 %v414
      %880 = vmatprep.subr.mxu0 0.0
      %881 = vmatpush1.msra.mxu0 %v413
      %882 = vmatprep.subr.mxu0 0.0
      %883 = vmatpush1.msra.mxu0 %v412
      %884 = vmatprep.subr.mxu0 0.0
      %885 = vmatpush1.msra.mxu0 %v411
      %886 = vmatprep.subr.mxu0 0.0
      %887 = vmatpush1.msra.mxu0 %v410
      %888 = vmatprep.subr.mxu0 0.0
      %889 = vmatpush1.msra.mxu0 %v409
      %890 = vmatprep.subr.mxu0 0.0
      %891 = vmatpush1.msra.mxu0 %v408
      %892 = vmatprep.subr.mxu0 0.0
      %893 = vmatpush1.msra.mxu0 %v407
      %894 = vmatprep.subr.mxu0 0.0
      %895 = vmatpush1.msra.mxu0 %v406
      %896 = vmatprep.subr.mxu0 0.0
      %897 = vmatpush1.msra.mxu0 %v405
      %898 = vmatprep.subr.mxu0 0.0
      %899 = vmatpush1.msra.mxu0 %v404
      %900 = vmatprep.subr.mxu0 0.0
      %901 = vmatpush1.msra.mxu0 %v403
      %902 = vmatprep.subr.mxu0 0.0
      %903 = vmatpush1.msra.mxu0 %v402
      %904 = vmatprep.subr.mxu0 0.0
      %905 = vmatpush1.msra.mxu0 %v401
      %906 = vmatprep.subr.mxu0 0.0
      %907 = vmatpush2.msra.mxu0 0.0
      %908 = vmatprep.subr.mxu0 0.0
      %909 = vmatpush2.msra.mxu0 0.0
      %910 = vmatprep.subr.mxu0 0.0
      %911 = vmatpush2.msra.mxu0 0.0
      %912 = vmatprep.subr.mxu0 0.0
      %913 = vmatpush2.msra.mxu0 0.0
      %914 = vmatprep.subr.mxu0 0.0
      %915 = vmatpush2.msra.mxu0 0.0
      %916 = vmatprep.subr.mxu0 0.0
      %917 = vmatpush2.msra.mxu0 0.0
      %918 = vmatprep.subr.mxu0 0.0
      %919 = vmatpush2.msra.mxu0 0.0
      %920 = vmatprep.subr.mxu0 0.0
      %921 = vmatpush2.msra.mxu0 0.0
      %922 = vmatprep.subr.mxu0 0.0
      %923 = vmatpush2.msra.mxu0 0.0
      %924 = vmatprep.subr.mxu0 0.0
      %925 = vmatpush2.msra.mxu0 0.0
      %926 = vmatprep.subr.mxu0 0.0
      %927 = vmatpush2.msra.mxu0 0.0
      %928 = vmatprep.subr.mxu0 0.0
      %929 = vmatpush2.msra.mxu0 0.0
      %930 = vmatprep.subr.mxu0 0.0
      %931 = vmatpush2.msra.mxu0 0.0
      %932 = vmatprep.subr.mxu0 0.0
      %933 = vmatpush2.msra.mxu0 0.0
      %934 = vmatprep.subr.mxu0 0.0
      %935 = vmatpush2.msra.mxu0 0.0
      %936 = vmatprep.subr.mxu0 0.0
      %937 = vmatpush2.msra.mxu0 0.0
      %938 = vmatprep.mubr.f32.mxu0 0.0
      %939 = vmatmul.mubr.f32.gmra.mxu0 %v181
      %v940 = vpop.f32.mrf.mxu0
      %v941 = vadd.f32 %v716, %v940
      %v942 = vpop.f32.mrf.mxu0
      %943 = vmatprep.mubr.f32.mxu0 0.0
      %944 = vmatmul.mubr.f32.gmra.mxu0 %v186
      %v945 = vpop.f32.mrf.mxu0
      %v946 = vadd.f32 %v721, %v945
      %v947 = vpop.f32.mrf.mxu0
      %948 = vmatprep.mubr.f32.mxu0 0.0
      %949 = vmatmul.mubr.f32.gmra.mxu0 %v191
      %v950 = vpop.f32.mrf.mxu0
      %v951 = vadd.f32 %v726, %v950
      %v952 = vpop.f32.mrf.mxu0
      %953 = vmatprep.mubr.f32.mxu0 0.0
      %954 = vmatmul.mubr.f32.gmra.mxu0 %v196
      %v955 = vpop.f32.mrf.mxu0
      %v956 = vadd.f32 %v731, %v955
      %v957 = vpop.f32.mrf.mxu0
      %958 = vmatprep.mubr.f32.mxu0 0.0
      %959 = vmatmul.mubr.f32.gmra.mxu0 %v201
      %v960 = vpop.f32.mrf.mxu0
      %v961 = vadd.f32 %v736, %v960
      %v962 = vpop.f32.mrf.mxu0
      %963 = vmatprep.mubr.f32.mxu0 0.0
      %964 = vmatmul.mubr.f32.gmra.mxu0 %v206
      %v965 = vpop.f32.mrf.mxu0
      %v966 = vadd.f32 %v741, %v965
      %v967 = vpop.f32.mrf.mxu0
      %968 = vmatprep.mubr.f32.mxu0 0.0
      %969 = vmatmul.mubr.f32.gmra.mxu0 %v211
      %v970 = vpop.f32.mrf.mxu0
      %v971 = vadd.f32 %v746, %v970
      %v972 = vpop.f32.mrf.mxu0
      %973 = vmatprep.mubr.f32.mxu0 0.0
      %974 = vmatmul.mubr.f32.gmra.mxu0 %v216
      %v975 = vpop.f32.mrf.mxu0
      %v976 = vadd.f32 %v751, %v975
      %v977 = vpop.f32.mrf.mxu0
      %978 = vmatprep.mubr.f32.mxu0 0.0
      %979 = vmatmul.mubr.f32.gmra.mxu0 %v221
      %v980 = vpop.f32.mrf.mxu0
      %v981 = vadd.f32 %v756, %v980
      %v982 = vpop.f32.mrf.mxu0
      %983 = vmatprep.mubr.f32.mxu0 0.0
      %984 = vmatmul.mubr.f32.gmra.mxu0 %v226
      %v985 = vpop.f32.mrf.mxu0
      %v986 = vadd.f32 %v761, %v985
      %v987 = vpop.f32.mrf.mxu0
      %988 = vmatprep.mubr.f32.mxu0 0.0
      %989 = vmatmul.mubr.f32.gmra.mxu0 %v231
      %v990 = vpop.f32.mrf.mxu0
      %v991 = vadd.f32 %v766, %v990
      %v992 = vpop.f32.mrf.mxu0
      %993 = vmatprep.mubr.f32.mxu0 0.0
      %994 = vmatmul.mubr.f32.gmra.mxu0 %v236
      %v995 = vpop.f32.mrf.mxu0
      %v996 = vadd.f32 %v771, %v995
      %v997 = vpop.f32.mrf.mxu0
      %998 = vmatprep.mubr.f32.mxu0 0.0
      %999 = vmatmul.mubr.f32.gmra.mxu0 %v241
      %v1000 = vpop.f32.mrf.mxu0
      %v1001 = vadd.f32 %v776, %v1000
      %v1002 = vpop.f32.mrf.mxu0
      %1003 = vmatprep.mubr.f32.mxu0 0.0
      %1004 = vmatmul.mubr.f32.gmra.mxu0 %v246
      %v1005 = vpop.f32.mrf.mxu0
      %v1006 = vadd.f32 %v781, %v1005
      %v1007 = vpop.f32.mrf.mxu0
      %1008 = vmatprep.mubr.f32.mxu0 0.0
      %1009 = vmatmul.mubr.f32.gmra.mxu0 %v251
      %v1010 = vpop.f32.mrf.mxu0
      %v1011 = vadd.f32 %v786, %v1010
      %v1012 = vpop.f32.mrf.mxu0
      %1013 = vmatprep.mubr.f32.mxu0 0.0
      %1014 = vmatmul.mubr.f32.gmra.mxu0 %v256
      %v1015 = vpop.f32.mrf.mxu0
      %v1016 = vadd.f32 %v791, %v1015
      %v1017 = vpop.f32.mrf.mxu0
      %1018 = vmatprep.mubr.f32.mxu0 0.0
      %1019 = vmatmul.mubr.f32.gmra.mxu0 %v261
      %v1020 = vpop.f32.mrf.mxu0
      %v1021 = vadd.f32 %v796, %v1020
      %v1022 = vpop.f32.mrf.mxu0
      %1023 = vmatprep.mubr.f32.mxu0 0.0
      %1024 = vmatmul.mubr.f32.gmra.mxu0 %v266
      %v1025 = vpop.f32.mrf.mxu0
      %v1026 = vadd.f32 %v801, %v1025
      %v1027 = vpop.f32.mrf.mxu0
      %1028 = vmatprep.mubr.f32.mxu0 0.0
      %1029 = vmatmul.mubr.f32.gmra.mxu0 %v271
      %v1030 = vpop.f32.mrf.mxu0
      %v1031 = vadd.f32 %v806, %v1030
      %v1032 = vpop.f32.mrf.mxu0
      %1033 = vmatprep.mubr.f32.mxu0 0.0
      %1034 = vmatmul.mubr.f32.gmra.mxu0 %v276
      %v1035 = vpop.f32.mrf.mxu0
      %v1036 = vadd.f32 %v811, %v1035
      %v1037 = vpop.f32.mrf.mxu0
      %1038 = vmatprep.mubr.f32.mxu0 0.0
      %1039 = vmatmul.mubr.f32.gmra.mxu0 %v281
      %v1040 = vpop.f32.mrf.mxu0
      %v1041 = vadd.f32 %v816, %v1040
      %v1042 = vpop.f32.mrf.mxu0
      %1043 = vmatprep.mubr.f32.mxu0 0.0
      %1044 = vmatmul.mubr.f32.gmra.mxu0 %v286
      %v1045 = vpop.f32.mrf.mxu0
      %v1046 = vadd.f32 %v821, %v1045
      %v1047 = vpop.f32.mrf.mxu0
      %1048 = vmatprep.mubr.f32.mxu0 0.0
      %1049 = vmatmul.mubr.f32.gmra.mxu0 %v291
      %v1050 = vpop.f32.mrf.mxu0
      %v1051 = vadd.f32 %v826, %v1050
      %v1052 = vpop.f32.mrf.mxu0
      %1053 = vmatprep.mubr.f32.mxu0 0.0
      %1054 = vmatmul.mubr.f32.gmra.mxu0 %v296
      %v1055 = vpop.f32.mrf.mxu0
      %v1056 = vadd.f32 %v831, %v1055
      %v1057 = vpop.f32.mrf.mxu0
      %1058 = vmatprep.mubr.f32.mxu0 0.0
      %1059 = vmatmul.mubr.f32.gmra.mxu0 %v301
      %v1060 = vpop.f32.mrf.mxu0
      %v1061 = vadd.f32 %v836, %v1060
      %v1062 = vpop.f32.mrf.mxu0
      %1063 = vmatprep.mubr.f32.mxu0 0.0
      %1064 = vmatmul.mubr.f32.gmra.mxu0 %v306
      %v1065 = vpop.f32.mrf.mxu0
      %v1066 = vadd.f32 %v841, %v1065
      %v1067 = vpop.f32.mrf.mxu0
      %1068 = vmatprep.mubr.f32.mxu0 0.0
      %1069 = vmatmul.mubr.f32.gmra.mxu0 %v311
      %v1070 = vpop.f32.mrf.mxu0
      %v1071 = vadd.f32 %v846, %v1070
      %v1072 = vpop.f32.mrf.mxu0
      %1073 = vmatprep.mubr.f32.mxu0 0.0
      %1074 = vmatmul.mubr.f32.gmra.mxu0 %v316
      %v1075 = vpop.f32.mrf.mxu0
      %v1076 = vadd.f32 %v851, %v1075
      %v1077 = vpop.f32.mrf.mxu0
      %1078 = vmatprep.mubr.f32.mxu0 0.0
      %1079 = vmatmul.mubr.f32.gmra.mxu0 %v321
      %v1080 = vpop.f32.mrf.mxu0
      %v1081 = vadd.f32 %v856, %v1080
      %v1082 = vpop.f32.mrf.mxu0
      %1083 = vmatprep.mubr.f32.mxu0 0.0
      %1084 = vmatmul.mubr.f32.gmra.mxu0 %v326
      %v1085 = vpop.f32.mrf.mxu0
      %v1086 = vadd.f32 %v861, %v1085
      %v1087 = vpop.f32.mrf.mxu0
      %1088 = vmatprep.mubr.f32.mxu0 0.0
      %1089 = vmatmul.mubr.f32.gmra.mxu0 %v331
      %v1090 = vpop.f32.mrf.mxu0
      %v1091 = vadd.f32 %v866, %v1090
      %v1092 = vpop.f32.mrf.mxu0
      %1093 = vmatprep.mubr.f32.mxu0 0.0
      %1094 = vmatmul.mubr.f32.gmra.mxu0 %v336
      %v1095 = vpop.f32.mrf.mxu0
      %v1096 = vadd.f32 %v871, %v1095
      %v1097 = vpop.f32.mrf.mxu0
      %1098 = vdwg.mxu0
      %1099 = vst [vmem:[%s175] sm:$0xff] %v941
      %1100 = vst [vmem:[%s175 + $0x8] sm:$0xff] %v946
      %1101 = vst [vmem:[%s175 + $0x10] sm:$0xff] %v951
      %1102 = vst [vmem:[%s175 + $0x18] sm:$0xff] %v956
      %1103 = vst [vmem:[%s175 + $0x20] sm:$0xff] %v961
      %1104 = vst [vmem:[%s175 + $0x28] sm:$0xff] %v966
      %1105 = vst [vmem:[%s175 + $0x30] sm:$0xff] %v971
      %1106 = vst [vmem:[%s175 + $0x38] sm:$0xff] %v976
      %1107 = vst [vmem:[%s175 + $0x40] sm:$0xff] %v981
      %1108 = vst [vmem:[%s175 + $0x48] sm:$0xff] %v986
      %1109 = vst [vmem:[%s175 + $0x50] sm:$0xff] %v991
      %1110 = vst [vmem:[%s175 + $0x58] sm:$0xff] %v996
      %1111 = vst [vmem:[%s175 + $0x60] sm:$0xff] %v1001
      %1112 = vst [vmem:[%s175 + $0x68] sm:$0xff] %v1006
      %1113 = vst [vmem:[%s175 + $0x70] sm:$0xff] %v1011
      %1114 = vst [vmem:[%s175 + $0x78] sm:$0xff] %v1016
      %1115 = vst [vmem:[%s175 + $0x80] sm:$0xff] %v1021
      %1116 = vst [vmem:[%s175 + $0x88] sm:$0xff] %v1026
      %1117 = vst [vmem:[%s175 + $0x90] sm:$0xff] %v1031
      %1118 = vst [vmem:[%s175 + $0x98] sm:$0xff] %v1036
      %1119 = vst [vmem:[%s175 + $0xa0] sm:$0xff] %v1041
      %1120 = vst [vmem:[%s175 + $0xa8] sm:$0xff] %v1046
      %1121 = vst [vmem:[%s175 + $0xb0] sm:$0xff] %v1051
      %1122 = vst [vmem:[%s175 + $0xb8] sm:$0xff] %v1056
      %1123 = vst [vmem:[%s175 + $0xc0] sm:$0xff] %v1061
      %1124 = vst [vmem:[%s175 + $0xc8] sm:$0xff] %v1066
      %1125 = vst [vmem:[%s175 + $0xd0] sm:$0xff] %v1071
      %1126 = vst [vmem:[%s175 + $0xd8] sm:$0xff] %v1076
      %1127 = vst [vmem:[%s175 + $0xe0] sm:$0xff] %v1081
      %1128 = vst [vmem:[%s175 + $0xe8] sm:$0xff] %v1086
      %1129 = vst [vmem:[%s175 + $0xf0] sm:$0xff] %v1091
      %1130 = vst [vmem:[%s175 + $0xf8] sm:$0xff] %v1096
      %s1131 = smul.u32 32, %s14
      %p1132 = scmp.lt.s32.totalorder %s1131, 191
      %s1133 = scalar_select %p1132, %s1131, 191
      %s1134 = smul.addr %s1133, 8
      %s1135 = scalar_lea.vmem %s3, %s1134
      // Predicated region
      $region33: #{pilotnet_forward.7} parent=31 // pred_check
        %p1136 = pneg %p100
      $region34: #{pilotnet_forward.7} parent=31 // pred_check_branch
        %1138 = sbr.rel (%p1136) target = $region36
      $region35: #{pilotnet_forward.7} parent=31 // pred_region
        %s1139 = smul.u32 32, %s14
      $region36: #{pilotnet_forward.7} parent=31 // pred_fallthru
        _
    $region32: #{pilotnet_forward.7} parent=5 // pred_fallthru
      _
    %p1140 = scmp.le.s32.totalorder 2, %s9
    // Predicated region
    $region37: #{pilotnet_forward.7} parent=5 // pred_check
      %p1141 = pneg %p1140
    $region38: #{pilotnet_forward.7} parent=5 // pred_check_branch
      %1143 = sbr.rel (%p1141) target = $region40
    $region39: #{pilotnet_forward.7} parent=5 // pred_region
      %s1144 = ssub.s32 %s9, 2
      // Predicated region
      $region41: #{pilotnet_forward.7} parent=39 // pred_check
        %p1145 = pneg %p106
      $region42: #{pilotnet_forward.7} parent=39 // pred_check_branch
        %1147 = sbr.rel (%p1145) target = $region44
      $region43: #{pilotnet_forward.7} parent=39 // pred_region
        %s1148 = smul.u32 32, %s15
        %p1149 = scmp.lt.s32.totalorder %s1148, 191
        %s1150 = scalar_select %p1149, %s1148, 191
        %s1151 = smul.addr %s1150, 8
        %s1152 = scalar_lea.vmem %s3, %s1151
      $region44: #{pilotnet_forward.7} parent=39 // pred_fallthru
        _
    $region40: #{pilotnet_forward.7} parent=5 // pred_fallthru
      _
  $region6: #{pilotnet_forward.7} parent=0 // loop_footer
    %s13 = sadd.s32 1, %s9
  $region7: #{pilotnet_forward.7} parent=0 // loop_footer_branch
    %8 = sbr.rel target = $region3
  $region8: #{pilotnet_forward.7} parent=0 // loop_exit
    _

// kernel: pilotnet_forward.8
$region0: #{pilotnet_forward.8}
  #allocation0 [shape = 'u32[]', space=smem, size = 0x4, offset = 0x4, fixed_abs, tag = 'smem constant byte address 0x4 - core index']
  #allocation1 [shape = 'u32[144,128]{1,0:T(1,128)}', space=vmem, size = 0x12000, scoped, tag = 'internal scratch']
  %s0 = inlined_call_operand.vmem [shape: f32[224,1024], index: 0, kind: input, shape index: {}]
  %s1 = inlined_call_operand.vmem [shape: f32[1024,128], index: 1, kind: input, shape index: {}]
  %s2 = inlined_call_operand.vmem [shape: f32[1,128], index: 2, kind: input, shape index: {}]
  %s3 = inlined_call_operand.vmem [shape: f32[224,128], index: 3, kind: output, shape index: {}]
  %s4 = sld [smem:[#allocation0]]
  $region22: #{pilotnet_forward.8} parent=0
    _
  %s6 = ssub.s32 1, %s4
  %s7 = scalar_select 0, %s6, %s4
  // Predicated region
  $region2: #{pilotnet_forward.8} parent=0 // pred_check
    _
  $region3: #{pilotnet_forward.8} parent=0 // pred_check_branch
    %9 = sbr.rel (0) target = $region5
  $region4: #{pilotnet_forward.8} parent=0 // pred_region
    _
  $region5: #{pilotnet_forward.8} parent=0 // pred_fallthru
    _
  // Predicated region
  $region6: #{pilotnet_forward.8} parent=0 // pred_check
    _
  $region7: #{pilotnet_forward.8} parent=0 // pred_check_branch
    %11 = sbr.rel (0) target = $region9
  $region8: #{pilotnet_forward.8} parent=0 // pred_region
    _
  $region9: #{pilotnet_forward.8} parent=0 // pred_fallthru
    _
  // Predicated region
  $region10: #{pilotnet_forward.8} parent=0 // pred_check
    _
  $region11: #{pilotnet_forward.8} parent=0 // pred_check_branch
    %13 = sbr.rel (0) target = $region13
  $region12: #{pilotnet_forward.8} parent=0 // pred_region
    _
  $region13: #{pilotnet_forward.8} parent=0 // pred_fallthru
    _
  %v14 = vld [vmem:[%s0] sm:$0xff]
  %v15 = vld [vmem:[%s0 + $0x8] sm:$0xff]
  %v16 = vld [vmem:[%s0 + $0x10] sm:$0xff]
  %v17 = vld [vmem:[%s0 + $0x18] sm:$0xff]
  %v18 = vld [vmem:[%s0 + $0x20] sm:$0xff]
  %v19 = vld [vmem:[%s0 + $0x28] sm:$0xff]
  %v20 = vld [vmem:[%s0 + $0x30] sm:$0xff]
  %v21 = vld [vmem:[%s0 + $0x38] sm:$0xff]
  %v22 = vld [vmem:[%s0 + $0x40] sm:$0xff]
  %v23 = vld [vmem:[%s0 + $0x48] sm:$0xff]
  %v24 = vld [vmem:[%s0 + $0x50] sm:$0xff]
  %v25 = vld [vmem:[%s0 + $0x58] sm:$0xff]
  %v26 = vld [vmem:[%s0 + $0x60] sm:$0xff]
  %v27 = vld [vmem:[%s0 + $0x68] sm:$0xff]
  %v28 = vld [vmem:[%s0 + $0x70] sm:$0xff]
  %v29 = vld [vmem:[%s0 + $0x78] sm:$0xff]
  %v30 = vld [vmem:[%s0 + $0x80] sm:$0xff]
  %v31 = vld [vmem:[%s0 + $0x88] sm:$0xff]
  %v32 = vld [vmem:[%s0 + $0x90] sm:$0xff]
  %v33 = vld [vmem:[%s0 + $0x98] sm:$0xff]
  %v34 = vld [vmem:[%s0 + $0xa0] sm:$0xff]
  %v35 = vld [vmem:[%s0 + $0xa8] sm:$0xff]
  %v36 = vld [vmem:[%s0 + $0xb0] sm:$0xff]
  %v37 = vld [vmem:[%s0 + $0xb8] sm:$0xff]
  %v38 = vld [vmem:[%s0 + $0xc0] sm:$0xff]
  %v39 = vld [vmem:[%s0 + $0xc8] sm:$0xff]
  %v40 = vld [vmem:[%s0 + $0xd0] sm:$0xff]
  %v41 = vld [vmem:[%s0 + $0xd8] sm:$0xff]
  %v42 = vld [vmem:[%s0 + $0xe0] sm:$0xff]
  %v43 = vld [vmem:[%s0 + $0xe8] sm:$0xff]
  %v44 = vld [vmem:[%s0 + $0xf0] sm:$0xff]
  %v45 = vld [vmem:[%s0 + $0xf8] sm:$0xff]
  %v46 = vld [vmem:[%s0 + $0x100] sm:$0xff]
  %v47 = vld [vmem:[%s0 + $0x108] sm:$0xff]
  %v48 = vld [vmem:[%s0 + $0x110] sm:$0xff]
  %v49 = vld [vmem:[%s0 + $0x118] sm:$0xff]
  %v50 = vld [vmem:[%s0 + $0x120] sm:$0xff]
  %v51 = vld [vmem:[%s0 + $0x128] sm:$0xff]
  %v52 = vld [vmem:[%s0 + $0x130] sm:$0xff]
  %v53 = vld [vmem:[%s0 + $0x138] sm:$0xff]
  %v54 = vld [vmem:[%s0 + $0x140] sm:$0xff]
  %v55 = vld [vmem:[%s0 + $0x148] sm:$0xff]
  %v56 = vld [vmem:[%s0 + $0x150] sm:$0xff]
  %v57 = vld [vmem:[%s0 + $0x158] sm:$0xff]
  %v58 = vld [vmem:[%s0 + $0x160] sm:$0xff]
  %v59 = vld [vmem:[%s0 + $0x168] sm:$0xff]
  %v60 = vld [vmem:[%s0 + $0x170] sm:$0xff]
  %v61 = vld [vmem:[%s0 + $0x178] sm:$0xff]
  %v62 = vld [vmem:[%s0 + $0x180] sm:$0xff]
  %v63 = vld [vmem:[%s0 + $0x188] sm:$0xff]
  %v64 = vld [vmem:[%s0 + $0x190] sm:$0xff]
  %v65 = vld [vmem:[%s0 + $0x198] sm:$0xff]
  %v66 = vld [vmem:[%s0 + $0x1a0] sm:$0xff]
  %v67 = vld [vmem:[%s0 + $0x1a8] sm:$0xff]
  %v68 = vld [vmem:[%s0 + $0x1b0] sm:$0xff]
  %v69 = vld [vmem:[%s0 + $0x1b8] sm:$0xff]
  %v70 = vld [vmem:[%s0 + $0x1c0] sm:$0xff]
  %v71 = vld [vmem:[%s0 + $0x1c8] sm:$0xff]
  %v72 = vld [vmem:[%s0 + $0x1d0] sm:$0xff]
  %v73 = vld [vmem:[%s0 + $0x1d8] sm:$0xff]
  %v74 = vld [vmem:[%s0 + $0x1e0] sm:$0xff]
  %v75 = vld [vmem:[%s0 + $0x1e8] sm:$0xff]
  %v76 = vld [vmem:[%s0 + $0x1f0] sm:$0xff]
  %v77 = vld [vmem:[%s0 + $0x1f8] sm:$0xff]
  %v78 = vld [vmem:[%s0 + $0x200] sm:$0xff]
  %v79 = vld [vmem:[%s0 + $0x208] sm:$0xff]
  %v80 = vld [vmem:[%s0 + $0x210] sm:$0xff]
  %v81 = vld [vmem:[%s0 + $0x218] sm:$0xff]
  %v82 = vld [vmem:[%s0 + $0x220] sm:$0xff]
  %v83 = vld [vmem:[%s0 + $0x228] sm:$0xff]
  %v84 = vld [vmem:[%s0 + $0x230] sm:$0xff]
  %v85 = vld [vmem:[%s0 + $0x238] sm:$0xff]
  %v86 = vld [vmem:[%s0 + $0x240] sm:$0xff]
  %v87 = vld [vmem:[%s0 + $0x248] sm:$0xff]
  %v88 = vld [vmem:[%s0 + $0x250] sm:$0xff]
  %v89 = vld [vmem:[%s0 + $0x258] sm:$0xff]
  %v90 = vld [vmem:[%s0 + $0x260] sm:$0xff]
  %v91 = vld [vmem:[%s0 + $0x268] sm:$0xff]
  %v92 = vld [vmem:[%s0 + $0x270] sm:$0xff]
  %v93 = vld [vmem:[%s0 + $0x278] sm:$0xff]
  %v94 = vld [vmem:[%s0 + $0x280] sm:$0xff]
  %v95 = vld [vmem:[%s0 + $0x288] sm:$0xff]
  %v96 = vld [vmem:[%s0 + $0x290] sm:$0xff]
  %v97 = vld [vmem:[%s0 + $0x298] sm:$0xff]
  %v98 = vld [vmem:[%s0 + $0x2a0] sm:$0xff]
  %v99 = vld [vmem:[%s0 + $0x2a8] sm:$0xff]
  %v100 = vld [vmem:[%s0 + $0x2b0] sm:$0xff]
  %v101 = vld [vmem:[%s0 + $0x2b8] sm:$0xff]
  %v102 = vld [vmem:[%s0 + $0x2c0] sm:$0xff]
  %v103 = vld [vmem:[%s0 + $0x2c8] sm:$0xff]
  %v104 = vld [vmem:[%s0 + $0x2d0] sm:$0xff]
  %v105 = vld [vmem:[%s0 + $0x2d8] sm:$0xff]
  %v106 = vld [vmem:[%s0 + $0x2e0] sm:$0xff]
  %v107 = vld [vmem:[%s0 + $0x2e8] sm:$0xff]
  %v108 = vld [vmem:[%s0 + $0x2f0] sm:$0xff]
  %v109 = vld [vmem:[%s0 + $0x2f8] sm:$0xff]
  %v110 = vld [vmem:[%s0 + $0x300] sm:$0xff]
  %v111 = vld [vmem:[%s0 + $0x308] sm:$0xff]
  %v112 = vld [vmem:[%s0 + $0x310] sm:$0xff]
  %v113 = vld [vmem:[%s0 + $0x318] sm:$0xff]
  %v114 = vld [vmem:[%s0 + $0x320] sm:$0xff]
  %v115 = vld [vmem:[%s0 + $0x328] sm:$0xff]
  %v116 = vld [vmem:[%s0 + $0x330] sm:$0xff]
  %v117 = vld [vmem:[%s0 + $0x338] sm:$0xff]
  %v118 = vld [vmem:[%s0 + $0x340] sm:$0xff]
  %v119 = vld [vmem:[%s0 + $0x348] sm:$0xff]
  %v120 = vld [vmem:[%s0 + $0x350] sm:$0xff]
  %v121 = vld [vmem:[%s0 + $0x358] sm:$0xff]
  %v122 = vld [vmem:[%s0 + $0x360] sm:$0xff]
  %v123 = vld [vmem:[%s0 + $0x368] sm:$0xff]
  %v124 = vld [vmem:[%s0 + $0x370] sm:$0xff]
  %v125 = vld [vmem:[%s0 + $0x378] sm:$0xff]
  %v126 = vld [vmem:[%s0 + $0x380] sm:$0xff]
  %v127 = vld [vmem:[%s0 + $0x388] sm:$0xff]
  %v128 = vld [vmem:[%s0 + $0x390] sm:$0xff]
  %v129 = vld [vmem:[%s0 + $0x398] sm:$0xff]
  %v130 = vld [vmem:[%s0 + $0x3a0] sm:$0xff]
  %v131 = vld [vmem:[%s0 + $0x3a8] sm:$0xff]
  %v132 = vld [vmem:[%s0 + $0x3b0] sm:$0xff]
  %v133 = vld [vmem:[%s0 + $0x3b8] sm:$0xff]
  %v134 = vld [vmem:[%s0 + $0x3c0] sm:$0xff]
  %v135 = vld [vmem:[%s0 + $0x3c8] sm:$0xff]
  %v136 = vld [vmem:[%s0 + $0x3d0] sm:$0xff]
  %v137 = vld [vmem:[%s0 + $0x3d8] sm:$0xff]
  %v138 = vld [vmem:[%s0 + $0x3e0] sm:$0xff]
  %v139 = vld [vmem:[%s0 + $0x3e8] sm:$0xff]
  %v140 = vld [vmem:[%s0 + $0x3f0] sm:$0xff]
  %v141 = vld [vmem:[%s0 + $0x3f8] sm:$0xff]
  %v142 = vld [vmem:[%s0 + $0x400] sm:$0xff]
  %v143 = vld [vmem:[%s0 + $0x408] sm:$0xff]
  %v144 = vld [vmem:[%s0 + $0x410] sm:$0xff]
  %v145 = vld [vmem:[%s0 + $0x418] sm:$0xff]
  %v146 = vld [vmem:[%s0 + $0x420] sm:$0xff]
  %v147 = vld [vmem:[%s0 + $0x428] sm:$0xff]
  %v148 = vld [vmem:[%s0 + $0x430] sm:$0xff]
  %v149 = vld [vmem:[%s0 + $0x438] sm:$0xff]
  %v150 = vld [vmem:[%s0 + $0x440] sm:$0xff]
  %v151 = vld [vmem:[%s0 + $0x448] sm:$0xff]
  %v152 = vld [vmem:[%s0 + $0x450] sm:$0xff]
  %v153 = vld [vmem:[%s0 + $0x458] sm:$0xff]
  %v154 = vld [vmem:[%s0 + $0x460] sm:$0xff]
  %v155 = vld [vmem:[%s0 + $0x468] sm:$0xff]
  %v156 = vld [vmem:[%s0 + $0x470] sm:$0xff]
  %v157 = vld [vmem:[%s0 + $0x478] sm:$0xff]
  %v158 = vld [vmem:[%s0 + $0x480] sm:$0xff]
  %v159 = vld [vmem:[%s0 + $0x488] sm:$0xff]
  %v160 = vld [vmem:[%s0 + $0x490] sm:$0xff]
  %v161 = vld [vmem:[%s0 + $0x498] sm:$0xff]
  %v162 = vld [vmem:[%s0 + $0x4a0] sm:$0xff]
  %v163 = vld [vmem:[%s0 + $0x4a8] sm:$0xff]
  %v164 = vld [vmem:[%s0 + $0x4b0] sm:$0xff]
  %v165 = vld [vmem:[%s0 + $0x4b8] sm:$0xff]
  %v166 = vld [vmem:[%s0 + $0x4c0] sm:$0xff]
  %v167 = vld [vmem:[%s0 + $0x4c8] sm:$0xff]
  %v168 = vld [vmem:[%s0 + $0x4d0] sm:$0xff]
  %v169 = vld [vmem:[%s0 + $0x4d8] sm:$0xff]
  %v170 = vld [vmem:[%s0 + $0x4e0] sm:$0xff]
  %v171 = vld [vmem:[%s0 + $0x4e8] sm:$0xff]
  %v172 = vld [vmem:[%s0 + $0x4f0] sm:$0xff]
  %v173 = vld [vmem:[%s0 + $0x4f8] sm:$0xff]
  %v174 = vld [vmem:[%s0 + $0x500] sm:$0xff]
  %v175 = vld [vmem:[%s0 + $0x508] sm:$0xff]
  %v176 = vld [vmem:[%s0 + $0x510] sm:$0xff]
  %v177 = vld [vmem:[%s0 + $0x518] sm:$0xff]
  %v178 = vld [vmem:[%s0 + $0x520] sm:$0xff]
  %v179 = vld [vmem:[%s0 + $0x528] sm:$0xff]
  %v180 = vld [vmem:[%s0 + $0x530] sm:$0xff]
  %v181 = vld [vmem:[%s0 + $0x538] sm:$0xff]
  %v182 = vld [vmem:[%s0 + $0x540] sm:$0xff]
  %v183 = vld [vmem:[%s0 + $0x548] sm:$0xff]
  %v184 = vld [vmem:[%s0 + $0x550] sm:$0xff]
  %v185 = vld [vmem:[%s0 + $0x558] sm:$0xff]
  %v186 = vld [vmem:[%s0 + $0x560] sm:$0xff]
  %v187 = vld [vmem:[%s0 + $0x568] sm:$0xff]
  %v188 = vld [vmem:[%s0 + $0x570] sm:$0xff]
  %v189 = vld [vmem:[%s0 + $0x578] sm:$0xff]
  %v190 = vld [vmem:[%s0 + $0x580] sm:$0xff]
  %v191 = vld [vmem:[%s0 + $0x588] sm:$0xff]
  %v192 = vld [vmem:[%s0 + $0x590] sm:$0xff]
  %v193 = vld [vmem:[%s0 + $0x598] sm:$0xff]
  %v194 = vld [vmem:[%s0 + $0x5a0] sm:$0xff]
  %v195 = vld [vmem:[%s0 + $0x5a8] sm:$0xff]
  %v196 = vld [vmem:[%s0 + $0x5b0] sm:$0xff]
  %v197 = vld [vmem:[%s0 + $0x5b8] sm:$0xff]
  %v198 = vld [vmem:[%s0 + $0x5c0] sm:$0xff]
  %v199 = vld [vmem:[%s0 + $0x5c8] sm:$0xff]
  %v200 = vld [vmem:[%s0 + $0x5d0] sm:$0xff]
  %v201 = vld [vmem:[%s0 + $0x5d8] sm:$0xff]
  %v202 = vld [vmem:[%s0 + $0x5e0] sm:$0xff]
  %v203 = vld [vmem:[%s0 + $0x5e8] sm:$0xff]
  %v204 = vld [vmem:[%s0 + $0x5f0] sm:$0xff]
  %v205 = vld [vmem:[%s0 + $0x5f8] sm:$0xff]
  %v206 = vld [vmem:[%s0 + $0x600] sm:$0xff]
  %v207 = vld [vmem:[%s0 + $0x608] sm:$0xff]
  %v208 = vld [vmem:[%s0 + $0x610] sm:$0xff]
  %v209 = vld [vmem:[%s0 + $0x618] sm:$0xff]
  %v210 = vld [vmem:[%s0 + $0x620] sm:$0xff]
  %v211 = vld [vmem:[%s0 + $0x628] sm:$0xff]
  %v212 = vld [vmem:[%s0 + $0x630] sm:$0xff]
  %v213 = vld [vmem:[%s0 + $0x638] sm:$0xff]
  %v214 = vld [vmem:[%s0 + $0x640] sm:$0xff]
  %v215 = vld [vmem:[%s0 + $0x648] sm:$0xff]
  %v216 = vld [vmem:[%s0 + $0x650] sm:$0xff]
  %v217 = vld [vmem:[%s0 + $0x658] sm:$0xff]
  %v218 = vld [vmem:[%s0 + $0x660] sm:$0xff]
  %v219 = vld [vmem:[%s0 + $0x668] sm:$0xff]
  %v220 = vld [vmem:[%s0 + $0x670] sm:$0xff]
  %v221 = vld [vmem:[%s0 + $0x678] sm:$0xff]
  %v222 = vld [vmem:[%s0 + $0x680] sm:$0xff]
  %v223 = vld [vmem:[%s0 + $0x688] sm:$0xff]
  %v224 = vld [vmem:[%s0 + $0x690] sm:$0xff]
  %v225 = vld [vmem:[%s0 + $0x698] sm:$0xff]
  %v226 = vld [vmem:[%s0 + $0x6a0] sm:$0xff]
  %v227 = vld [vmem:[%s0 + $0x6a8] sm:$0xff]
  %v228 = vld [vmem:[%s0 + $0x6b0] sm:$0xff]
  %v229 = vld [vmem:[%s0 + $0x6b8] sm:$0xff]
  %v230 = vld [vmem:[%s0 + $0x6c0] sm:$0xff]
  %v231 = vld [vmem:[%s0 + $0x6c8] sm:$0xff]
  %v232 = vld [vmem:[%s0 + $0x6d0] sm:$0xff]
  %v233 = vld [vmem:[%s0 + $0x6d8] sm:$0xff]
  %v234 = vld [vmem:[%s0 + $0x6e0] sm:$0xff]
  %v235 = vld [vmem:[%s0 + $0x6e8] sm:$0xff]
  %v236 = vld [vmem:[%s0 + $0x6f0] sm:$0xff]
  %v237 = vld [vmem:[%s0 + $0x6f8] sm:$0xff]
  %v238 = vld [vmem:[%s1] sm:$0xff]
  %v239 = vld [vmem:[%s1 + $0x8] sm:$0xff]
  %v240 = vld [vmem:[%s1 + $0x10] sm:$0xff]
  %v241 = vld [vmem:[%s1 + $0x18] sm:$0xff]
  %v242 = vld [vmem:[%s1 + $0x20] sm:$0xff]
  %v243 = vld [vmem:[%s1 + $0x28] sm:$0xff]
  %v244 = vld [vmem:[%s1 + $0x30] sm:$0xff]
  %v245 = vld [vmem:[%s1 + $0x38] sm:$0xff]
  %v246 = vld [vmem:[%s1 + $0x40] sm:$0xff]
  %v247 = vld [vmem:[%s1 + $0x48] sm:$0xff]
  %v248 = vld [vmem:[%s1 + $0x50] sm:$0xff]
  %v249 = vld [vmem:[%s1 + $0x58] sm:$0xff]
  %v250 = vld [vmem:[%s1 + $0x60] sm:$0xff]
  %v251 = vld [vmem:[%s1 + $0x68] sm:$0xff]
  %v252 = vld [vmem:[%s1 + $0x70] sm:$0xff]
  %v253 = vld [vmem:[%s1 + $0x78] sm:$0xff]
  %v254 = vld [vmem:[%s1 + $0x80] sm:$0xff]
  %v255 = vld [vmem:[%s1 + $0x88] sm:$0xff]
  %v256 = vld [vmem:[%s1 + $0x90] sm:$0xff]
  %v257 = vld [vmem:[%s1 + $0x98] sm:$0xff]
  %v258 = vld [vmem:[%s1 + $0xa0] sm:$0xff]
  %v259 = vld [vmem:[%s1 + $0xa8] sm:$0xff]
  %v260 = vld [vmem:[%s1 + $0xb0] sm:$0xff]
  %v261 = vld [vmem:[%s1 + $0xb8] sm:$0xff]
  %v262 = vld [vmem:[%s1 + $0xc0] sm:$0xff]
  %v263 = vld [vmem:[%s1 + $0xc8] sm:$0xff]
  %v264 = vld [vmem:[%s1 + $0xd0] sm:$0xff]
  %v265 = vld [vmem:[%s1 + $0xd8] sm:$0xff]
  %v266 = vld [vmem:[%s1 + $0xe0] sm:$0xff]
  %v267 = vld [vmem:[%s1 + $0xe8] sm:$0xff]
  %v268 = vld [vmem:[%s1 + $0xf0] sm:$0xff]
  %v269 = vld [vmem:[%s1 + $0xf8] sm:$0xff]
  %v270 = vld [vmem:[%s1 + $0x100] sm:$0xff]
  %v271 = vld [vmem:[%s1 + $0x108] sm:$0xff]
  %v272 = vld [vmem:[%s1 + $0x110] sm:$0xff]
  %v273 = vld [vmem:[%s1 + $0x118] sm:$0xff]
  %v274 = vld [vmem:[%s1 + $0x120] sm:$0xff]
  %v275 = vld [vmem:[%s1 + $0x128] sm:$0xff]
  %v276 = vld [vmem:[%s1 + $0x130] sm:$0xff]
  %v277 = vld [vmem:[%s1 + $0x138] sm:$0xff]
  %v278 = vld [vmem:[%s1 + $0x140] sm:$0xff]
  %v279 = vld [vmem:[%s1 + $0x148] sm:$0xff]
  %v280 = vld [vmem:[%s1 + $0x150] sm:$0xff]
  %v281 = vld [vmem:[%s1 + $0x158] sm:$0xff]
  %v282 = vld [vmem:[%s1 + $0x160] sm:$0xff]
  %v283 = vld [vmem:[%s1 + $0x168] sm:$0xff]
  %v284 = vld [vmem:[%s1 + $0x170] sm:$0xff]
  %v285 = vld [vmem:[%s1 + $0x178] sm:$0xff]
  %v286 = vld [vmem:[%s1 + $0x180] sm:$0xff]
  %v287 = vld [vmem:[%s1 + $0x188] sm:$0xff]
  %v288 = vld [vmem:[%s1 + $0x190] sm:$0xff]
  %v289 = vld [vmem:[%s1 + $0x198] sm:$0xff]
  %v290 = vld [vmem:[%s1 + $0x1a0] sm:$0xff]
  %v291 = vld [vmem:[%s1 + $0x1a8] sm:$0xff]
  %v292 = vld [vmem:[%s1 + $0x1b0] sm:$0xff]
  %v293 = vld [vmem:[%s1 + $0x1b8] sm:$0xff]
  %v294 = vld [vmem:[%s1 + $0x1c0] sm:$0xff]
  %v295 = vld [vmem:[%s1 + $0x1c8] sm:$0xff]
  %v296 = vld [vmem:[%s1 + $0x1d0] sm:$0xff]
  %v297 = vld [vmem:[%s1 + $0x1d8] sm:$0xff]
  %v298 = vld [vmem:[%s1 + $0x1e0] sm:$0xff]
  %v299 = vld [vmem:[%s1 + $0x1e8] sm:$0xff]
  %v300 = vld [vmem:[%s1 + $0x1f0] sm:$0xff]
  %v301 = vld [vmem:[%s1 + $0x1f8] sm:$0xff]
  %v302 = vld [vmem:[%s1 + $0x200] sm:$0xff]
  %v303 = vld [vmem:[%s1 + $0x208] sm:$0xff]
  %v304 = vld [vmem:[%s1 + $0x210] sm:$0xff]
  %v305 = vld [vmem:[%s1 + $0x218] sm:$0xff]
  %v306 = vld [vmem:[%s1 + $0x220] sm:$0xff]
  %v307 = vld [vmem:[%s1 + $0x228] sm:$0xff]
  %v308 = vld [vmem:[%s1 + $0x230] sm:$0xff]
  %v309 = vld [vmem:[%s1 + $0x238] sm:$0xff]
  %v310 = vld [vmem:[%s1 + $0x240] sm:$0xff]
  %v311 = vld [vmem:[%s1 + $0x248] sm:$0xff]
  %v312 = vld [vmem:[%s1 + $0x250] sm:$0xff]
  %v313 = vld [vmem:[%s1 + $0x258] sm:$0xff]
  %v314 = vld [vmem:[%s1 + $0x260] sm:$0xff]
  %v315 = vld [vmem:[%s1 + $0x268] sm:$0xff]
  %v316 = vld [vmem:[%s1 + $0x270] sm:$0xff]
  %v317 = vld [vmem:[%s1 + $0x278] sm:$0xff]
  %v318 = vld [vmem:[%s1 + $0x280] sm:$0xff]
  %v319 = vld [vmem:[%s1 + $0x288] sm:$0xff]
  %v320 = vld [vmem:[%s1 + $0x290] sm:$0xff]
  %v321 = vld [vmem:[%s1 + $0x298] sm:$0xff]
  %v322 = vld [vmem:[%s1 + $0x2a0] sm:$0xff]
  %v323 = vld [vmem:[%s1 + $0x2a8] sm:$0xff]
  %v324 = vld [vmem:[%s1 + $0x2b0] sm:$0xff]
  %v325 = vld [vmem:[%s1 + $0x2b8] sm:$0xff]
  %v326 = vld [vmem:[%s1 + $0x2c0] sm:$0xff]
  %v327 = vld [vmem:[%s1 + $0x2c8] sm:$0xff]
  %v328 = vld [vmem:[%s1 + $0x2d0] sm:$0xff]
  %v329 = vld [vmem:[%s1 + $0x2d8] sm:$0xff]
  %v330 = vld [vmem:[%s1 + $0x2e0] sm:$0xff]
  %v331 = vld [vmem:[%s1 + $0x2e8] sm:$0xff]
  %v332 = vld [vmem:[%s1 + $0x2f0] sm:$0xff]
  %v333 = vld [vmem:[%s1 + $0x2f8] sm:$0xff]
  %v334 = vld [vmem:[%s1 + $0x300] sm:$0xff]
  %v335 = vld [vmem:[%s1 + $0x308] sm:$0xff]
  %v336 = vld [vmem:[%s1 + $0x310] sm:$0xff]
  %v337 = vld [vmem:[%s1 + $0x318] sm:$0xff]
  %v338 = vld [vmem:[%s1 + $0x320] sm:$0xff]
  %v339 = vld [vmem:[%s1 + $0x328] sm:$0xff]
  %v340 = vld [vmem:[%s1 + $0x330] sm:$0xff]
  %v341 = vld [vmem:[%s1 + $0x338] sm:$0xff]
  %v342 = vld [vmem:[%s1 + $0x340] sm:$0xff]
  %v343 = vld [vmem:[%s1 + $0x348] sm:$0xff]
  %v344 = vld [vmem:[%s1 + $0x350] sm:$0xff]
  %v345 = vld [vmem:[%s1 + $0x358] sm:$0xff]
  %v346 = vld [vmem:[%s1 + $0x360] sm:$0xff]
  %v347 = vld [vmem:[%s1 + $0x368] sm:$0xff]
  %v348 = vld [vmem:[%s1 + $0x370] sm:$0xff]
  %v349 = vld [vmem:[%s1 + $0x378] sm:$0xff]
  %v350 = vld [vmem:[%s1 + $0x380] sm:$0xff]
  %v351 = vld [vmem:[%s1 + $0x388] sm:$0xff]
  %v352 = vld [vmem:[%s1 + $0x390] sm:$0xff]
  %v353 = vld [vmem:[%s1 + $0x398] sm:$0xff]
  %v354 = vld [vmem:[%s1 + $0x3a0] sm:$0xff]
  %v355 = vld [vmem:[%s1 + $0x3a8] sm:$0xff]
  %v356 = vld [vmem:[%s1 + $0x3b0] sm:$0xff]
  %v357 = vld [vmem:[%s1 + $0x3b8] sm:$0xff]
  %v358 = vld [vmem:[%s1 + $0x3c0] sm:$0xff]
  %v359 = vld [vmem:[%s1 + $0x3c8] sm:$0xff]
  %v360 = vld [vmem:[%s1 + $0x3d0] sm:$0xff]
  %v361 = vld [vmem:[%s1 + $0x3d8] sm:$0xff]
  %v362 = vld [vmem:[%s1 + $0x3e0] sm:$0xff]
  %v363 = vld [vmem:[%s1 + $0x3e8] sm:$0xff]
  %v364 = vld [vmem:[%s1 + $0x3f0] sm:$0xff]
  %v365 = vld [vmem:[%s1 + $0x3f8] sm:$0xff]
  %v366 = vld [vmem:[%s2] sm:$0x1]
  %v368 = vlaneseq
  %v369 = vshrl.u32 %v368, 7
  %v370 = vsub.s32 0, %v369
  %v371 = vrot.slane %v366, %v370
  %373 = vmatprep.subr.mxu0 0.0
  %374 = vmatpush1.msra.mxu0 %v253
  %375 = vmatprep.subr.mxu0 0.0
  %376 = vmatpush1.msra.mxu0 %v252
  %377 = vmatprep.subr.mxu0 0.0
  %378 = vmatpush1.msra.mxu0 %v251
  %379 = vmatprep.subr.mxu0 0.0
  %380 = vmatpush1.msra.mxu0 %v250
  %381 = vmatprep.subr.mxu0 0.0
  %382 = vmatpush1.msra.mxu0 %v249
  %383 = vmatprep.subr.mxu0 0.0
  %384 = vmatpush1.msra.mxu0 %v248
  %385 = vmatprep.subr.mxu0 0.0
  %386 = vmatpush1.msra.mxu0 %v247
  %387 = vmatprep.subr.mxu0 0.0
  %388 = vmatpush1.msra.mxu0 %v246
  %389 = vmatprep.subr.mxu0 0.0
  %390 = vmatpush1.msra.mxu0 %v245
  %391 = vmatprep.subr.mxu0 0.0
  %392 = vmatpush1.msra.mxu0 %v244
  %393 = vmatprep.subr.mxu0 0.0
  %394 = vmatpush1.msra.mxu0 %v243
  %395 = vmatprep.subr.mxu0 0.0
  %396 = vmatpush1.msra.mxu0 %v242
  %397 = vmatprep.subr.mxu0 0.0
  %398 = vmatpush1.msra.mxu0 %v241
  %399 = vmatprep.subr.mxu0 0.0
  %400 = vmatpush1.msra.mxu0 %v240
  %401 = vmatprep.subr.mxu0 0.0
  %402 = vmatpush1.msra.mxu0 %v239
  %403 = vmatprep.subr.mxu0 0.0
  %404 = vmatpush1.msra.mxu0 %v238
  %405 = vmatprep.subr.mxu0 0.0
  %406 = vmatpush2.msra.mxu0 %v269
  %407 = vmatprep.subr.mxu0 0.0
  %408 = vmatpush2.msra.mxu0 %v268
  %409 = vmatprep.subr.mxu0 0.0
  %410 = vmatpush2.msra.mxu0 %v267
  %411 = vmatprep.subr.mxu0 0.0
  %412 = vmatpush2.msra.mxu0 %v266
  %413 = vmatprep.subr.mxu0 0.0
  %414 = vmatpush2.msra.mxu0 %v265
  %415 = vmatprep.subr.mxu0 0.0
  %416 = vmatpush2.msra.mxu0 %v264
  %417 = vmatprep.subr.mxu0 0.0
  %418 = vmatpush2.msra.mxu0 %v263
  %419 = vmatprep.subr.mxu0 0.0
  %420 = vmatpush2.msra.mxu0 %v262
  %421 = vmatprep.subr.mxu0 0.0
  %422 = vmatpush2.msra.mxu0 %v261
  %423 = vmatprep.subr.mxu0 0.0
  %424 = vmatpush2.msra.mxu0 %v260
  %425 = vmatprep.subr.mxu0 0.0
  %426 = vmatpush2.msra.mxu0 %v259
  %427 = vmatprep.subr.mxu0 0.0
  %428 = vmatpush2.msra.mxu0 %v258
  %429 = vmatprep.subr.mxu0 0.0
  %430 = vmatpush2.msra.mxu0 %v257
  %431 = vmatprep.subr.mxu0 0.0
  %432 = vmatpush2.msra.mxu0 %v256
  %433 = vmatprep.subr.mxu0 0.0
  %434 = vmatpush2.msra.mxu0 %v255
  %435 = vmatprep.subr.mxu0 0.0
  %436 = vmatpush2.msra.mxu0 %v254
  %437 = vmatprep.mubr.f32.mxu0 %v15
  %438 = vmatmul.mubr.f32.gmra.mxu0 %v14
  %v439 = vpop.f32.mrf.mxu0
  %v440 = vadd.f32 %v371, %v439
  %v441 = vpop.f32.mrf.mxu0
  %442 = vmatprep.mubr.f32.mxu0 %v23
  %443 = vmatmul.mubr.f32.gmra.mxu0 %v22
  %v444 = vpop.f32.mrf.mxu0
  %v445 = vadd.f32 %v371, %v444
  %v446 = vpop.f32.mrf.mxu0
  %447 = vmatprep.mubr.f32.mxu0 %v31
  %448 = vmatmul.mubr.f32.gmra.mxu0 %v30
  %v449 = vpop.f32.mrf.mxu0
  %v450 = vadd.f32 %v371, %v449
  %v451 = vpop.f32.mrf.mxu0
  %452 = vmatprep.mubr.f32.mxu0 %v39
  %453 = vmatmul.mubr.f32.gmra.mxu0 %v38
  %v454 = vpop.f32.mrf.mxu0
  %v455 = vadd.f32 %v371, %v454
  %v456 = vpop.f32.mrf.mxu0
  %457 = vmatprep.mubr.f32.mxu0 %v47
  %458 = vmatmul.mubr.f32.gmra.mxu0 %v46
  %v459 = vpop.f32.mrf.mxu0
  %v460 = vadd.f32 %v371, %v459
  %v461 = vpop.f32.mrf.mxu0
  %462 = vmatprep.mubr.f32.mxu0 %v55
  %463 = vmatmul.mubr.f32.gmra.mxu0 %v54
  %v464 = vpop.f32.mrf.mxu0
  %v465 = vadd.f32 %v371, %v464
  %v466 = vpop.f32.mrf.mxu0
  %467 = vmatprep.mubr.f32.mxu0 %v63
  %468 = vmatmul.mubr.f32.gmra.mxu0 %v62
  %v469 = vpop.f32.mrf.mxu0
  %v470 = vadd.f32 %v371, %v469
  %v471 = vpop.f32.mrf.mxu0
  %472 = vmatprep.mubr.f32.mxu0 %v71
  %473 = vmatmul.mubr.f32.gmra.mxu0 %v70
  %v474 = vpop.f32.mrf.mxu0
  %v475 = vadd.f32 %v371, %v474
  %v476 = vpop.f32.mrf.mxu0
  %477 = vmatprep.mubr.f32.mxu0 %v79
  %478 = vmatmul.mubr.f32.gmra.mxu0 %v78
  %v479 = vpop.f32.mrf.mxu0
  %v480 = vadd.f32 %v371, %v479
  %v481 = vpop.f32.mrf.mxu0
  %482 = vmatprep.mubr.f32.mxu0 %v87
  %483 = vmatmul.mubr.f32.gmra.mxu0 %v86
  %v484 = vpop.f32.mrf.mxu0
  %v485 = vadd.f32 %v371, %v484
  %v486 = vpop.f32.mrf.mxu0
  %487 = vmatprep.mubr.f32.mxu0 %v95
  %488 = vmatmul.mubr.f32.gmra.mxu0 %v94
  %v489 = vpop.f32.mrf.mxu0
  %v490 = vadd.f32 %v371, %v489
  %v491 = vpop.f32.mrf.mxu0
  %492 = vmatprep.mubr.f32.mxu0 %v103
  %493 = vmatmul.mubr.f32.gmra.mxu0 %v102
  %v494 = vpop.f32.mrf.mxu0
  %v495 = vadd.f32 %v371, %v494
  %v496 = vpop.f32.mrf.mxu0
  %497 = vmatprep.mubr.f32.mxu0 %v111
  %498 = vmatmul.mubr.f32.gmra.mxu0 %v110
  %v499 = vpop.f32.mrf.mxu0
  %v500 = vadd.f32 %v371, %v499
  %v501 = vpop.f32.mrf.mxu0
  %502 = vmatprep.mubr.f32.mxu0 %v119
  %503 = vmatmul.mubr.f32.gmra.mxu0 %v118
  %v504 = vpop.f32.mrf.mxu0
  %v505 = vadd.f32 %v371, %v504
  %v506 = vpop.f32.mrf.mxu0
  %507 = vmatprep.mubr.f32.mxu0 %v127
  %508 = vmatmul.mubr.f32.gmra.mxu0 %v126
  %v509 = vpop.f32.mrf.mxu0
  %v510 = vadd.f32 %v371, %v509
  %v511 = vpop.f32.mrf.mxu0
  %512 = vmatprep.mubr.f32.mxu0 %v135
  %513 = vmatmul.mubr.f32.gmra.mxu0 %v134
  %v514 = vpop.f32.mrf.mxu0
  %v515 = vadd.f32 %v371, %v514
  %v516 = vpop.f32.mrf.mxu0
  %517 = vmatprep.mubr.f32.mxu0 %v143
  %518 = vmatmul.mubr.f32.gmra.mxu0 %v142
  %v519 = vpop.f32.mrf.mxu0
  %v520 = vadd.f32 %v371, %v519
  %v521 = vpop.f32.mrf.mxu0
  %522 = vmatprep.mubr.f32.mxu0 %v151
  %523 = vmatmul.mubr.f32.gmra.mxu0 %v150
  %v524 = vpop.f32.mrf.mxu0
  %v525 = vadd.f32 %v371, %v524
  %v526 = vpop.f32.mrf.mxu0
  %527 = vmatprep.mubr.f32.mxu0 %v159
  %528 = vmatmul.mubr.f32.gmra.mxu0 %v158
  %v529 = vpop.f32.mrf.mxu0
  %v530 = vadd.f32 %v371, %v529
  %v531 = vpop.f32.mrf.mxu0
  %532 = vmatprep.mubr.f32.mxu0 %v167
  %533 = vmatmul.mubr.f32.gmra.mxu0 %v166
  %v534 = vpop.f32.mrf.mxu0
  %v535 = vadd.f32 %v371, %v534
  %v536 = vpop.f32.mrf.mxu0
  %537 = vmatprep.mubr.f32.mxu0 %v175
  %538 = vmatmul.mubr.f32.gmra.mxu0 %v174
  %v539 = vpop.f32.mrf.mxu0
  %v540 = vadd.f32 %v371, %v539
  %v541 = vpop.f32.mrf.mxu0
  %542 = vmatprep.mubr.f32.mxu0 %v183
  %543 = vmatmul.mubr.f32.gmra.mxu0 %v182
  %v544 = vpop.f32.mrf.mxu0
  %v545 = vadd.f32 %v371, %v544
  %v546 = vpop.f32.mrf.mxu0
  %547 = vmatprep.mubr.f32.mxu0 %v191
  %548 = vmatmul.mubr.f32.gmra.mxu0 %v190
  %v549 = vpop.f32.mrf.mxu0
  %v550 = vadd.f32 %v371, %v549
  %v551 = vpop.f32.mrf.mxu0
  %552 = vmatprep.mubr.f32.mxu0 %v199
  %553 = vmatmul.mubr.f32.gmra.mxu0 %v198
  %v554 = vpop.f32.mrf.mxu0
  %v555 = vadd.f32 %v371, %v554
  %v556 = vpop.f32.mrf.mxu0
  %557 = vmatprep.mubr.f32.mxu0 %v207
  %558 = vmatmul.mubr.f32.gmra.mxu0 %v206
  %v559 = vpop.f32.mrf.mxu0
  %v560 = vadd.f32 %v371, %v559
  %v561 = vpop.f32.mrf.mxu0
  %562 = vmatprep.mubr.f32.mxu0 %v215
  %563 = vmatmul.mubr.f32.gmra.mxu0 %v214
  %v564 = vpop.f32.mrf.mxu0
  %v565 = vadd.f32 %v371, %v564
  %v566 = vpop.f32.mrf.mxu0
  %567 = vmatprep.mubr.f32.mxu0 %v223
  %568 = vmatmul.mubr.f32.gmra.mxu0 %v222
  %v569 = vpop.f32.mrf.mxu0
  %v570 = vadd.f32 %v371, %v569
  %v571 = vpop.f32.mrf.mxu0
  %572 = vmatprep.mubr.f32.mxu0 %v231
  %573 = vmatmul.mubr.f32.gmra.mxu0 %v230
  %v574 = vpop.f32.mrf.mxu0
  %v575 = vadd.f32 %v371, %v574
  %v576 = vpop.f32.mrf.mxu0
  %577 = vdwg.mxu0
  %578 = vmatprep.subr.mxu0 0.0
  %579 = vmatpush1.msra.mxu0 %v285
  %580 = vmatprep.subr.mxu0 0.0
  %581 = vmatpush1.msra.mxu0 %v284
  %582 = vmatprep.subr.mxu0 0.0
  %583 = vmatpush1.msra.mxu0 %v283
  %584 = vmatprep.subr.mxu0 0.0
  %585 = vmatpush1.msra.mxu0 %v282
  %586 = vmatprep.subr.mxu0 0.0
  %587 = vmatpush1.msra.mxu0 %v281
  %588 = vmatprep.subr.mxu0 0.0
  %589 = vmatpush1.msra.mxu0 %v280
  %590 = vmatprep.subr.mxu0 0.0
  %591 = vmatpush1.msra.mxu0 %v279
  %592 = vmatprep.subr.mxu0 0.0
  %593 = vmatpush1.msra.mxu0 %v278
  %594 = vmatprep.subr.mxu0 0.0
  %595 = vmatpush1.msra.mxu0 %v277
  %596 = vmatprep.subr.mxu0 0.0
  %597 = vmatpush1.msra.mxu0 %v276
  %598 = vmatprep.subr.mxu0 0.0
  %599 = vmatpush1.msra.mxu0 %v275
  %600 = vmatprep.subr.mxu0 0.0
  %601 = vmatpush1.msra.mxu0 %v274
  %602 = vmatprep.subr.mxu0 0.0
  %603 = vmatpush1.msra.mxu0 %v273
  %604 = vmatprep.subr.mxu0 0.0
  %605 = vmatpush1.msra.mxu0 %v272
  %606 = vmatprep.subr.mxu0 0.0
  %607 = vmatpush1.msra.mxu0 %v271
  %608 = vmatprep.subr.mxu0 0.0
  %609 = vmatpush1.msra.mxu0 %v270
  %610 = vmatprep.subr.mxu0 0.0
  %611 = vmatpush2.msra.mxu0 %v301
  %612 = vmatprep.subr.mxu0 0.0
  %613 = vmatpush2.msra.mxu0 %v300
  %614 = vmatprep.subr.mxu0 0.0
  %615 = vmatpush2.msra.mxu0 %v299
  %616 = vmatprep.subr.mxu0 0.0
  %617 = vmatpush2.msra.mxu0 %v298
  %618 = vmatprep.subr.mxu0 0.0
  %619 = vmatpush2.msra.mxu0 %v297
  %620 = vmatprep.subr.mxu0 0.0
  %621 = vmatpush2.msra.mxu0 %v296
  %622 = vmatprep.subr.mxu0 0.0
  %623 = vmatpush2.msra.mxu0 %v295
  %624 = vmatprep.subr.mxu0 0.0
  %625 = vmatpush2.msra.mxu0 %v294
  %626 = vmatprep.subr.mxu0 0.0
  %627 = vmatpush2.msra.mxu0 %v293
  %628 = vmatprep.subr.mxu0 0.0
  %629 = vmatpush2.msra.mxu0 %v292
  %630 = vmatprep.subr.mxu0 0.0
  %631 = vmatpush2.msra.mxu0 %v291
  %632 = vmatprep.subr.mxu0 0.0
  %633 = vmatpush2.msra.mxu0 %v290
  %634 = vmatprep.subr.mxu0 0.0
  %635 = vmatpush2.msra.mxu0 %v289
  %636 = vmatprep.subr.mxu0 0.0
  %637 = vmatpush2.msra.mxu0 %v288
  %638 = vmatprep.subr.mxu0 0.0
  %639 = vmatpush2.msra.mxu0 %v287
  %640 = vmatprep.subr.mxu0 0.0
  %641 = vmatpush2.msra.mxu0 %v286
  %642 = vmatprep.mubr.f32.mxu0 %v17
  %643 = vmatmul.mubr.f32.gmra.mxu0 %v16
  %v644 = vpop.f32.mrf.mxu0
  %v645 = vadd.f32 %v440, %v644
  %v646 = vpop.f32.mrf.mxu0
  %647 = vmatprep.mubr.f32.mxu0 %v25
  %648 = vmatmul.mubr.f32.gmra.mxu0 %v24
  %v649 = vpop.f32.mrf.mxu0
  %v650 = vadd.f32 %v445, %v649
  %v651 = vpop.f32.mrf.mxu0
  %652 = vmatprep.mubr.f32.mxu0 %v33
  %653 = vmatmul.mubr.f32.gmra.mxu0 %v32
  %v654 = vpop.f32.mrf.mxu0
  %v655 = vadd.f32 %v450, %v654
  %v656 = vpop.f32.mrf.mxu0
  %657 = vmatprep.mubr.f32.mxu0 %v41
  %658 = vmatmul.mubr.f32.gmra.mxu0 %v40
  %v659 = vpop.f32.mrf.mxu0
  %v660 = vadd.f32 %v455, %v659
  %v661 = vpop.f32.mrf.mxu0
  %662 = vmatprep.mubr.f32.mxu0 %v49
  %663 = vmatmul.mubr.f32.gmra.mxu0 %v48
  %v664 = vpop.f32.mrf.mxu0
  %v665 = vadd.f32 %v460, %v664
  %v666 = vpop.f32.mrf.mxu0
  %667 = vmatprep.mubr.f32.mxu0 %v57
  %668 = vmatmul.mubr.f32.gmra.mxu0 %v56
  %v669 = vpop.f32.mrf.mxu0
  %v670 = vadd.f32 %v465, %v669
  %v671 = vpop.f32.mrf.mxu0
  %672 = vmatprep.mubr.f32.mxu0 %v65
  %673 = vmatmul.mubr.f32.gmra.mxu0 %v64
  %v674 = vpop.f32.mrf.mxu0
  %v675 = vadd.f32 %v470, %v674
  %v676 = vpop.f32.mrf.mxu0
  %677 = vmatprep.mubr.f32.mxu0 %v73
  %678 = vmatmul.mubr.f32.gmra.mxu0 %v72
  %v679 = vpop.f32.mrf.mxu0
  %v680 = vadd.f32 %v475, %v679
  %v681 = vpop.f32.mrf.mxu0
  %682 = vmatprep.mubr.f32.mxu0 %v81
  %683 = vmatmul.mubr.f32.gmra.mxu0 %v80
  %v684 = vpop.f32.mrf.mxu0
  %v685 = vadd.f32 %v480, %v684
  %v686 = vpop.f32.mrf.mxu0
  %687 = vmatprep.mubr.f32.mxu0 %v89
  %688 = vmatmul.mubr.f32.gmra.mxu0 %v88
  %v689 = vpop.f32.mrf.mxu0
  %v690 = vadd.f32 %v485, %v689
  %v691 = vpop.f32.mrf.mxu0
  %692 = vmatprep.mubr.f32.mxu0 %v97
  %693 = vmatmul.mubr.f32.gmra.mxu0 %v96
  %v694 = vpop.f32.mrf.mxu0
  %v695 = vadd.f32 %v490, %v694
  %v696 = vpop.f32.mrf.mxu0
  %697 = vmatprep.mubr.f32.mxu0 %v105
  %698 = vmatmul.mubr.f32.gmra.mxu0 %v104
  %v699 = vpop.f32.mrf.mxu0
  %v700 = vadd.f32 %v495, %v699
  %v701 = vpop.f32.mrf.mxu0
  %702 = vmatprep.mubr.f32.mxu0 %v113
  %703 = vmatmul.mubr.f32.gmra.mxu0 %v112
  %v704 = vpop.f32.mrf.mxu0
  %v705 = vadd.f32 %v500, %v704
  %v706 = vpop.f32.mrf.mxu0
  %707 = vmatprep.mubr.f32.mxu0 %v121
  %708 = vmatmul.mubr.f32.gmra.mxu0 %v120
  %v709 = vpop.f32.mrf.mxu0
  %v710 = vadd.f32 %v505, %v709
  %v711 = vpop.f32.mrf.mxu0
  %712 = vmatprep.mubr.f32.mxu0 %v129
  %713 = vmatmul.mubr.f32.gmra.mxu0 %v128
  %v714 = vpop.f32.mrf.mxu0
  %v715 = vadd.f32 %v510, %v714
  %v716 = vpop.f32.mrf.mxu0
  %717 = vmatprep.mubr.f32.mxu0 %v137
  %718 = vmatmul.mubr.f32.gmra.mxu0 %v136
  %v719 = vpop.f32.mrf.mxu0
  %v720 = vadd.f32 %v515, %v719
  %v721 = vpop.f32.mrf.mxu0
  %722 = vmatprep.mubr.f32.mxu0 %v145
  %723 = vmatmul.mubr.f32.gmra.mxu0 %v144
  %v724 = vpop.f32.mrf.mxu0
  %v725 = vadd.f32 %v520, %v724
  %v726 = vpop.f32.mrf.mxu0
  %727 = vmatprep.mubr.f32.mxu0 %v153
  %728 = vmatmul.mubr.f32.gmra.mxu0 %v152
  %v729 = vpop.f32.mrf.mxu0
  %v730 = vadd.f32 %v525, %v729
  %v731 = vpop.f32.mrf.mxu0
  %732 = vmatprep.mubr.f32.mxu0 %v161
  %733 = vmatmul.mubr.f32.gmra.mxu0 %v160
  %v734 = vpop.f32.mrf.mxu0
  %v735 = vadd.f32 %v530, %v734
  %v736 = vpop.f32.mrf.mxu0
  %737 = vmatprep.mubr.f32.mxu0 %v169
  %738 = vmatmul.mubr.f32.gmra.mxu0 %v168
  %v739 = vpop.f32.mrf.mxu0
  %v740 = vadd.f32 %v535, %v739
  %v741 = vpop.f32.mrf.mxu0
  %742 = vmatprep.mubr.f32.mxu0 %v177
  %743 = vmatmul.mubr.f32.gmra.mxu0 %v176
  %v744 = vpop.f32.mrf.mxu0
  %v745 = vadd.f32 %v540, %v744
  %v746 = vpop.f32.mrf.mxu0
  %747 = vmatprep.mubr.f32.mxu0 %v185
  %748 = vmatmul.mubr.f32.gmra.mxu0 %v184
  %v749 = vpop.f32.mrf.mxu0
  %v750 = vadd.f32 %v545, %v749
  %v751 = vpop.f32.mrf.mxu0
  %752 = vmatprep.mubr.f32.mxu0 %v193
  %753 = vmatmul.mubr.f32.gmra.mxu0 %v192
  %v754 = vpop.f32.mrf.mxu0
  %v755 = vadd.f32 %v550, %v754
  %v756 = vpop.f32.mrf.mxu0
  %757 = vmatprep.mubr.f32.mxu0 %v201
  %758 = vmatmul.mubr.f32.gmra.mxu0 %v200
  %v759 = vpop.f32.mrf.mxu0
  %v760 = vadd.f32 %v555, %v759
  %v761 = vpop.f32.mrf.mxu0
  %762 = vmatprep.mubr.f32.mxu0 %v209
  %763 = vmatmul.mubr.f32.gmra.mxu0 %v208
  %v764 = vpop.f32.mrf.mxu0
  %v765 = vadd.f32 %v560, %v764
  %v766 = vpop.f32.mrf.mxu0
  %767 = vmatprep.mubr.f32.mxu0 %v217
  %768 = vmatmul.mubr.f32.gmra.mxu0 %v216
  %v769 = vpop.f32.mrf.mxu0
  %v770 = vadd.f32 %v565, %v769
  %v771 = vpop.f32.mrf.mxu0
  %772 = vmatprep.mubr.f32.mxu0 %v225
  %773 = vmatmul.mubr.f32.gmra.mxu0 %v224
  %v774 = vpop.f32.mrf.mxu0
  %v775 = vadd.f32 %v570, %v774
  %v776 = vpop.f32.mrf.mxu0
  %777 = vmatprep.mubr.f32.mxu0 %v233
  %778 = vmatmul.mubr.f32.gmra.mxu0 %v232
  %v779 = vpop.f32.mrf.mxu0
  %v780 = vadd.f32 %v575, %v779
  %v781 = vpop.f32.mrf.mxu0
  %782 = vdwg.mxu0
  %783 = vmatprep.subr.mxu0 0.0
  %784 = vmatpush1.msra.mxu0 %v317
  %785 = vmatprep.subr.mxu0 0.0
  %786 = vmatpush1.msra.mxu0 %v316
  %787 = vmatprep.subr.mxu0 0.0
  %788 = vmatpush1.msra.mxu0 %v315
  %789 = vmatprep.subr.mxu0 0.0
  %790 = vmatpush1.msra.mxu0 %v314
  %791 = vmatprep.subr.mxu0 0.0
  %792 = vmatpush1.msra.mxu0 %v313
  %793 = vmatprep.subr.mxu0 0.0
  %794 = vmatpush1.msra.mxu0 %v312
  %795 = vmatprep.subr.mxu0 0.0
  %796 = vmatpush1.msra.mxu0 %v311
  %797 = vmatprep.subr.mxu0 0.0
  %798 = vmatpush1.msra.mxu0 %v310
  %799 = vmatprep.subr.mxu0 0.0
  %800 = vmatpush1.msra.mxu0 %v309
  %801 = vmatprep.subr.mxu0 0.0
  %802 = vmatpush1.msra.mxu0 %v308
  %803 = vmatprep.subr.mxu0 0.0
  %804 = vmatpush1.msra.mxu0 %v307
  %805 = vmatprep.subr.mxu0 0.0
  %806 = vmatpush1.msra.mxu0 %v306
  %807 = vmatprep.subr.mxu0 0.0
  %808 = vmatpush1.msra.mxu0 %v305
  %809 = vmatprep.subr.mxu0 0.0
  %810 = vmatpush1.msra.mxu0 %v304
  %811 = vmatprep.subr.mxu0 0.0
  %812 = vmatpush1.msra.mxu0 %v303
  %813 = vmatprep.subr.mxu0 0.0
  %814 = vmatpush1.msra.mxu0 %v302
  %815 = vmatprep.subr.mxu0 0.0
  %816 = vmatpush2.msra.mxu0 %v333
  %817 = vmatprep.subr.mxu0 0.0
  %818 = vmatpush2.msra.mxu0 %v332
  %819 = vmatprep.subr.mxu0 0.0
  %820 = vmatpush2.msra.mxu0 %v331
  %821 = vmatprep.subr.mxu0 0.0
  %822 = vmatpush2.msra.mxu0 %v330
  %823 = vmatprep.subr.mxu0 0.0
  %824 = vmatpush2.msra.mxu0 %v329
  %825 = vmatprep.subr.mxu0 0.0
  %826 = vmatpush2.msra.mxu0 %v328
  %827 = vmatprep.subr.mxu0 0.0
  %828 = vmatpush2.msra.mxu0 %v327
  %829 = vmatprep.subr.mxu0 0.0
  %830 = vmatpush2.msra.mxu0 %v326
  %831 = vmatprep.subr.mxu0 0.0
  %832 = vmatpush2.msra.mxu0 %v325
  %833 = vmatprep.subr.mxu0 0.0
  %834 = vmatpush2.msra.mxu0 %v324
  %835 = vmatprep.subr.mxu0 0.0
  %836 = vmatpush2.msra.mxu0 %v323
  %837 = vmatprep.subr.mxu0 0.0
  %838 = vmatpush2.msra.mxu0 %v322
  %839 = vmatprep.subr.mxu0 0.0
  %840 = vmatpush2.msra.mxu0 %v321
  %841 = vmatprep.subr.mxu0 0.0
  %842 = vmatpush2.msra.mxu0 %v320
  %843 = vmatprep.subr.mxu0 0.0
  %844 = vmatpush2.msra.mxu0 %v319
  %845 = vmatprep.subr.mxu0 0.0
  %846 = vmatpush2.msra.mxu0 %v318
  %847 = vmatprep.mubr.f32.mxu0 %v19
  %848 = vmatmul.mubr.f32.gmra.mxu0 %v18
  %v849 = vpop.f32.mrf.mxu0
  %v850 = vadd.f32 %v645, %v849
  %v851 = vpop.f32.mrf.mxu0
  %852 = vmatprep.mubr.f32.mxu0 %v27
  %853 = vmatmul.mubr.f32.gmra.mxu0 %v26
  %v854 = vpop.f32.mrf.mxu0
  %v855 = vadd.f32 %v650, %v854
  %v856 = vpop.f32.mrf.mxu0
  %857 = vmatprep.mubr.f32.mxu0 %v35
  %858 = vmatmul.mubr.f32.gmra.mxu0 %v34
  %v859 = vpop.f32.mrf.mxu0
  %v860 = vadd.f32 %v655, %v859
  %v861 = vpop.f32.mrf.mxu0
  %862 = vmatprep.mubr.f32.mxu0 %v43
  %863 = vmatmul.mubr.f32.gmra.mxu0 %v42
  %v864 = vpop.f32.mrf.mxu0
  %v865 = vadd.f32 %v660, %v864
  %v866 = vpop.f32.mrf.mxu0
  %867 = vmatprep.mubr.f32.mxu0 %v51
  %868 = vmatmul.mubr.f32.gmra.mxu0 %v50
  %v869 = vpop.f32.mrf.mxu0
  %v870 = vadd.f32 %v665, %v869
  %v871 = vpop.f32.mrf.mxu0
  %872 = vmatprep.mubr.f32.mxu0 %v59
  %873 = vmatmul.mubr.f32.gmra.mxu0 %v58
  %v874 = vpop.f32.mrf.mxu0
  %v875 = vadd.f32 %v670, %v874
  %v876 = vpop.f32.mrf.mxu0
  %877 = vmatprep.mubr.f32.mxu0 %v67
  %878 = vmatmul.mubr.f32.gmra.mxu0 %v66
  %v879 = vpop.f32.mrf.mxu0
  %v880 = vadd.f32 %v675, %v879
  %v881 = vpop.f32.mrf.mxu0
  %882 = vmatprep.mubr.f32.mxu0 %v75
  %883 = vmatmul.mubr.f32.gmra.mxu0 %v74
  %v884 = vpop.f32.mrf.mxu0
  %v885 = vadd.f32 %v680, %v884
  %v886 = vpop.f32.mrf.mxu0
  %887 = vmatprep.mubr.f32.mxu0 %v83
  %888 = vmatmul.mubr.f32.gmra.mxu0 %v82
  %v889 = vpop.f32.mrf.mxu0
  %v890 = vadd.f32 %v685, %v889
  %v891 = vpop.f32.mrf.mxu0
  %892 = vmatprep.mubr.f32.mxu0 %v91
  %893 = vmatmul.mubr.f32.gmra.mxu0 %v90
  %v894 = vpop.f32.mrf.mxu0
  %v895 = vadd.f32 %v690, %v894
  %v896 = vpop.f32.mrf.mxu0
  %897 = vmatprep.mubr.f32.mxu0 %v99
  %898 = vmatmul.mubr.f32.gmra.mxu0 %v98
  %v899 = vpop.f32.mrf.mxu0
  %v900 = vadd.f32 %v695, %v899
  %v901 = vpop.f32.mrf.mxu0
  %902 = vmatprep.mubr.f32.mxu0 %v107
  %903 = vmatmul.mubr.f32.gmra.mxu0 %v106
  %v904 = vpop.f32.mrf.mxu0
  %v905 = vadd.f32 %v700, %v904
  %v906 = vpop.f32.mrf.mxu0
  %907 = vmatprep.mubr.f32.mxu0 %v115
  %908 = vmatmul.mubr.f32.gmra.mxu0 %v114
  %v909 = vpop.f32.mrf.mxu0
  %v910 = vadd.f32 %v705, %v909
  %v911 = vpop.f32.mrf.mxu0
  %912 = vmatprep.mubr.f32.mxu0 %v123
  %913 = vmatmul.mubr.f32.gmra.mxu0 %v122
  %v914 = vpop.f32.mrf.mxu0
  %v915 = vadd.f32 %v710, %v914
  %v916 = vpop.f32.mrf.mxu0
  %917 = vmatprep.mubr.f32.mxu0 %v131
  %918 = vmatmul.mubr.f32.gmra.mxu0 %v130
  %v919 = vpop.f32.mrf.mxu0
  %v920 = vadd.f32 %v715, %v919
  %v921 = vpop.f32.mrf.mxu0
  %922 = vmatprep.mubr.f32.mxu0 %v139
  %923 = vmatmul.mubr.f32.gmra.mxu0 %v138
  %v924 = vpop.f32.mrf.mxu0
  %v925 = vadd.f32 %v720, %v924
  %v926 = vpop.f32.mrf.mxu0
  %927 = vmatprep.mubr.f32.mxu0 %v147
  %928 = vmatmul.mubr.f32.gmra.mxu0 %v146
  %v929 = vpop.f32.mrf.mxu0
  %v930 = vadd.f32 %v725, %v929
  %v931 = vpop.f32.mrf.mxu0
  %932 = vmatprep.mubr.f32.mxu0 %v155
  %933 = vmatmul.mubr.f32.gmra.mxu0 %v154
  %v934 = vpop.f32.mrf.mxu0
  %v935 = vadd.f32 %v730, %v934
  %v936 = vpop.f32.mrf.mxu0
  %937 = vmatprep.mubr.f32.mxu0 %v163
  %938 = vmatmul.mubr.f32.gmra.mxu0 %v162
  %v939 = vpop.f32.mrf.mxu0
  %v940 = vadd.f32 %v735, %v939
  %v941 = vpop.f32.mrf.mxu0
  %942 = vmatprep.mubr.f32.mxu0 %v171
  %943 = vmatmul.mubr.f32.gmra.mxu0 %v170
  %v944 = vpop.f32.mrf.mxu0
  %v945 = vadd.f32 %v740, %v944
  %v946 = vpop.f32.mrf.mxu0
  %947 = vmatprep.mubr.f32.mxu0 %v179
  %948 = vmatmul.mubr.f32.gmra.mxu0 %v178
  %v949 = vpop.f32.mrf.mxu0
  %v950 = vadd.f32 %v745, %v949
  %v951 = vpop.f32.mrf.mxu0
  %952 = vmatprep.mubr.f32.mxu0 %v187
  %953 = vmatmul.mubr.f32.gmra.mxu0 %v186
  %v954 = vpop.f32.mrf.mxu0
  %v955 = vadd.f32 %v750, %v954
  %v956 = vpop.f32.mrf.mxu0
  %957 = vmatprep.mubr.f32.mxu0 %v195
  %958 = vmatmul.mubr.f32.gmra.mxu0 %v194
  %v959 = vpop.f32.mrf.mxu0
  %v960 = vadd.f32 %v755, %v959
  %v961 = vpop.f32.mrf.mxu0
  %962 = vmatprep.mubr.f32.mxu0 %v203
  %963 = vmatmul.mubr.f32.gmra.mxu0 %v202
  %v964 = vpop.f32.mrf.mxu0
  %v965 = vadd.f32 %v760, %v964
  %v966 = vpop.f32.mrf.mxu0
  %967 = vmatprep.mubr.f32.mxu0 %v211
  %968 = vmatmul.mubr.f32.gmra.mxu0 %v210
  %v969 = vpop.f32.mrf.mxu0
  %v970 = vadd.f32 %v765, %v969
  %v971 = vpop.f32.mrf.mxu0
  %972 = vmatprep.mubr.f32.mxu0 %v219
  %973 = vmatmul.mubr.f32.gmra.mxu0 %v218
  %v974 = vpop.f32.mrf.mxu0
  %v975 = vadd.f32 %v770, %v974
  %v976 = vpop.f32.mrf.mxu0
  %977 = vmatprep.mubr.f32.mxu0 %v227
  %978 = vmatmul.mubr.f32.gmra.mxu0 %v226
  %v979 = vpop.f32.mrf.mxu0
  %v980 = vadd.f32 %v775, %v979
  %v981 = vpop.f32.mrf.mxu0
  %982 = vmatprep.mubr.f32.mxu0 %v235
  %983 = vmatmul.mubr.f32.gmra.mxu0 %v234
  %v984 = vpop.f32.mrf.mxu0
  %v985 = vadd.f32 %v780, %v984
  %v986 = vpop.f32.mrf.mxu0
  %987 = vdwg.mxu0
  %988 = vmatprep.subr.mxu0 0.0
  %989 = vmatpush1.msra.mxu0 %v349
  %990 = vmatprep.subr.mxu0 0.0
  %991 = vmatpush1.msra.mxu0 %v348
  %992 = vmatprep.subr.mxu0 0.0
  %993 = vmatpush1.msra.mxu0 %v347
  %994 = vmatprep.subr.mxu0 0.0
  %995 = vmatpush1.msra.mxu0 %v346
  %996 = vmatprep.subr.mxu0 0.0
  %997 = vmatpush1.msra.mxu0 %v345
  %998 = vmatprep.subr.mxu0 0.0
  %999 = vmatpush1.msra.mxu0 %v344
  %1000 = vmatprep.subr.mxu0 0.0
  %1001 = vmatpush1.msra.mxu0 %v343
  %1002 = vmatprep.subr.mxu0 0.0
  %1003 = vmatpush1.msra.mxu0 %v342
  %1004 = vmatprep.subr.mxu0 0.0
  %1005 = vmatpush1.msra.mxu0 %v341
  %1006 = vmatprep.subr.mxu0 0.0
  %1007 = vmatpush1.msra.mxu0 %v340
  %1008 = vmatprep.subr.mxu0 0.0
  %1009 = vmatpush1.msra.mxu0 %v339
  %1010 = vmatprep.subr.mxu0 0.0
  %1011 = vmatpush1.msra.mxu0 %v338
  %1012 = vmatprep.subr.mxu0 0.0
  %1013 = vmatpush1.msra.mxu0 %v337
  %1014 = vmatprep.subr.mxu0 0.0
  %1015 = vmatpush1.msra.mxu0 %v336
  %1016 = vmatprep.subr.mxu0 0.0
  %1017 = vmatpush1.msra.mxu0 %v335
  %1018 = vmatprep.subr.mxu0 0.0
  %1019 = vmatpush1.msra.mxu0 %v334
  %1020 = vmatprep.subr.mxu0 0.0
  %1021 = vmatpush2.msra.mxu0 %v365
  %1022 = vmatprep.subr.mxu0 0.0
  %1023 = vmatpush2.msra.mxu0 %v364
  %1024 = vmatprep.subr.mxu0 0.0
  %1025 = vmatpush2.msra.mxu0 %v363
  %1026 = vmatprep.subr.mxu0 0.0
  %1027 = vmatpush2.msra.mxu0 %v362
  %1028 = vmatprep.subr.mxu0 0.0
  %1029 = vmatpush2.msra.mxu0 %v361
  %1030 = vmatprep.subr.mxu0 0.0
  %1031 = vmatpush2.msra.mxu0 %v360
  %1032 = vmatprep.subr.mxu0 0.0
  %1033 = vmatpush2.msra.mxu0 %v359
  %1034 = vmatprep.subr.mxu0 0.0
  %1035 = vmatpush2.msra.mxu0 %v358
  %1036 = vmatprep.subr.mxu0 0.0
  %1037 = vmatpush2.msra.mxu0 %v357
  %1038 = vmatprep.subr.mxu0 0.0
  %1039 = vmatpush2.msra.mxu0 %v356
  %1040 = vmatprep.subr.mxu0 0.0
  %1041 = vmatpush2.msra.mxu0 %v355
  %1042 = vmatprep.subr.mxu0 0.0
  %1043 = vmatpush2.msra.mxu0 %v354
  %1044 = vmatprep.subr.mxu0 0.0
  %1045 = vmatpush2.msra.mxu0 %v353
  %1046 = vmatprep.subr.mxu0 0.0
  %1047 = vmatpush2.msra.mxu0 %v352
  %1048 = vmatprep.subr.mxu0 0.0
  %1049 = vmatpush2.msra.mxu0 %v351
  %1050 = vmatprep.subr.mxu0 0.0
  %1051 = vmatpush2.msra.mxu0 %v350
  %1052 = vmatprep.mubr.f32.mxu0 %v21
  %1053 = vmatmul.mubr.f32.gmra.mxu0 %v20
  %v1054 = vpop.f32.mrf.mxu0
  %v1055 = vadd.f32 %v850, %v1054
  %v1056 = vpop.f32.mrf.mxu0
  %1057 = vmatprep.mubr.f32.mxu0 %v29
  %1058 = vmatmul.mubr.f32.gmra.mxu0 %v28
  %v1059 = vpop.f32.mrf.mxu0
  %v1060 = vadd.f32 %v855, %v1059
  %v1061 = vpop.f32.mrf.mxu0
  %1062 = vmatprep.mubr.f32.mxu0 %v37
  %1063 = vmatmul.mubr.f32.gmra.mxu0 %v36
  %v1064 = vpop.f32.mrf.mxu0
  %v1065 = vadd.f32 %v860, %v1064
  %v1066 = vpop.f32.mrf.mxu0
  %1067 = vmatprep.mubr.f32.mxu0 %v45
  %1068 = vmatmul.mubr.f32.gmra.mxu0 %v44
  %v1069 = vpop.f32.mrf.mxu0
  %v1070 = vadd.f32 %v865, %v1069
  %v1071 = vpop.f32.mrf.mxu0
  %1072 = vmatprep.mubr.f32.mxu0 %v53
  %1073 = vmatmul.mubr.f32.gmra.mxu0 %v52
  %v1074 = vpop.f32.mrf.mxu0
  %v1075 = vadd.f32 %v870, %v1074
  %v1076 = vpop.f32.mrf.mxu0
  %1077 = vmatprep.mubr.f32.mxu0 %v61
  %1078 = vmatmul.mubr.f32.gmra.mxu0 %v60
  %v1079 = vpop.f32.mrf.mxu0
  %v1080 = vadd.f32 %v875, %v1079
  %v1081 = vpop.f32.mrf.mxu0
  %1082 = vmatprep.mubr.f32.mxu0 %v69
  %1083 = vmatmul.mubr.f32.gmra.mxu0 %v68
  %v1084 = vpop.f32.mrf.mxu0
  %v1085 = vadd.f32 %v880, %v1084
  %v1086 = vpop.f32.mrf.mxu0
  %1087 = vmatprep.mubr.f32.mxu0 %v77
  %1088 = vmatmul.mubr.f32.gmra.mxu0 %v76
  %v1089 = vpop.f32.mrf.mxu0
  %v1090 = vadd.f32 %v885, %v1089
  %v1091 = vpop.f32.mrf.mxu0
  %1092 = vmatprep.mubr.f32.mxu0 %v85
  %1093 = vmatmul.mubr.f32.gmra.mxu0 %v84
  %v1094 = vpop.f32.mrf.mxu0
  %v1095 = vadd.f32 %v890, %v1094
  %v1096 = vpop.f32.mrf.mxu0
  %1097 = vmatprep.mubr.f32.mxu0 %v93
  %1098 = vmatmul.mubr.f32.gmra.mxu0 %v92
  %v1099 = vpop.f32.mrf.mxu0
  %v1100 = vadd.f32 %v895, %v1099
  %v1101 = vpop.f32.mrf.mxu0
  %1102 = vmatprep.mubr.f32.mxu0 %v101
  %1103 = vmatmul.mubr.f32.gmra.mxu0 %v100
  %v1104 = vpop.f32.mrf.mxu0
  %v1105 = vadd.f32 %v900, %v1104
  %v1106 = vpop.f32.mrf.mxu0
  %1107 = vmatprep.mubr.f32.mxu0 %v109
  %1108 = vmatmul.mubr.f32.gmra.mxu0 %v108
  %v1109 = vpop.f32.mrf.mxu0
  %v1110 = vadd.f32 %v905, %v1109
  %v1111 = vpop.f32.mrf.mxu0
  %1112 = vmatprep.mubr.f32.mxu0 %v117
  %1113 = vmatmul.mubr.f32.gmra.mxu0 %v116
  %v1114 = vpop.f32.mrf.mxu0
  %v1115 = vadd.f32 %v910, %v1114
  %v1116 = vpop.f32.mrf.mxu0
  %1117 = vmatprep.mubr.f32.mxu0 %v125
  %1118 = vmatmul.mubr.f32.gmra.mxu0 %v124
  %v1119 = vpop.f32.mrf.mxu0
  %v1120 = vadd.f32 %v915, %v1119
  %v1121 = vpop.f32.mrf.mxu0
  %1122 = vmatprep.mubr.f32.mxu0 %v133
  %1123 = vmatmul.mubr.f32.gmra.mxu0 %v132
  %v1124 = vpop.f32.mrf.mxu0
  %v1125 = vadd.f32 %v920, %v1124
  %v1126 = vpop.f32.mrf.mxu0
  %1127 = vmatprep.mubr.f32.mxu0 %v141
  %1128 = vmatmul.mubr.f32.gmra.mxu0 %v140
  %v1129 = vpop.f32.mrf.mxu0
  %v1130 = vadd.f32 %v925, %v1129
  %v1131 = vpop.f32.mrf.mxu0
  %1132 = vmatprep.mubr.f32.mxu0 %v149
  %1133 = vmatmul.mubr.f32.gmra.mxu0 %v148
  %v1134 = vpop.f32.mrf.mxu0
  %v1135 = vadd.f32 %v930, %v1134
  %v1136 = vpop.f32.mrf.mxu0
  %1137 = vmatprep.mubr.f32.mxu0 %v157
  %1138 = vmatmul.mubr.f32.gmra.mxu0 %v156
  %v1139 = vpop.f32.mrf.mxu0
  %v1140 = vadd.f32 %v935, %v1139
  %v1141 = vpop.f32.mrf.mxu0
  %1142 = vmatprep.mubr.f32.mxu0 %v165
  %1143 = vmatmul.mubr.f32.gmra.mxu0 %v164
  %v1144 = vpop.f32.mrf.mxu0
  %v1145 = vadd.f32 %v940, %v1144
  %v1146 = vpop.f32.mrf.mxu0
  %1147 = vmatprep.mubr.f32.mxu0 %v173
  %1148 = vmatmul.mubr.f32.gmra.mxu0 %v172
  %v1149 = vpop.f32.mrf.mxu0
  %v1150 = vadd.f32 %v945, %v1149
  %v1151 = vpop.f32.mrf.mxu0
  %1152 = vmatprep.mubr.f32.mxu0 %v181
  %1153 = vmatmul.mubr.f32.gmra.mxu0 %v180
  %v1154 = vpop.f32.mrf.mxu0
  %v1155 = vadd.f32 %v950, %v1154
  %v1156 = vpop.f32.mrf.mxu0
  %1157 = vmatprep.mubr.f32.mxu0 %v189
  %1158 = vmatmul.mubr.f32.gmra.mxu0 %v188
  %v1159 = vpop.f32.mrf.mxu0
  %v1160 = vadd.f32 %v955, %v1159
  %v1161 = vpop.f32.mrf.mxu0
  %1162 = vmatprep.mubr.f32.mxu0 %v197
  %1163 = vmatmul.mubr.f32.gmra.mxu0 %v196
  %v1164 = vpop.f32.mrf.mxu0
  %v1165 = vadd.f32 %v960, %v1164
  %v1166 = vpop.f32.mrf.mxu0
  %1167 = vmatprep.mubr.f32.mxu0 %v205
  %1168 = vmatmul.mubr.f32.gmra.mxu0 %v204
  %v1169 = vpop.f32.mrf.mxu0
  %v1170 = vadd.f32 %v965, %v1169
  %v1171 = vpop.f32.mrf.mxu0
  %1172 = vmatprep.mubr.f32.mxu0 %v213
  %1173 = vmatmul.mubr.f32.gmra.mxu0 %v212
  %v1174 = vpop.f32.mrf.mxu0
  %v1175 = vadd.f32 %v970, %v1174
  %v1176 = vpop.f32.mrf.mxu0
  %1177 = vmatprep.mubr.f32.mxu0 %v221
  %1178 = vmatmul.mubr.f32.gmra.mxu0 %v220
  %v1179 = vpop.f32.mrf.mxu0
  %v1180 = vadd.f32 %v975, %v1179
  %v1181 = vpop.f32.mrf.mxu0
  %1182 = vmatprep.mubr.f32.mxu0 %v229
  %1183 = vmatmul.mubr.f32.gmra.mxu0 %v228
  %v1184 = vpop.f32.mrf.mxu0
  %v1185 = vadd.f32 %v980, %v1184
  %v1186 = vpop.f32.mrf.mxu0
  %1187 = vmatprep.mubr.f32.mxu0 %v237
  %1188 = vmatmul.mubr.f32.gmra.mxu0 %v236
  %v1189 = vpop.f32.mrf.mxu0
  %v1190 = vadd.f32 %v985, %v1189
  %v1191 = vpop.f32.mrf.mxu0
  %1192 = vdwg.mxu0
  %1193 = vst [vmem:[%s3] sm:$0xff] %v1055
  %1194 = vst [vmem:[%s3 + $0x8] sm:$0xff] %v1060
  %1195 = vst [vmem:[%s3 + $0x10] sm:$0xff] %v1065
  %1196 = vst [vmem:[%s3 + $0x18] sm:$0xff] %v1070
  %1197 = vst [vmem:[%s3 + $0x20] sm:$0xff] %v1075
  %1198 = vst [vmem:[%s3 + $0x28] sm:$0xff] %v1080
  %1199 = vst [vmem:[%s3 + $0x30] sm:$0xff] %v1085
  %1200 = vst [vmem:[%s3 + $0x38] sm:$0xff] %v1090
  %1201 = vst [vmem:[%s3 + $0x40] sm:$0xff] %v1095
  %1202 = vst [vmem:[%s3 + $0x48] sm:$0xff] %v1100
  %1203 = vst [vmem:[%s3 + $0x50] sm:$0xff] %v1105
  %1204 = vst [vmem:[%s3 + $0x58] sm:$0xff] %v1110
  %1205 = vst [vmem:[%s3 + $0x60] sm:$0xff] %v1115
  %1206 = vst [vmem:[%s3 + $0x68] sm:$0xff] %v1120
  %1207 = vst [vmem:[%s3 + $0x70] sm:$0xff] %v1125
  %1208 = vst [vmem:[%s3 + $0x78] sm:$0xff] %v1130
  %1209 = vst [vmem:[%s3 + $0x80] sm:$0xff] %v1135
  %1210 = vst [vmem:[%s3 + $0x88] sm:$0xff] %v1140
  %1211 = vst [vmem:[%s3 + $0x90] sm:$0xff] %v1145
  %1212 = vst [vmem:[%s3 + $0x98] sm:$0xff] %v1150
  %1213 = vst [vmem:[%s3 + $0xa0] sm:$0xff] %v1155
  %1214 = vst [vmem:[%s3 + $0xa8] sm:$0xff] %v1160
  %1215 = vst [vmem:[%s3 + $0xb0] sm:$0xff] %v1165
  %1216 = vst [vmem:[%s3 + $0xb8] sm:$0xff] %v1170
  %1217 = vst [vmem:[%s3 + $0xc0] sm:$0xff] %v1175
  %1218 = vst [vmem:[%s3 + $0xc8] sm:$0xff] %v1180
  %1219 = vst [vmem:[%s3 + $0xd0] sm:$0xff] %v1185
  %1220 = vst [vmem:[%s3 + $0xd8] sm:$0xff] %v1190
  // Predicated region
  $region14: #{pilotnet_forward.8} parent=0 // pred_check
    _
  $region15: #{pilotnet_forward.8} parent=0 // pred_check_branch
    %1222 = sbr.rel (0) target = $region17
  $region16: #{pilotnet_forward.8} parent=0 // pred_region
    _
  $region17: #{pilotnet_forward.8} parent=0 // pred_fallthru
    _
  // Predicated region
  $region18: #{pilotnet_forward.8} parent=0 // pred_check
    _
  $region19: #{pilotnet_forward.8} parent=0 // pred_check_branch
    %1224 = sbr.rel (0) target = $region21
  $region20: #{pilotnet_forward.8} parent=0 // pred_region
    _
  $region21: #{pilotnet_forward.8} parent=0 // pred_fallthru
    _

// kernel: pilotnet_forward.9
$region0: #{pilotnet_forward.9}
  #allocation0 [shape = 'u32[]', space=smem, size = 0x4, offset = 0x4, fixed_abs, tag = 'smem constant byte address 0x4 - core index']
  #allocation1 [shape = 'u32[144,128]{1,0:T(1,128)}', space=vmem, size = 0x12000, scoped, tag = 'internal scratch']
  %s0 = inlined_call_operand.vmem [shape: f32[120,512], index: 0, kind: input, shape index: {}]
  %s1 = inlined_call_operand.vmem [shape: f32[512,128], index: 1, kind: input, shape index: {}]
  %s2 = inlined_call_operand.vmem [shape: f32[1,128], index: 2, kind: input, shape index: {}]
  %s3 = inlined_call_operand.vmem [shape: f32[120,128], index: 3, kind: output, shape index: {}]
  %s4 = sld [smem:[#allocation0]]
  $region22: #{pilotnet_forward.9} parent=0
    _
  %s6 = ssub.s32 1, %s4
  %s7 = scalar_select 0, %s6, %s4
  // Predicated region
  $region2: #{pilotnet_forward.9} parent=0 // pred_check
    _
  $region3: #{pilotnet_forward.9} parent=0 // pred_check_branch
    %9 = sbr.rel (0) target = $region5
  $region4: #{pilotnet_forward.9} parent=0 // pred_region
    _
  $region5: #{pilotnet_forward.9} parent=0 // pred_fallthru
    _
  // Predicated region
  $region6: #{pilotnet_forward.9} parent=0 // pred_check
    _
  $region7: #{pilotnet_forward.9} parent=0 // pred_check_branch
    %11 = sbr.rel (0) target = $region9
  $region8: #{pilotnet_forward.9} parent=0 // pred_region
    _
  $region9: #{pilotnet_forward.9} parent=0 // pred_fallthru
    _
  // Predicated region
  $region10: #{pilotnet_forward.9} parent=0 // pred_check
    _
  $region11: #{pilotnet_forward.9} parent=0 // pred_check_branch
    %13 = sbr.rel (0) target = $region13
  $region12: #{pilotnet_forward.9} parent=0 // pred_region
    _
  $region13: #{pilotnet_forward.9} parent=0 // pred_fallthru
    _
  %v14 = vld [vmem:[%s0] sm:$0xff]
  %v15 = vld [vmem:[%s0 + $0x8] sm:$0xff]
  %v16 = vld [vmem:[%s0 + $0x10] sm:$0xff]
  %v17 = vld [vmem:[%s0 + $0x18] sm:$0xff]
  %v18 = vld [vmem:[%s0 + $0x20] sm:$0xff]
  %v19 = vld [vmem:[%s0 + $0x28] sm:$0xff]
  %v20 = vld [vmem:[%s0 + $0x30] sm:$0xff]
  %v21 = vld [vmem:[%s0 + $0x38] sm:$0xff]
  %v22 = vld [vmem:[%s0 + $0x40] sm:$0xff]
  %v23 = vld [vmem:[%s0 + $0x48] sm:$0xff]
  %v24 = vld [vmem:[%s0 + $0x50] sm:$0xff]
  %v25 = vld [vmem:[%s0 + $0x58] sm:$0xff]
  %v26 = vld [vmem:[%s0 + $0x60] sm:$0xff]
  %v27 = vld [vmem:[%s0 + $0x68] sm:$0xff]
  %v28 = vld [vmem:[%s0 + $0x70] sm:$0xff]
  %v29 = vld [vmem:[%s0 + $0x78] sm:$0xff]
  %v30 = vld [vmem:[%s0 + $0x80] sm:$0xff]
  %v31 = vld [vmem:[%s0 + $0x88] sm:$0xff]
  %v32 = vld [vmem:[%s0 + $0x90] sm:$0xff]
  %v33 = vld [vmem:[%s0 + $0x98] sm:$0xff]
  %v34 = vld [vmem:[%s0 + $0xa0] sm:$0xff]
  %v35 = vld [vmem:[%s0 + $0xa8] sm:$0xff]
  %v36 = vld [vmem:[%s0 + $0xb0] sm:$0xff]
  %v37 = vld [vmem:[%s0 + $0xb8] sm:$0xff]
  %v38 = vld [vmem:[%s0 + $0xc0] sm:$0xff]
  %v39 = vld [vmem:[%s0 + $0xc8] sm:$0xff]
  %v40 = vld [vmem:[%s0 + $0xd0] sm:$0xff]
  %v41 = vld [vmem:[%s0 + $0xd8] sm:$0xff]
  %v42 = vld [vmem:[%s0 + $0xe0] sm:$0xff]
  %v43 = vld [vmem:[%s0 + $0xe8] sm:$0xff]
  %v44 = vld [vmem:[%s0 + $0xf0] sm:$0xff]
  %v45 = vld [vmem:[%s0 + $0xf8] sm:$0xff]
  %v46 = vld [vmem:[%s0 + $0x100] sm:$0xff]
  %v47 = vld [vmem:[%s0 + $0x108] sm:$0xff]
  %v48 = vld [vmem:[%s0 + $0x110] sm:$0xff]
  %v49 = vld [vmem:[%s0 + $0x118] sm:$0xff]
  %v50 = vld [vmem:[%s0 + $0x120] sm:$0xff]
  %v51 = vld [vmem:[%s0 + $0x128] sm:$0xff]
  %v52 = vld [vmem:[%s0 + $0x130] sm:$0xff]
  %v53 = vld [vmem:[%s0 + $0x138] sm:$0xff]
  %v54 = vld [vmem:[%s0 + $0x140] sm:$0xff]
  %v55 = vld [vmem:[%s0 + $0x148] sm:$0xff]
  %v56 = vld [vmem:[%s0 + $0x150] sm:$0xff]
  %v57 = vld [vmem:[%s0 + $0x158] sm:$0xff]
  %v58 = vld [vmem:[%s0 + $0x160] sm:$0xff]
  %v59 = vld [vmem:[%s0 + $0x168] sm:$0xff]
  %v60 = vld [vmem:[%s0 + $0x170] sm:$0xff]
  %v61 = vld [vmem:[%s0 + $0x178] sm:$0xff]
  %v62 = vld [vmem:[%s0 + $0x180] sm:$0xff]
  %v63 = vld [vmem:[%s0 + $0x188] sm:$0xff]
  %v64 = vld [vmem:[%s0 + $0x190] sm:$0xff]
  %v65 = vld [vmem:[%s0 + $0x198] sm:$0xff]
  %v66 = vld [vmem:[%s0 + $0x1a0] sm:$0xff]
  %v67 = vld [vmem:[%s0 + $0x1a8] sm:$0xff]
  %v68 = vld [vmem:[%s0 + $0x1b0] sm:$0xff]
  %v69 = vld [vmem:[%s0 + $0x1b8] sm:$0xff]
  %v70 = vld [vmem:[%s0 + $0x1c0] sm:$0xff]
  %v71 = vld [vmem:[%s0 + $0x1c8] sm:$0xff]
  %v72 = vld [vmem:[%s0 + $0x1d0] sm:$0xff]
  %v73 = vld [vmem:[%s0 + $0x1d8] sm:$0xff]
  %v74 = vld [vmem:[%s1] sm:$0xff]
  %v75 = vld [vmem:[%s1 + $0x8] sm:$0xff]
  %v76 = vld [vmem:[%s1 + $0x10] sm:$0xff]
  %v77 = vld [vmem:[%s1 + $0x18] sm:$0xff]
  %v78 = vld [vmem:[%s1 + $0x20] sm:$0xff]
  %v79 = vld [vmem:[%s1 + $0x28] sm:$0xff]
  %v80 = vld [vmem:[%s1 + $0x30] sm:$0xff]
  %v81 = vld [vmem:[%s1 + $0x38] sm:$0xff]
  %v82 = vld [vmem:[%s1 + $0x40] sm:$0xff]
  %v83 = vld [vmem:[%s1 + $0x48] sm:$0xff]
  %v84 = vld [vmem:[%s1 + $0x50] sm:$0xff]
  %v85 = vld [vmem:[%s1 + $0x58] sm:$0xff]
  %v86 = vld [vmem:[%s1 + $0x60] sm:$0xff]
  %v87 = vld [vmem:[%s1 + $0x68] sm:$0xff]
  %v88 = vld [vmem:[%s1 + $0x70] sm:$0xff]
  %v89 = vld [vmem:[%s1 + $0x78] sm:$0xff]
  %v90 = vld [vmem:[%s1 + $0x80] sm:$0xff]
  %v91 = vld [vmem:[%s1 + $0x88] sm:$0xff]
  %v92 = vld [vmem:[%s1 + $0x90] sm:$0xff]
  %v93 = vld [vmem:[%s1 + $0x98] sm:$0xff]
  %v94 = vld [vmem:[%s1 + $0xa0] sm:$0xff]
  %v95 = vld [vmem:[%s1 + $0xa8] sm:$0xff]
  %v96 = vld [vmem:[%s1 + $0xb0] sm:$0xff]
  %v97 = vld [vmem:[%s1 + $0xb8] sm:$0xff]
  %v98 = vld [vmem:[%s1 + $0xc0] sm:$0xff]
  %v99 = vld [vmem:[%s1 + $0xc8] sm:$0xff]
  %v100 = vld [vmem:[%s1 + $0xd0] sm:$0xff]
  %v101 = vld [vmem:[%s1 + $0xd8] sm:$0xff]
  %v102 = vld [vmem:[%s1 + $0xe0] sm:$0xff]
  %v103 = vld [vmem:[%s1 + $0xe8] sm:$0xff]
  %v104 = vld [vmem:[%s1 + $0xf0] sm:$0xff]
  %v105 = vld [vmem:[%s1 + $0xf8] sm:$0xff]
  %v106 = vld [vmem:[%s1 + $0x100] sm:$0xff]
  %v107 = vld [vmem:[%s1 + $0x108] sm:$0xff]
  %v108 = vld [vmem:[%s1 + $0x110] sm:$0xff]
  %v109 = vld [vmem:[%s1 + $0x118] sm:$0xff]
  %v110 = vld [vmem:[%s1 + $0x120] sm:$0xff]
  %v111 = vld [vmem:[%s1 + $0x128] sm:$0xff]
  %v112 = vld [vmem:[%s1 + $0x130] sm:$0xff]
  %v113 = vld [vmem:[%s1 + $0x138] sm:$0xff]
  %v114 = vld [vmem:[%s1 + $0x140] sm:$0xff]
  %v115 = vld [vmem:[%s1 + $0x148] sm:$0xff]
  %v116 = vld [vmem:[%s1 + $0x150] sm:$0xff]
  %v117 = vld [vmem:[%s1 + $0x158] sm:$0xff]
  %v118 = vld [vmem:[%s1 + $0x160] sm:$0xff]
  %v119 = vld [vmem:[%s1 + $0x168] sm:$0xff]
  %v120 = vld [vmem:[%s1 + $0x170] sm:$0xff]
  %v121 = vld [vmem:[%s1 + $0x178] sm:$0xff]
  %v122 = vld [vmem:[%s1 + $0x180] sm:$0xff]
  %v123 = vld [vmem:[%s1 + $0x188] sm:$0xff]
  %v124 = vld [vmem:[%s1 + $0x190] sm:$0xff]
  %v125 = vld [vmem:[%s1 + $0x198] sm:$0xff]
  %v126 = vld [vmem:[%s1 + $0x1a0] sm:$0xff]
  %v127 = vld [vmem:[%s1 + $0x1a8] sm:$0xff]
  %v128 = vld [vmem:[%s1 + $0x1b0] sm:$0xff]
  %v129 = vld [vmem:[%s1 + $0x1b8] sm:$0xff]
  %v130 = vld [vmem:[%s1 + $0x1c0] sm:$0xff]
  %v131 = vld [vmem:[%s1 + $0x1c8] sm:$0xff]
  %v132 = vld [vmem:[%s1 + $0x1d0] sm:$0xff]
  %v133 = vld [vmem:[%s1 + $0x1d8] sm:$0xff]
  %v134 = vld [vmem:[%s1 + $0x1e0] sm:$0xff]
  %v135 = vld [vmem:[%s1 + $0x1e8] sm:$0xff]
  %v136 = vld [vmem:[%s1 + $0x1f0] sm:$0xff]
  %v137 = vld [vmem:[%s1 + $0x1f8] sm:$0xff]
  %v138 = vld [vmem:[%s2] sm:$0x1]
  %v140 = vlaneseq
  %v141 = vshrl.u32 %v140, 7
  %v142 = vsub.s32 0, %v141
  %v143 = vrot.slane %v138, %v142
  %145 = vmatprep.subr.mxu0 0.0
  %146 = vmatpush1.msra.mxu0 %v89
  %147 = vmatprep.subr.mxu0 0.0
  %148 = vmatpush1.msra.mxu0 %v88
  %149 = vmatprep.subr.mxu0 0.0
  %150 = vmatpush1.msra.mxu0 %v87
  %151 = vmatprep.subr.mxu0 0.0
  %152 = vmatpush1.msra.mxu0 %v86
  %153 = vmatprep.subr.mxu0 0.0
  %154 = vmatpush1.msra.mxu0 %v85
  %155 = vmatprep.subr.mxu0 0.0
  %156 = vmatpush1.msra.mxu0 %v84
  %157 = vmatprep.subr.mxu0 0.0
  %158 = vmatpush1.msra.mxu0 %v83
  %159 = vmatprep.subr.mxu0 0.0
  %160 = vmatpush1.msra.mxu0 %v82
  %161 = vmatprep.subr.mxu0 0.0
  %162 = vmatpush1.msra.mxu0 %v81
  %163 = vmatprep.subr.mxu0 0.0
  %164 = vmatpush1.msra.mxu0 %v80
  %165 = vmatprep.subr.mxu0 0.0
  %166 = vmatpush1.msra.mxu0 %v79
  %167 = vmatprep.subr.mxu0 0.0
  %168 = vmatpush1.msra.mxu0 %v78
  %169 = vmatprep.subr.mxu0 0.0
  %170 = vmatpush1.msra.mxu0 %v77
  %171 = vmatprep.subr.mxu0 0.0
  %172 = vmatpush1.msra.mxu0 %v76
  %173 = vmatprep.subr.mxu0 0.0
  %174 = vmatpush1.msra.mxu0 %v75
  %175 = vmatprep.subr.mxu0 0.0
  %176 = vmatpush1.msra.mxu0 %v74
  %177 = vmatprep.subr.mxu0 0.0
  %178 = vmatpush2.msra.mxu0 %v105
  %179 = vmatprep.subr.mxu0 0.0
  %180 = vmatpush2.msra.mxu0 %v104
  %181 = vmatprep.subr.mxu0 0.0
  %182 = vmatpush2.msra.mxu0 %v103
  %183 = vmatprep.subr.mxu0 0.0
  %184 = vmatpush2.msra.mxu0 %v102
  %185 = vmatprep.subr.mxu0 0.0
  %186 = vmatpush2.msra.mxu0 %v101
  %187 = vmatprep.subr.mxu0 0.0
  %188 = vmatpush2.msra.mxu0 %v100
  %189 = vmatprep.subr.mxu0 0.0
  %190 = vmatpush2.msra.mxu0 %v99
  %191 = vmatprep.subr.mxu0 0.0
  %192 = vmatpush2.msra.mxu0 %v98
  %193 = vmatprep.subr.mxu0 0.0
  %194 = vmatpush2.msra.mxu0 %v97
  %195 = vmatprep.subr.mxu0 0.0
  %196 = vmatpush2.msra.mxu0 %v96
  %197 = vmatprep.subr.mxu0 0.0
  %198 = vmatpush2.msra.mxu0 %v95
  %199 = vmatprep.subr.mxu0 0.0
  %200 = vmatpush2.msra.mxu0 %v94
  %201 = vmatprep.subr.mxu0 0.0
  %202 = vmatpush2.msra.mxu0 %v93
  %203 = vmatprep.subr.mxu0 0.0
  %204 = vmatpush2.msra.mxu0 %v92
  %205 = vmatprep.subr.mxu0 0.0
  %206 = vmatpush2.msra.mxu0 %v91
  %207 = vmatprep.subr.mxu0 0.0
  %208 = vmatpush2.msra.mxu0 %v90
  %209 = vmatprep.mubr.f32.mxu0 %v15
  %210 = vmatmul.mubr.f32.gmra.mxu0 %v14
  %v211 = vpop.f32.mrf.mxu0
  %v212 = vadd.f32 %v143, %v211
  %v213 = vpop.f32.mrf.mxu0
  %214 = vmatprep.mubr.f32.mxu0 %v19
  %215 = vmatmul.mubr.f32.gmra.mxu0 %v18
  %v216 = vpop.f32.mrf.mxu0
  %v217 = vadd.f32 %v143, %v216
  %v218 = vpop.f32.mrf.mxu0
  %219 = vmatprep.mubr.f32.mxu0 %v23
  %220 = vmatmul.mubr.f32.gmra.mxu0 %v22
  %v221 = vpop.f32.mrf.mxu0
  %v222 = vadd.f32 %v143, %v221
  %v223 = vpop.f32.mrf.mxu0
  %224 = vmatprep.mubr.f32.mxu0 %v27
  %225 = vmatmul.mubr.f32.gmra.mxu0 %v26
  %v226 = vpop.f32.mrf.mxu0
  %v227 = vadd.f32 %v143, %v226
  %v228 = vpop.f32.mrf.mxu0
  %229 = vmatprep.mubr.f32.mxu0 %v31
  %230 = vmatmul.mubr.f32.gmra.mxu0 %v30
  %v231 = vpop.f32.mrf.mxu0
  %v232 = vadd.f32 %v143, %v231
  %v233 = vpop.f32.mrf.mxu0
  %234 = vmatprep.mubr.f32.mxu0 %v35
  %235 = vmatmul.mubr.f32.gmra.mxu0 %v34
  %v236 = vpop.f32.mrf.mxu0
  %v237 = vadd.f32 %v143, %v236
  %v238 = vpop.f32.mrf.mxu0
  %239 = vmatprep.mubr.f32.mxu0 %v39
  %240 = vmatmul.mubr.f32.gmra.mxu0 %v38
  %v241 = vpop.f32.mrf.mxu0
  %v242 = vadd.f32 %v143, %v241
  %v243 = vpop.f32.mrf.mxu0
  %244 = vmatprep.mubr.f32.mxu0 %v43
  %245 = vmatmul.mubr.f32.gmra.mxu0 %v42
  %v246 = vpop.f32.mrf.mxu0
  %v247 = vadd.f32 %v143, %v246
  %v248 = vpop.f32.mrf.mxu0
  %249 = vmatprep.mubr.f32.mxu0 %v47
  %250 = vmatmul.mubr.f32.gmra.mxu0 %v46
  %v251 = vpop.f32.mrf.mxu0
  %v252 = vadd.f32 %v143, %v251
  %v253 = vpop.f32.mrf.mxu0
  %254 = vmatprep.mubr.f32.mxu0 %v51
  %255 = vmatmul.mubr.f32.gmra.mxu0 %v50
  %v256 = vpop.f32.mrf.mxu0
  %v257 = vadd.f32 %v143, %v256
  %v258 = vpop.f32.mrf.mxu0
  %259 = vmatprep.mubr.f32.mxu0 %v55
  %260 = vmatmul.mubr.f32.gmra.mxu0 %v54
  %v261 = vpop.f32.mrf.mxu0
  %v262 = vadd.f32 %v143, %v261
  %v263 = vpop.f32.mrf.mxu0
  %264 = vmatprep.mubr.f32.mxu0 %v59
  %265 = vmatmul.mubr.f32.gmra.mxu0 %v58
  %v266 = vpop.f32.mrf.mxu0
  %v267 = vadd.f32 %v143, %v266
  %v268 = vpop.f32.mrf.mxu0
  %269 = vmatprep.mubr.f32.mxu0 %v63
  %270 = vmatmul.mubr.f32.gmra.mxu0 %v62
  %v271 = vpop.f32.mrf.mxu0
  %v272 = vadd.f32 %v143, %v271
  %v273 = vpop.f32.mrf.mxu0
  %274 = vmatprep.mubr.f32.mxu0 %v67
  %275 = vmatmul.mubr.f32.gmra.mxu0 %v66
  %v276 = vpop.f32.mrf.mxu0
  %v277 = vadd.f32 %v143, %v276
  %v278 = vpop.f32.mrf.mxu0
  %279 = vmatprep.mubr.f32.mxu0 %v71
  %280 = vmatmul.mubr.f32.gmra.mxu0 %v70
  %v281 = vpop.f32.mrf.mxu0
  %v282 = vadd.f32 %v143, %v281
  %v283 = vpop.f32.mrf.mxu0
  %284 = vdwg.mxu0
  %285 = vmatprep.subr.mxu0 0.0
  %286 = vmatpush1.msra.mxu0 %v121
  %287 = vmatprep.subr.mxu0 0.0
  %288 = vmatpush1.msra.mxu0 %v120
  %289 = vmatprep.subr.mxu0 0.0
  %290 = vmatpush1.msra.mxu0 %v119
  %291 = vmatprep.subr.mxu0 0.0
  %292 = vmatpush1.msra.mxu0 %v118
  %293 = vmatprep.subr.mxu0 0.0
  %294 = vmatpush1.msra.mxu0 %v117
  %295 = vmatprep.subr.mxu0 0.0
  %296 = vmatpush1.msra.mxu0 %v116
  %297 = vmatprep.subr.mxu0 0.0
  %298 = vmatpush1.msra.mxu0 %v115
  %299 = vmatprep.subr.mxu0 0.0
  %300 = vmatpush1.msra.mxu0 %v114
  %301 = vmatprep.subr.mxu0 0.0
  %302 = vmatpush1.msra.mxu0 %v113
  %303 = vmatprep.subr.mxu0 0.0
  %304 = vmatpush1.msra.mxu0 %v112
  %305 = vmatprep.subr.mxu0 0.0
  %306 = vmatpush1.msra.mxu0 %v111
  %307 = vmatprep.subr.mxu0 0.0
  %308 = vmatpush1.msra.mxu0 %v110
  %309 = vmatprep.subr.mxu0 0.0
  %310 = vmatpush1.msra.mxu0 %v109
  %311 = vmatprep.subr.mxu0 0.0
  %312 = vmatpush1.msra.mxu0 %v108
  %313 = vmatprep.subr.mxu0 0.0
  %314 = vmatpush1.msra.mxu0 %v107
  %315 = vmatprep.subr.mxu0 0.0
  %316 = vmatpush1.msra.mxu0 %v106
  %317 = vmatprep.subr.mxu0 0.0
  %318 = vmatpush2.msra.mxu0 %v137
  %319 = vmatprep.subr.mxu0 0.0
  %320 = vmatpush2.msra.mxu0 %v136
  %321 = vmatprep.subr.mxu0 0.0
  %322 = vmatpush2.msra.mxu0 %v135
  %323 = vmatprep.subr.mxu0 0.0
  %324 = vmatpush2.msra.mxu0 %v134
  %325 = vmatprep.subr.mxu0 0.0
  %326 = vmatpush2.msra.mxu0 %v133
  %327 = vmatprep.subr.mxu0 0.0
  %328 = vmatpush2.msra.mxu0 %v132
  %329 = vmatprep.subr.mxu0 0.0
  %330 = vmatpush2.msra.mxu0 %v131
  %331 = vmatprep.subr.mxu0 0.0
  %332 = vmatpush2.msra.mxu0 %v130
  %333 = vmatprep.subr.mxu0 0.0
  %334 = vmatpush2.msra.mxu0 %v129
  %335 = vmatprep.subr.mxu0 0.0
  %336 = vmatpush2.msra.mxu0 %v128
  %337 = vmatprep.subr.mxu0 0.0
  %338 = vmatpush2.msra.mxu0 %v127
  %339 = vmatprep.subr.mxu0 0.0
  %340 = vmatpush2.msra.mxu0 %v126
  %341 = vmatprep.subr.mxu0 0.0
  %342 = vmatpush2.msra.mxu0 %v125
  %343 = vmatprep.subr.mxu0 0.0
  %344 = vmatpush2.msra.mxu0 %v124
  %345 = vmatprep.subr.mxu0 0.0
  %346 = vmatpush2.msra.mxu0 %v123
  %347 = vmatprep.subr.mxu0 0.0
  %348 = vmatpush2.msra.mxu0 %v122
  %349 = vmatprep.mubr.f32.mxu0 %v17
  %350 = vmatmul.mubr.f32.gmra.mxu0 %v16
  %v351 = vpop.f32.mrf.mxu0
  %v352 = vadd.f32 %v212, %v351
  %v353 = vpop.f32.mrf.mxu0
  %354 = vmatprep.mubr.f32.mxu0 %v21
  %355 = vmatmul.mubr.f32.gmra.mxu0 %v20
  %v356 = vpop.f32.mrf.mxu0
  %v357 = vadd.f32 %v217, %v356
  %v358 = vpop.f32.mrf.mxu0
  %359 = vmatprep.mubr.f32.mxu0 %v25
  %360 = vmatmul.mubr.f32.gmra.mxu0 %v24
  %v361 = vpop.f32.mrf.mxu0
  %v362 = vadd.f32 %v222, %v361
  %v363 = vpop.f32.mrf.mxu0
  %364 = vmatprep.mubr.f32.mxu0 %v29
  %365 = vmatmul.mubr.f32.gmra.mxu0 %v28
  %v366 = vpop.f32.mrf.mxu0
  %v367 = vadd.f32 %v227, %v366
  %v368 = vpop.f32.mrf.mxu0
  %369 = vmatprep.mubr.f32.mxu0 %v33
  %370 = vmatmul.mubr.f32.gmra.mxu0 %v32
  %v371 = vpop.f32.mrf.mxu0
  %v372 = vadd.f32 %v232, %v371
  %v373 = vpop.f32.mrf.mxu0
  %374 = vmatprep.mubr.f32.mxu0 %v37
  %375 = vmatmul.mubr.f32.gmra.mxu0 %v36
  %v376 = vpop.f32.mrf.mxu0
  %v377 = vadd.f32 %v237, %v376
  %v378 = vpop.f32.mrf.mxu0
  %379 = vmatprep.mubr.f32.mxu0 %v41
  %380 = vmatmul.mubr.f32.gmra.mxu0 %v40
  %v381 = vpop.f32.mrf.mxu0
  %v382 = vadd.f32 %v242, %v381
  %v383 = vpop.f32.mrf.mxu0
  %384 = vmatprep.mubr.f32.mxu0 %v45
  %385 = vmatmul.mubr.f32.gmra.mxu0 %v44
  %v386 = vpop.f32.mrf.mxu0
  %v387 = vadd.f32 %v247, %v386
  %v388 = vpop.f32.mrf.mxu0
  %389 = vmatprep.mubr.f32.mxu0 %v49
  %390 = vmatmul.mubr.f32.gmra.mxu0 %v48
  %v391 = vpop.f32.mrf.mxu0
  %v392 = vadd.f32 %v252, %v391
  %v393 = vpop.f32.mrf.mxu0
  %394 = vmatprep.mubr.f32.mxu0 %v53
  %395 = vmatmul.mubr.f32.gmra.mxu0 %v52
  %v396 = vpop.f32.mrf.mxu0
  %v397 = vadd.f32 %v257, %v396
  %v398 = vpop.f32.mrf.mxu0
  %399 = vmatprep.mubr.f32.mxu0 %v57
  %400 = vmatmul.mubr.f32.gmra.mxu0 %v56
  %v401 = vpop.f32.mrf.mxu0
  %v402 = vadd.f32 %v262, %v401
  %v403 = vpop.f32.mrf.mxu0
  %404 = vmatprep.mubr.f32.mxu0 %v61
  %405 = vmatmul.mubr.f32.gmra.mxu0 %v60
  %v406 = vpop.f32.mrf.mxu0
  %v407 = vadd.f32 %v267, %v406
  %v408 = vpop.f32.mrf.mxu0
  %409 = vmatprep.mubr.f32.mxu0 %v65
  %410 = vmatmul.mubr.f32.gmra.mxu0 %v64
  %v411 = vpop.f32.mrf.mxu0
  %v412 = vadd.f32 %v272, %v411
  %v413 = vpop.f32.mrf.mxu0
  %414 = vmatprep.mubr.f32.mxu0 %v69
  %415 = vmatmul.mubr.f32.gmra.mxu0 %v68
  %v416 = vpop.f32.mrf.mxu0
  %v417 = vadd.f32 %v277, %v416
  %v418 = vpop.f32.mrf.mxu0
  %419 = vmatprep.mubr.f32.mxu0 %v73
  %420 = vmatmul.mubr.f32.gmra.mxu0 %v72
  %v421 = vpop.f32.mrf.mxu0
  %v422 = vadd.f32 %v282, %v421
  %v423 = vpop.f32.mrf.mxu0
  %424 = vdwg.mxu0
  %425 = vst [vmem:[%s3] sm:$0xff] %v352
  %426 = vst [vmem:[%s3 + $0x8] sm:$0xff] %v357
  %427 = vst [vmem:[%s3 + $0x10] sm:$0xff] %v362
  %428 = vst [vmem:[%s3 + $0x18] sm:$0xff] %v367
  %429 = vst [vmem:[%s3 + $0x20] sm:$0xff] %v372
  %430 = vst [vmem:[%s3 + $0x28] sm:$0xff] %v377
  %431 = vst [vmem:[%s3 + $0x30] sm:$0xff] %v382
  %432 = vst [vmem:[%s3 + $0x38] sm:$0xff] %v387
  %433 = vst [vmem:[%s3 + $0x40] sm:$0xff] %v392
  %434 = vst [vmem:[%s3 + $0x48] sm:$0xff] %v397
  %435 = vst [vmem:[%s3 + $0x50] sm:$0xff] %v402
  %436 = vst [vmem:[%s3 + $0x58] sm:$0xff] %v407
  %437 = vst [vmem:[%s3 + $0x60] sm:$0xff] %v412
  %438 = vst [vmem:[%s3 + $0x68] sm:$0xff] %v417
  %439 = vst [vmem:[%s3 + $0x70] sm:$0xff] %v422
  // Predicated region
  $region14: #{pilotnet_forward.9} parent=0 // pred_check
    _
  $region15: #{pilotnet_forward.9} parent=0 // pred_check_branch
    %441 = sbr.rel (0) target = $region17
  $region16: #{pilotnet_forward.9} parent=0 // pred_region
    _
  $region17: #{pilotnet_forward.9} parent=0 // pred_fallthru
    _
  // Predicated region
  $region18: #{pilotnet_forward.9} parent=0 // pred_check
    _
  $region19: #{pilotnet_forward.9} parent=0 // pred_check_branch
    %443 = sbr.rel (0) target = $region21
  $region20: #{pilotnet_forward.9} parent=0 // pred_region
    _
  $region21: #{pilotnet_forward.9} parent=0 // pred_fallthru
    _

// kernel: pilotnet_forward.10
$region0: #{pilotnet_forward.10}
  #allocation0 [shape = 'u32[]', space=smem, size = 0x4, offset = 0x4, fixed_abs, tag = 'smem constant byte address 0x4 - core index']
  #allocation1 [shape = 'u32[144,128]{1,0:T(1,128)}', space=vmem, size = 0x12000, scoped, tag = 'internal scratch']
  %s0 = inlined_call_operand.vmem [shape: f32[40,640], index: 0, kind: input, shape index: {}]
  %s1 = inlined_call_operand.vmem [shape: f32[640,128], index: 1, kind: input, shape index: {}]
  %s2 = inlined_call_operand.vmem [shape: f32[1,128], index: 2, kind: input, shape index: {}]
  %s3 = inlined_call_operand.vmem [shape: f32[40,128], index: 3, kind: output, shape index: {}]
  %s4 = sld [smem:[#allocation0]]
  $region22: #{pilotnet_forward.10} parent=0
    _
  %s6 = ssub.s32 1, %s4
  %s7 = scalar_select 0, %s6, %s4
  // Predicated region
  $region2: #{pilotnet_forward.10} parent=0 // pred_check
    _
  $region3: #{pilotnet_forward.10} parent=0 // pred_check_branch
    %9 = sbr.rel (0) target = $region5
  $region4: #{pilotnet_forward.10} parent=0 // pred_region
    _
  $region5: #{pilotnet_forward.10} parent=0 // pred_fallthru
    _
  // Predicated region
  $region6: #{pilotnet_forward.10} parent=0 // pred_check
    _
  $region7: #{pilotnet_forward.10} parent=0 // pred_check_branch
    %11 = sbr.rel (0) target = $region9
  $region8: #{pilotnet_forward.10} parent=0 // pred_region
    _
  $region9: #{pilotnet_forward.10} parent=0 // pred_fallthru
    _
  // Predicated region
  $region10: #{pilotnet_forward.10} parent=0 // pred_check
    _
  $region11: #{pilotnet_forward.10} parent=0 // pred_check_branch
    %13 = sbr.rel (0) target = $region13
  $region12: #{pilotnet_forward.10} parent=0 // pred_region
    _
  $region13: #{pilotnet_forward.10} parent=0 // pred_fallthru
    _
  %v14 = vld [vmem:[%s0] sm:$0xff]
  %v15 = vld [vmem:[%s0 + $0x8] sm:$0xff]
  %v16 = vld [vmem:[%s0 + $0x10] sm:$0xff]
  %v17 = vld [vmem:[%s0 + $0x18] sm:$0xff]
  %v18 = vld [vmem:[%s0 + $0x20] sm:$0xff]
  %v19 = vld [vmem:[%s0 + $0x28] sm:$0xff]
  %v20 = vld [vmem:[%s0 + $0x30] sm:$0xff]
  %v21 = vld [vmem:[%s0 + $0x38] sm:$0xff]
  %v22 = vld [vmem:[%s0 + $0x40] sm:$0xff]
  %v23 = vld [vmem:[%s0 + $0x48] sm:$0xff]
  %v24 = vld [vmem:[%s0 + $0x50] sm:$0xff]
  %v25 = vld [vmem:[%s0 + $0x58] sm:$0xff]
  %v26 = vld [vmem:[%s0 + $0x60] sm:$0xff]
  %v27 = vld [vmem:[%s0 + $0x68] sm:$0xff]
  %v28 = vld [vmem:[%s0 + $0x70] sm:$0xff]
  %v29 = vld [vmem:[%s0 + $0x78] sm:$0xff]
  %v30 = vld [vmem:[%s0 + $0x80] sm:$0xff]
  %v31 = vld [vmem:[%s0 + $0x88] sm:$0xff]
  %v32 = vld [vmem:[%s0 + $0x90] sm:$0xff]
  %v33 = vld [vmem:[%s0 + $0x98] sm:$0xff]
  %v34 = vld [vmem:[%s0 + $0xa0] sm:$0xff]
  %v35 = vld [vmem:[%s0 + $0xa8] sm:$0xff]
  %v36 = vld [vmem:[%s0 + $0xb0] sm:$0xff]
  %v37 = vld [vmem:[%s0 + $0xb8] sm:$0xff]
  %v38 = vld [vmem:[%s0 + $0xc0] sm:$0xff]
  %v39 = vld [vmem:[%s1] sm:$0xff]
  %v40 = vld [vmem:[%s1 + $0x8] sm:$0xff]
  %v41 = vld [vmem:[%s1 + $0x10] sm:$0xff]
  %v42 = vld [vmem:[%s1 + $0x18] sm:$0xff]
  %v43 = vld [vmem:[%s1 + $0x20] sm:$0xff]
  %v44 = vld [vmem:[%s1 + $0x28] sm:$0xff]
  %v45 = vld [vmem:[%s1 + $0x30] sm:$0xff]
  %v46 = vld [vmem:[%s1 + $0x38] sm:$0xff]
  %v47 = vld [vmem:[%s1 + $0x40] sm:$0xff]
  %v48 = vld [vmem:[%s1 + $0x48] sm:$0xff]
  %v49 = vld [vmem:[%s1 + $0x50] sm:$0xff]
  %v50 = vld [vmem:[%s1 + $0x58] sm:$0xff]
  %v51 = vld [vmem:[%s1 + $0x60] sm:$0xff]
  %v52 = vld [vmem:[%s1 + $0x68] sm:$0xff]
  %v53 = vld [vmem:[%s1 + $0x70] sm:$0xff]
  %v54 = vld [vmem:[%s1 + $0x78] sm:$0xff]
  %v55 = vld [vmem:[%s1 + $0x80] sm:$0xff]
  %v56 = vld [vmem:[%s1 + $0x88] sm:$0xff]
  %v57 = vld [vmem:[%s1 + $0x90] sm:$0xff]
  %v58 = vld [vmem:[%s1 + $0x98] sm:$0xff]
  %v59 = vld [vmem:[%s1 + $0xa0] sm:$0xff]
  %v60 = vld [vmem:[%s1 + $0xa8] sm:$0xff]
  %v61 = vld [vmem:[%s1 + $0xb0] sm:$0xff]
  %v62 = vld [vmem:[%s1 + $0xb8] sm:$0xff]
  %v63 = vld [vmem:[%s1 + $0xc0] sm:$0xff]
  %v64 = vld [vmem:[%s1 + $0xc8] sm:$0xff]
  %v65 = vld [vmem:[%s1 + $0xd0] sm:$0xff]
  %v66 = vld [vmem:[%s1 + $0xd8] sm:$0xff]
  %v67 = vld [vmem:[%s1 + $0xe0] sm:$0xff]
  %v68 = vld [vmem:[%s1 + $0xe8] sm:$0xff]
  %v69 = vld [vmem:[%s1 + $0xf0] sm:$0xff]
  %v70 = vld [vmem:[%s1 + $0xf8] sm:$0xff]
  %v71 = vld [vmem:[%s1 + $0x100] sm:$0xff]
  %v72 = vld [vmem:[%s1 + $0x108] sm:$0xff]
  %v73 = vld [vmem:[%s1 + $0x110] sm:$0xff]
  %v74 = vld [vmem:[%s1 + $0x118] sm:$0xff]
  %v75 = vld [vmem:[%s1 + $0x120] sm:$0xff]
  %v76 = vld [vmem:[%s1 + $0x128] sm:$0xff]
  %v77 = vld [vmem:[%s1 + $0x130] sm:$0xff]
  %v78 = vld [vmem:[%s1 + $0x138] sm:$0xff]
  %v79 = vld [vmem:[%s1 + $0x140] sm:$0xff]
  %v80 = vld [vmem:[%s1 + $0x148] sm:$0xff]
  %v81 = vld [vmem:[%s1 + $0x150] sm:$0xff]
  %v82 = vld [vmem:[%s1 + $0x158] sm:$0xff]
  %v83 = vld [vmem:[%s1 + $0x160] sm:$0xff]
  %v84 = vld [vmem:[%s1 + $0x168] sm:$0xff]
  %v85 = vld [vmem:[%s1 + $0x170] sm:$0xff]
  %v86 = vld [vmem:[%s1 + $0x178] sm:$0xff]
  %v87 = vld [vmem:[%s1 + $0x180] sm:$0xff]
  %v88 = vld [vmem:[%s1 + $0x188] sm:$0xff]
  %v89 = vld [vmem:[%s1 + $0x190] sm:$0xff]
  %v90 = vld [vmem:[%s1 + $0x198] sm:$0xff]
  %v91 = vld [vmem:[%s1 + $0x1a0] sm:$0xff]
  %v92 = vld [vmem:[%s1 + $0x1a8] sm:$0xff]
  %v93 = vld [vmem:[%s1 + $0x1b0] sm:$0xff]
  %v94 = vld [vmem:[%s1 + $0x1b8] sm:$0xff]
  %v95 = vld [vmem:[%s1 + $0x1c0] sm:$0xff]
  %v96 = vld [vmem:[%s1 + $0x1c8] sm:$0xff]
  %v97 = vld [vmem:[%s1 + $0x1d0] sm:$0xff]
  %v98 = vld [vmem:[%s1 + $0x1d8] sm:$0xff]
  %v99 = vld [vmem:[%s1 + $0x1e0] sm:$0xff]
  %v100 = vld [vmem:[%s1 + $0x1e8] sm:$0xff]
  %v101 = vld [vmem:[%s1 + $0x1f0] sm:$0xff]
  %v102 = vld [vmem:[%s1 + $0x1f8] sm:$0xff]
  %v103 = vld [vmem:[%s1 + $0x200] sm:$0xff]
  %v104 = vld [vmem:[%s1 + $0x208] sm:$0xff]
  %v105 = vld [vmem:[%s1 + $0x210] sm:$0xff]
  %v106 = vld [vmem:[%s1 + $0x218] sm:$0xff]
  %v107 = vld [vmem:[%s1 + $0x220] sm:$0xff]
  %v108 = vld [vmem:[%s1 + $0x228] sm:$0xff]
  %v109 = vld [vmem:[%s1 + $0x230] sm:$0xff]
  %v110 = vld [vmem:[%s1 + $0x238] sm:$0xff]
  %v111 = vld [vmem:[%s1 + $0x240] sm:$0xff]
  %v112 = vld [vmem:[%s1 + $0x248] sm:$0xff]
  %v113 = vld [vmem:[%s1 + $0x250] sm:$0xff]
  %v114 = vld [vmem:[%s1 + $0x258] sm:$0xff]
  %v115 = vld [vmem:[%s1 + $0x260] sm:$0xff]
  %v116 = vld [vmem:[%s1 + $0x268] sm:$0xff]
  %v117 = vld [vmem:[%s1 + $0x270] sm:$0xff]
  %v118 = vld [vmem:[%s1 + $0x278] sm:$0xff]
  %v119 = vld [vmem:[%s2] sm:$0x1]
  %v121 = vlaneseq
  %v122 = vshrl.u32 %v121, 7
  %v123 = vsub.s32 0, %v122
  %v124 = vrot.slane %v119, %v123
  %126 = vmatprep.subr.mxu0 0.0
  %127 = vmatpush1.msra.mxu0 %v54
  %128 = vmatprep.subr.mxu0 0.0
  %129 = vmatpush1.msra.mxu0 %v53
  %130 = vmatprep.subr.mxu0 0.0
  %131 = vmatpush1.msra.mxu0 %v52
  %132 = vmatprep.subr.mxu0 0.0
  %133 = vmatpush1.msra.mxu0 %v51
  %134 = vmatprep.subr.mxu0 0.0
  %135 = vmatpush1.msra.mxu0 %v50
  %136 = vmatprep.subr.mxu0 0.0
  %137 = vmatpush1.msra.mxu0 %v49
  %138 = vmatprep.subr.mxu0 0.0
  %139 = vmatpush1.msra.mxu0 %v48
  %140 = vmatprep.subr.mxu0 0.0
  %141 = vmatpush1.msra.mxu0 %v47
  %142 = vmatprep.subr.mxu0 0.0
  %143 = vmatpush1.msra.mxu0 %v46
  %144 = vmatprep.subr.mxu0 0.0
  %145 = vmatpush1.msra.mxu0 %v45
  %146 = vmatprep.subr.mxu0 0.0
  %147 = vmatpush1.msra.mxu0 %v44
  %148 = vmatprep.subr.mxu0 0.0
  %149 = vmatpush1.msra.mxu0 %v43
  %150 = vmatprep.subr.mxu0 0.0
  %151 = vmatpush1.msra.mxu0 %v42
  %152 = vmatprep.subr.mxu0 0.0
  %153 = vmatpush1.msra.mxu0 %v41
  %154 = vmatprep.subr.mxu0 0.0
  %155 = vmatpush1.msra.mxu0 %v40
  %156 = vmatprep.subr.mxu0 0.0
  %157 = vmatpush1.msra.mxu0 %v39
  %158 = vmatprep.subr.mxu0 0.0
  %159 = vmatpush2.msra.mxu0 %v70
  %160 = vmatprep.subr.mxu0 0.0
  %161 = vmatpush2.msra.mxu0 %v69
  %162 = vmatprep.subr.mxu0 0.0
  %163 = vmatpush2.msra.mxu0 %v68
  %164 = vmatprep.subr.mxu0 0.0
  %165 = vmatpush2.msra.mxu0 %v67
  %166 = vmatprep.subr.mxu0 0.0
  %167 = vmatpush2.msra.mxu0 %v66
  %168 = vmatprep.subr.mxu0 0.0
  %169 = vmatpush2.msra.mxu0 %v65
  %170 = vmatprep.subr.mxu0 0.0
  %171 = vmatpush2.msra.mxu0 %v64
  %172 = vmatprep.subr.mxu0 0.0
  %173 = vmatpush2.msra.mxu0 %v63
  %174 = vmatprep.subr.mxu0 0.0
  %175 = vmatpush2.msra.mxu0 %v62
  %176 = vmatprep.subr.mxu0 0.0
  %177 = vmatpush2.msra.mxu0 %v61
  %178 = vmatprep.subr.mxu0 0.0
  %179 = vmatpush2.msra.mxu0 %v60
  %180 = vmatprep.subr.mxu0 0.0
  %181 = vmatpush2.msra.mxu0 %v59
  %182 = vmatprep.subr.mxu0 0.0
  %183 = vmatpush2.msra.mxu0 %v58
  %184 = vmatprep.subr.mxu0 0.0
  %185 = vmatpush2.msra.mxu0 %v57
  %186 = vmatprep.subr.mxu0 0.0
  %187 = vmatpush2.msra.mxu0 %v56
  %188 = vmatprep.subr.mxu0 0.0
  %189 = vmatpush2.msra.mxu0 %v55
  %190 = vmatprep.mubr.f32.mxu0 %v15
  %191 = vmatmul.mubr.f32.gmra.mxu0 %v14
  %v192 = vpop.f32.mrf.mxu0
  %v193 = vadd.f32 %v124, %v192
  %v194 = vpop.f32.mrf.mxu0
  %195 = vmatprep.mubr.f32.mxu0 %v20
  %196 = vmatmul.mubr.f32.gmra.mxu0 %v19
  %v197 = vpop.f32.mrf.mxu0
  %v198 = vadd.f32 %v124, %v197
  %v199 = vpop.f32.mrf.mxu0
  %200 = vmatprep.mubr.f32.mxu0 %v25
  %201 = vmatmul.mubr.f32.gmra.mxu0 %v24
  %v202 = vpop.f32.mrf.mxu0
  %v203 = vadd.f32 %v124, %v202
  %v204 = vpop.f32.mrf.mxu0
  %205 = vmatprep.mubr.f32.mxu0 %v30
  %206 = vmatmul.mubr.f32.gmra.mxu0 %v29
  %v207 = vpop.f32.mrf.mxu0
  %v208 = vadd.f32 %v124, %v207
  %v209 = vpop.f32.mrf.mxu0
  %210 = vmatprep.mubr.f32.mxu0 %v35
  %211 = vmatmul.mubr.f32.gmra.mxu0 %v34
  %v212 = vpop.f32.mrf.mxu0
  %v213 = vadd.f32 %v124, %v212
  %v214 = vpop.f32.mrf.mxu0
  %215 = vdwg.mxu0
  %216 = vmatprep.subr.mxu0 0.0
  %217 = vmatpush1.msra.mxu0 %v86
  %218 = vmatprep.subr.mxu0 0.0
  %219 = vmatpush1.msra.mxu0 %v85
  %220 = vmatprep.subr.mxu0 0.0
  %221 = vmatpush1.msra.mxu0 %v84
  %222 = vmatprep.subr.mxu0 0.0
  %223 = vmatpush1.msra.mxu0 %v83
  %224 = vmatprep.subr.mxu0 0.0
  %225 = vmatpush1.msra.mxu0 %v82
  %226 = vmatprep.subr.mxu0 0.0
  %227 = vmatpush1.msra.mxu0 %v81
  %228 = vmatprep.subr.mxu0 0.0
  %229 = vmatpush1.msra.mxu0 %v80
  %230 = vmatprep.subr.mxu0 0.0
  %231 = vmatpush1.msra.mxu0 %v79
  %232 = vmatprep.subr.mxu0 0.0
  %233 = vmatpush1.msra.mxu0 %v78
  %234 = vmatprep.subr.mxu0 0.0
  %235 = vmatpush1.msra.mxu0 %v77
  %236 = vmatprep.subr.mxu0 0.0
  %237 = vmatpush1.msra.mxu0 %v76
  %238 = vmatprep.subr.mxu0 0.0
  %239 = vmatpush1.msra.mxu0 %v75
  %240 = vmatprep.subr.mxu0 0.0
  %241 = vmatpush1.msra.mxu0 %v74
  %242 = vmatprep.subr.mxu0 0.0
  %243 = vmatpush1.msra.mxu0 %v73
  %244 = vmatprep.subr.mxu0 0.0
  %245 = vmatpush1.msra.mxu0 %v72
  %246 = vmatprep.subr.mxu0 0.0
  %247 = vmatpush1.msra.mxu0 %v71
  %248 = vmatprep.subr.mxu0 0.0
  %249 = vmatpush2.msra.mxu0 %v102
  %250 = vmatprep.subr.mxu0 0.0
  %251 = vmatpush2.msra.mxu0 %v101
  %252 = vmatprep.subr.mxu0 0.0
  %253 = vmatpush2.msra.mxu0 %v100
  %254 = vmatprep.subr.mxu0 0.0
  %255 = vmatpush2.msra.mxu0 %v99
  %256 = vmatprep.subr.mxu0 0.0
  %257 = vmatpush2.msra.mxu0 %v98
  %258 = vmatprep.subr.mxu0 0.0
  %259 = vmatpush2.msra.mxu0 %v97
  %260 = vmatprep.subr.mxu0 0.0
  %261 = vmatpush2.msra.mxu0 %v96
  %262 = vmatprep.subr.mxu0 0.0
  %263 = vmatpush2.msra.mxu0 %v95
  %264 = vmatprep.subr.mxu0 0.0
  %265 = vmatpush2.msra.mxu0 %v94
  %266 = vmatprep.subr.mxu0 0.0
  %267 = vmatpush2.msra.mxu0 %v93
  %268 = vmatprep.subr.mxu0 0.0
  %269 = vmatpush2.msra.mxu0 %v92
  %270 = vmatprep.subr.mxu0 0.0
  %271 = vmatpush2.msra.mxu0 %v91
  %272 = vmatprep.subr.mxu0 0.0
  %273 = vmatpush2.msra.mxu0 %v90
  %274 = vmatprep.subr.mxu0 0.0
  %275 = vmatpush2.msra.mxu0 %v89
  %276 = vmatprep.subr.mxu0 0.0
  %277 = vmatpush2.msra.mxu0 %v88
  %278 = vmatprep.subr.mxu0 0.0
  %279 = vmatpush2.msra.mxu0 %v87
  %280 = vmatprep.mubr.f32.mxu0 %v17
  %281 = vmatmul.mubr.f32.gmra.mxu0 %v16
  %v282 = vpop.f32.mrf.mxu0
  %v283 = vadd.f32 %v193, %v282
  %v284 = vpop.f32.mrf.mxu0
  %285 = vmatprep.mubr.f32.mxu0 %v22
  %286 = vmatmul.mubr.f32.gmra.mxu0 %v21
  %v287 = vpop.f32.mrf.mxu0
  %v288 = vadd.f32 %v198, %v287
  %v289 = vpop.f32.mrf.mxu0
  %290 = vmatprep.mubr.f32.mxu0 %v27
  %291 = vmatmul.mubr.f32.gmra.mxu0 %v26
  %v292 = vpop.f32.mrf.mxu0
  %v293 = vadd.f32 %v203, %v292
  %v294 = vpop.f32.mrf.mxu0
  %295 = vmatprep.mubr.f32.mxu0 %v32
  %296 = vmatmul.mubr.f32.gmra.mxu0 %v31
  %v297 = vpop.f32.mrf.mxu0
  %v298 = vadd.f32 %v208, %v297
  %v299 = vpop.f32.mrf.mxu0
  %300 = vmatprep.mubr.f32.mxu0 %v37
  %301 = vmatmul.mubr.f32.gmra.mxu0 %v36
  %v302 = vpop.f32.mrf.mxu0
  %v303 = vadd.f32 %v213, %v302
  %v304 = vpop.f32.mrf.mxu0
  %305 = vdwg.mxu0
  %306 = vmatprep.subr.mxu0 0.0
  %307 = vmatpush1.msra.mxu0 %v118
  %308 = vmatprep.subr.mxu0 0.0
  %309 = vmatpush1.msra.mxu0 %v117
  %310 = vmatprep.subr.mxu0 0.0
  %311 = vmatpush1.msra.mxu0 %v116
  %312 = vmatprep.subr.mxu0 0.0
  %313 = vmatpush1.msra.mxu0 %v115
  %314 = vmatprep.subr.mxu0 0.0
  %315 = vmatpush1.msra.mxu0 %v114
  %316 = vmatprep.subr.mxu0 0.0
  %317 = vmatpush1.msra.mxu0 %v113
  %318 = vmatprep.subr.mxu0 0.0
  %319 = vmatpush1.msra.mxu0 %v112
  %320 = vmatprep.subr.mxu0 0.0
  %321 = vmatpush1.msra.mxu0 %v111
  %322 = vmatprep.subr.mxu0 0.0
  %323 = vmatpush1.msra.mxu0 %v110
  %324 = vmatprep.subr.mxu0 0.0
  %325 = vmatpush1.msra.mxu0 %v109
  %326 = vmatprep.subr.mxu0 0.0
  %327 = vmatpush1.msra.mxu0 %v108
  %328 = vmatprep.subr.mxu0 0.0
  %329 = vmatpush1.msra.mxu0 %v107
  %330 = vmatprep.subr.mxu0 0.0
  %331 = vmatpush1.msra.mxu0 %v106
  %332 = vmatprep.subr.mxu0 0.0
  %333 = vmatpush1.msra.mxu0 %v105
  %334 = vmatprep.subr.mxu0 0.0
  %335 = vmatpush1.msra.mxu0 %v104
  %336 = vmatprep.subr.mxu0 0.0
  %337 = vmatpush1.msra.mxu0 %v103
  %338 = vmatprep.subr.mxu0 0.0
  %339 = vmatpush2.msra.mxu0 0.0
  %340 = vmatprep.subr.mxu0 0.0
  %341 = vmatpush2.msra.mxu0 0.0
  %342 = vmatprep.subr.mxu0 0.0
  %343 = vmatpush2.msra.mxu0 0.0
  %344 = vmatprep.subr.mxu0 0.0
  %345 = vmatpush2.msra.mxu0 0.0
  %346 = vmatprep.subr.mxu0 0.0
  %347 = vmatpush2.msra.mxu0 0.0
  %348 = vmatprep.subr.mxu0 0.0
  %349 = vmatpush2.msra.mxu0 0.0
  %350 = vmatprep.subr.mxu0 0.0
  %351 = vmatpush2.msra.mxu0 0.0
  %352 = vmatprep.subr.mxu0 0.0
  %353 = vmatpush2.msra.mxu0 0.0
  %354 = vmatprep.subr.mxu0 0.0
  %355 = vmatpush2.msra.mxu0 0.0
  %356 = vmatprep.subr.mxu0 0.0
  %357 = vmatpush2.msra.mxu0 0.0
  %358 = vmatprep.subr.mxu0 0.0
  %359 = vmatpush2.msra.mxu0 0.0
  %360 = vmatprep.subr.mxu0 0.0
  %361 = vmatpush2.msra.mxu0 0.0
  %362 = vmatprep.subr.mxu0 0.0
  %363 = vmatpush2.msra.mxu0 0.0
  %364 = vmatprep.subr.mxu0 0.0
  %365 = vmatpush2.msra.mxu0 0.0
  %366 = vmatprep.subr.mxu0 0.0
  %367 = vmatpush2.msra.mxu0 0.0
  %368 = vmatprep.subr.mxu0 0.0
  %369 = vmatpush2.msra.mxu0 0.0
  %370 = vmatprep.mubr.f32.mxu0 0.0
  %371 = vmatmul.mubr.f32.gmra.mxu0 %v18
  %v372 = vpop.f32.mrf.mxu0
  %v373 = vadd.f32 %v283, %v372
  %v374 = vpop.f32.mrf.mxu0
  %375 = vmatprep.mubr.f32.mxu0 0.0
  %376 = vmatmul.mubr.f32.gmra.mxu0 %v23
  %v377 = vpop.f32.mrf.mxu0
  %v378 = vadd.f32 %v288, %v377
  %v379 = vpop.f32.mrf.mxu0
  %380 = vmatprep.mubr.f32.mxu0 0.0
  %381 = vmatmul.mubr.f32.gmra.mxu0 %v28
  %v382 = vpop.f32.mrf.mxu0
  %v383 = vadd.f32 %v293, %v382
  %v384 = vpop.f32.mrf.mxu0
  %385 = vmatprep.mubr.f32.mxu0 0.0
  %386 = vmatmul.mubr.f32.gmra.mxu0 %v33
  %v387 = vpop.f32.mrf.mxu0
  %v388 = vadd.f32 %v298, %v387
  %v389 = vpop.f32.mrf.mxu0
  %390 = vmatprep.mubr.f32.mxu0 0.0
  %391 = vmatmul.mubr.f32.gmra.mxu0 %v38
  %v392 = vpop.f32.mrf.mxu0
  %v393 = vadd.f32 %v303, %v392
  %v394 = vpop.f32.mrf.mxu0
  %395 = vdwg.mxu0
  %396 = vst [vmem:[%s3] sm:$0xff] %v373
  %397 = vst [vmem:[%s3 + $0x8] sm:$0xff] %v378
  %398 = vst [vmem:[%s3 + $0x10] sm:$0xff] %v383
  %399 = vst [vmem:[%s3 + $0x18] sm:$0xff] %v388
  %400 = vst [vmem:[%s3 + $0x20] sm:$0xff] %v393
  // Predicated region
  $region14: #{pilotnet_forward.10} parent=0 // pred_check
    _
  $region15: #{pilotnet_forward.10} parent=0 // pred_check_branch
    %402 = sbr.rel (0) target = $region17
  $region16: #{pilotnet_forward.10} parent=0 // pred_region
    _
  $region17: #{pilotnet_forward.10} parent=0 // pred_fallthru
    _
  // Predicated region
  $region18: #{pilotnet_forward.10} parent=0 // pred_check
    _
  $region19: #{pilotnet_forward.10} parent=0 // pred_check_branch
    %404 = sbr.rel (0) target = $region21
  $region20: #{pilotnet_forward.10} parent=0 // pred_region
    _
  $region21: #{pilotnet_forward.10} parent=0 // pred_fallthru
    _

// kernel: pilotnet_forward.11
$region0: #{pilotnet_forward.11}
  #allocation0 [shape = 'u32[]', space=smem, size = 0x4, offset = 0x4, fixed_abs, tag = 'smem constant byte address 0x4 - core index']
  #allocation1 [shape = 'u32[144,128]{1,0:T(1,128)}', space=vmem, size = 0x12000, scoped, tag = 'internal scratch']
  %s0 = inlined_call_operand.vmem [shape: f32[8,1152], index: 0, kind: input, shape index: {}]
  %s1 = inlined_call_operand.vmem [shape: f32[1152,128], index: 1, kind: input, shape index: {}]
  %s2 = inlined_call_operand.vmem [shape: f32[1,128], index: 2, kind: input, shape index: {}]
  %s3 = inlined_call_operand.vmem [shape: f32[128,128], index: 3, kind: input, shape index: {}]
  %s4 = inlined_call_operand.vmem [shape: f32[1,128], index: 4, kind: input, shape index: {}]
  %s5 = inlined_call_operand.vmem [shape: f32[128,128], index: 5, kind: input, shape index: {}]
  %s6 = inlined_call_operand.vmem [shape: f32[1,128], index: 6, kind: input, shape index: {}]
  %s7 = inlined_call_operand.vmem [shape: f32[128,128], index: 7, kind: input, shape index: {}]
  %s8 = inlined_call_operand.vmem [shape: f32[1,128], index: 8, kind: input, shape index: {}]
  %s9 = inlined_call_operand.vmem [shape: f32[8,128], index: 9, kind: output, shape index: {}]
  %s10 = sld [smem:[#allocation0]]
  $region46: #{pilotnet_forward.11} parent=0
    _
  %s12 = ssub.s32 1, %s10
  %s13 = scalar_select 0, %s12, %s10
  // Predicated region
  $region2: #{pilotnet_forward.11} parent=0 // pred_check
    _
  $region3: #{pilotnet_forward.11} parent=0 // pred_check_branch
    %15 = sbr.rel (0) target = $region5
  $region4: #{pilotnet_forward.11} parent=0 // pred_region
    _
  $region5: #{pilotnet_forward.11} parent=0 // pred_fallthru
    _
  // Predicated region
  $region6: #{pilotnet_forward.11} parent=0 // pred_check
    _
  $region7: #{pilotnet_forward.11} parent=0 // pred_check_branch
    %17 = sbr.rel (0) target = $region9
  $region8: #{pilotnet_forward.11} parent=0 // pred_region
    _
  $region9: #{pilotnet_forward.11} parent=0 // pred_fallthru
    _
  // Predicated region
  $region10: #{pilotnet_forward.11} parent=0 // pred_check
    _
  $region11: #{pilotnet_forward.11} parent=0 // pred_check_branch
    %19 = sbr.rel (0) target = $region13
  $region12: #{pilotnet_forward.11} parent=0 // pred_region
    _
  $region13: #{pilotnet_forward.11} parent=0 // pred_fallthru
    _
  // Predicated region
  $region14: #{pilotnet_forward.11} parent=0 // pred_check
    _
  $region15: #{pilotnet_forward.11} parent=0 // pred_check_branch
    %21 = sbr.rel (0) target = $region17
  $region16: #{pilotnet_forward.11} parent=0 // pred_region
    _
  $region17: #{pilotnet_forward.11} parent=0 // pred_fallthru
    _
  // Predicated region
  $region18: #{pilotnet_forward.11} parent=0 // pred_check
    _
  $region19: #{pilotnet_forward.11} parent=0 // pred_check_branch
    %23 = sbr.rel (0) target = $region21
  $region20: #{pilotnet_forward.11} parent=0 // pred_region
    _
  $region21: #{pilotnet_forward.11} parent=0 // pred_fallthru
    _
  // Predicated region
  $region22: #{pilotnet_forward.11} parent=0 // pred_check
    _
  $region23: #{pilotnet_forward.11} parent=0 // pred_check_branch
    %25 = sbr.rel (0) target = $region25
  $region24: #{pilotnet_forward.11} parent=0 // pred_region
    _
  $region25: #{pilotnet_forward.11} parent=0 // pred_fallthru
    _
  // Predicated region
  $region26: #{pilotnet_forward.11} parent=0 // pred_check
    _
  $region27: #{pilotnet_forward.11} parent=0 // pred_check_branch
    %27 = sbr.rel (0) target = $region29
  $region28: #{pilotnet_forward.11} parent=0 // pred_region
    _
  $region29: #{pilotnet_forward.11} parent=0 // pred_fallthru
    _
  // Predicated region
  $region30: #{pilotnet_forward.11} parent=0 // pred_check
    _
  $region31: #{pilotnet_forward.11} parent=0 // pred_check_branch
    %29 = sbr.rel (0) target = $region33
  $region32: #{pilotnet_forward.11} parent=0 // pred_region
    _
  $region33: #{pilotnet_forward.11} parent=0 // pred_fallthru
    _
  // Predicated region
  $region34: #{pilotnet_forward.11} parent=0 // pred_check
    _
  $region35: #{pilotnet_forward.11} parent=0 // pred_check_branch
    %31 = sbr.rel (0) target = $region37
  $region36: #{pilotnet_forward.11} parent=0 // pred_region
    _
  $region37: #{pilotnet_forward.11} parent=0 // pred_fallthru
    _
  %v32 = vld [vmem:[%s0] sm:$0xff]
  %v33 = vld [vmem:[%s0 + $0x8] sm:$0xff]
  %v34 = vld [vmem:[%s0 + $0x10] sm:$0xff]
  %v35 = vld [vmem:[%s0 + $0x18] sm:$0xff]
  %v36 = vld [vmem:[%s0 + $0x20] sm:$0xff]
  %v37 = vld [vmem:[%s0 + $0x28] sm:$0xff]
  %v38 = vld [vmem:[%s0 + $0x30] sm:$0xff]
  %v39 = vld [vmem:[%s0 + $0x38] sm:$0xff]
  %v40 = vld [vmem:[%s0 + $0x40] sm:$0xff]
  %v41 = vld [vmem:[%s1] sm:$0xff]
  %v42 = vld [vmem:[%s1 + $0x8] sm:$0xff]
  %v43 = vld [vmem:[%s1 + $0x10] sm:$0xff]
  %v44 = vld [vmem:[%s1 + $0x18] sm:$0xff]
  %v45 = vld [vmem:[%s1 + $0x20] sm:$0xff]
  %v46 = vld [vmem:[%s1 + $0x28] sm:$0xff]
  %v47 = vld [vmem:[%s1 + $0x30] sm:$0xff]
  %v48 = vld [vmem:[%s1 + $0x38] sm:$0xff]
  %v49 = vld [vmem:[%s1 + $0x40] sm:$0xff]
  %v50 = vld [vmem:[%s1 + $0x48] sm:$0xff]
  %v51 = vld [vmem:[%s1 + $0x50] sm:$0xff]
  %v52 = vld [vmem:[%s1 + $0x58] sm:$0xff]
  %v53 = vld [vmem:[%s1 + $0x60] sm:$0xff]
  %v54 = vld [vmem:[%s1 + $0x68] sm:$0xff]
  %v55 = vld [vmem:[%s1 + $0x70] sm:$0xff]
  %v56 = vld [vmem:[%s1 + $0x78] sm:$0xff]
  %v57 = vld [vmem:[%s1 + $0x80] sm:$0xff]
  %v58 = vld [vmem:[%s1 + $0x88] sm:$0xff]
  %v59 = vld [vmem:[%s1 + $0x90] sm:$0xff]
  %v60 = vld [vmem:[%s1 + $0x98] sm:$0xff]
  %v61 = vld [vmem:[%s1 + $0xa0] sm:$0xff]
  %v62 = vld [vmem:[%s1 + $0xa8] sm:$0xff]
  %v63 = vld [vmem:[%s1 + $0xb0] sm:$0xff]
  %v64 = vld [vmem:[%s1 + $0xb8] sm:$0xff]
  %v65 = vld [vmem:[%s1 + $0xc0] sm:$0xff]
  %v66 = vld [vmem:[%s1 + $0xc8] sm:$0xff]
  %v67 = vld [vmem:[%s1 + $0xd0] sm:$0xff]
  %v68 = vld [vmem:[%s1 + $0xd8] sm:$0xff]
  %v69 = vld [vmem:[%s1 + $0xe0] sm:$0xff]
  %v70 = vld [vmem:[%s1 + $0xe8] sm:$0xff]
  %v71 = vld [vmem:[%s1 + $0xf0] sm:$0xff]
  %v72 = vld [vmem:[%s1 + $0xf8] sm:$0xff]
  %v73 = vld [vmem:[%s1 + $0x100] sm:$0xff]
  %v74 = vld [vmem:[%s1 + $0x108] sm:$0xff]
  %v75 = vld [vmem:[%s1 + $0x110] sm:$0xff]
  %v76 = vld [vmem:[%s1 + $0x118] sm:$0xff]
  %v77 = vld [vmem:[%s1 + $0x120] sm:$0xff]
  %v78 = vld [vmem:[%s1 + $0x128] sm:$0xff]
  %v79 = vld [vmem:[%s1 + $0x130] sm:$0xff]
  %v80 = vld [vmem:[%s1 + $0x138] sm:$0xff]
  %v81 = vld [vmem:[%s1 + $0x140] sm:$0xff]
  %v82 = vld [vmem:[%s1 + $0x148] sm:$0xff]
  %v83 = vld [vmem:[%s1 + $0x150] sm:$0xff]
  %v84 = vld [vmem:[%s1 + $0x158] sm:$0xff]
  %v85 = vld [vmem:[%s1 + $0x160] sm:$0xff]
  %v86 = vld [vmem:[%s1 + $0x168] sm:$0xff]
  %v87 = vld [vmem:[%s1 + $0x170] sm:$0xff]
  %v88 = vld [vmem:[%s1 + $0x178] sm:$0xff]
  %v89 = vld [vmem:[%s1 + $0x180] sm:$0xff]
  %v90 = vld [vmem:[%s1 + $0x188] sm:$0xff]
  %v91 = vld [vmem:[%s1 + $0x190] sm:$0xff]
  %v92 = vld [vmem:[%s1 + $0x198] sm:$0xff]
  %v93 = vld [vmem:[%s1 + $0x1a0] sm:$0xff]
  %v94 = vld [vmem:[%s1 + $0x1a8] sm:$0xff]
  %v95 = vld [vmem:[%s1 + $0x1b0] sm:$0xff]
  %v96 = vld [vmem:[%s1 + $0x1b8] sm:$0xff]
  %v97 = vld [vmem:[%s1 + $0x1c0] sm:$0xff]
  %v98 = vld [vmem:[%s1 + $0x1c8] sm:$0xff]
  %v99 = vld [vmem:[%s1 + $0x1d0] sm:$0xff]
  %v100 = vld [vmem:[%s1 + $0x1d8] sm:$0xff]
  %v101 = vld [vmem:[%s1 + $0x1e0] sm:$0xff]
  %v102 = vld [vmem:[%s1 + $0x1e8] sm:$0xff]
  %v103 = vld [vmem:[%s1 + $0x1f0] sm:$0xff]
  %v104 = vld [vmem:[%s1 + $0x1f8] sm:$0xff]
  %v105 = vld [vmem:[%s1 + $0x200] sm:$0xff]
  %v106 = vld [vmem:[%s1 + $0x208] sm:$0xff]
  %v107 = vld [vmem:[%s1 + $0x210] sm:$0xff]
  %v108 = vld [vmem:[%s1 + $0x218] sm:$0xff]
  %v109 = vld [vmem:[%s1 + $0x220] sm:$0xff]
  %v110 = vld [vmem:[%s1 + $0x228] sm:$0xff]
  %v111 = vld [vmem:[%s1 + $0x230] sm:$0xff]
  %v112 = vld [vmem:[%s1 + $0x238] sm:$0xff]
  %v113 = vld [vmem:[%s1 + $0x240] sm:$0xff]
  %v114 = vld [vmem:[%s1 + $0x248] sm:$0xff]
  %v115 = vld [vmem:[%s1 + $0x250] sm:$0xff]
  %v116 = vld [vmem:[%s1 + $0x258] sm:$0xff]
  %v117 = vld [vmem:[%s1 + $0x260] sm:$0xff]
  %v118 = vld [vmem:[%s1 + $0x268] sm:$0xff]
  %v119 = vld [vmem:[%s1 + $0x270] sm:$0xff]
  %v120 = vld [vmem:[%s1 + $0x278] sm:$0xff]
  %v121 = vld [vmem:[%s1 + $0x280] sm:$0xff]
  %v122 = vld [vmem:[%s1 + $0x288] sm:$0xff]
  %v123 = vld [vmem:[%s1 + $0x290] sm:$0xff]
  %v124 = vld [vmem:[%s1 + $0x298] sm:$0xff]
  %v125 = vld [vmem:[%s1 + $0x2a0] sm:$0xff]
  %v126 = vld [vmem:[%s1 + $0x2a8] sm:$0xff]
  %v127 = vld [vmem:[%s1 + $0x2b0] sm:$0xff]
  %v128 = vld [vmem:[%s1 + $0x2b8] sm:$0xff]
  %v129 = vld [vmem:[%s1 + $0x2c0] sm:$0xff]
  %v130 = vld [vmem:[%s1 + $0x2c8] sm:$0xff]
  %v131 = vld [vmem:[%s1 + $0x2d0] sm:$0xff]
  %v132 = vld [vmem:[%s1 + $0x2d8] sm:$0xff]
  %v133 = vld [vmem:[%s1 + $0x2e0] sm:$0xff]
  %v134 = vld [vmem:[%s1 + $0x2e8] sm:$0xff]
  %v135 = vld [vmem:[%s1 + $0x2f0] sm:$0xff]
  %v136 = vld [vmem:[%s1 + $0x2f8] sm:$0xff]
  %v137 = vld [vmem:[%s1 + $0x300] sm:$0xff]
  %v138 = vld [vmem:[%s1 + $0x308] sm:$0xff]
  %v139 = vld [vmem:[%s1 + $0x310] sm:$0xff]
  %v140 = vld [vmem:[%s1 + $0x318] sm:$0xff]
  %v141 = vld [vmem:[%s1 + $0x320] sm:$0xff]
  %v142 = vld [vmem:[%s1 + $0x328] sm:$0xff]
  %v143 = vld [vmem:[%s1 + $0x330] sm:$0xff]
  %v144 = vld [vmem:[%s1 + $0x338] sm:$0xff]
  %v145 = vld [vmem:[%s1 + $0x340] sm:$0xff]
  %v146 = vld [vmem:[%s1 + $0x348] sm:$0xff]
  %v147 = vld [vmem:[%s1 + $0x350] sm:$0xff]
  %v148 = vld [vmem:[%s1 + $0x358] sm:$0xff]
  %v149 = vld [vmem:[%s1 + $0x360] sm:$0xff]
  %v150 = vld [vmem:[%s1 + $0x368] sm:$0xff]
  %v151 = vld [vmem:[%s1 + $0x370] sm:$0xff]
  %v152 = vld [vmem:[%s1 + $0x378] sm:$0xff]
  %v153 = vld [vmem:[%s1 + $0x380] sm:$0xff]
  %v154 = vld [vmem:[%s1 + $0x388] sm:$0xff]
  %v155 = vld [vmem:[%s1 + $0x390] sm:$0xff]
  %v156 = vld [vmem:[%s1 + $0x398] sm:$0xff]
  %v157 = vld [vmem:[%s1 + $0x3a0] sm:$0xff]
  %v158 = vld [vmem:[%s1 + $0x3a8] sm:$0xff]
  %v159 = vld [vmem:[%s1 + $0x3b0] sm:$0xff]
  %v160 = vld [vmem:[%s1 + $0x3b8] sm:$0xff]
  %v161 = vld [vmem:[%s1 + $0x3c0] sm:$0xff]
  %v162 = vld [vmem:[%s1 + $0x3c8] sm:$0xff]
  %v163 = vld [vmem:[%s1 + $0x3d0] sm:$0xff]
  %v164 = vld [vmem:[%s1 + $0x3d8] sm:$0xff]
  %v165 = vld [vmem:[%s1 + $0x3e0] sm:$0xff]
  %v166 = vld [vmem:[%s1 + $0x3e8] sm:$0xff]
  %v167 = vld [vmem:[%s1 + $0x3f0] sm:$0xff]
  %v168 = vld [vmem:[%s1 + $0x3f8] sm:$0xff]
  %v169 = vld [vmem:[%s1 + $0x400] sm:$0xff]
  %v170 = vld [vmem:[%s1 + $0x408] sm:$0xff]
  %v171 = vld [vmem:[%s1 + $0x410] sm:$0xff]
  %v172 = vld [vmem:[%s1 + $0x418] sm:$0xff]
  %v173 = vld [vmem:[%s1 + $0x420] sm:$0xff]
  %v174 = vld [vmem:[%s1 + $0x428] sm:$0xff]
  %v175 = vld [vmem:[%s1 + $0x430] sm:$0xff]
  %v176 = vld [vmem:[%s1 + $0x438] sm:$0xff]
  %v177 = vld [vmem:[%s1 + $0x440] sm:$0xff]
  %v178 = vld [vmem:[%s1 + $0x448] sm:$0xff]
  %v179 = vld [vmem:[%s1 + $0x450] sm:$0xff]
  %v180 = vld [vmem:[%s1 + $0x458] sm:$0xff]
  %v181 = vld [vmem:[%s1 + $0x460] sm:$0xff]
  %v182 = vld [vmem:[%s1 + $0x468] sm:$0xff]
  %v183 = vld [vmem:[%s1 + $0x470] sm:$0xff]
  %v184 = vld [vmem:[%s1 + $0x478] sm:$0xff]
  %v185 = vld [vmem:[%s2] sm:$0x1]
  %v187 = vlaneseq
  %v188 = vshrl.u32 %v187, 7
  %v189 = vsub.s32 0, %v188
  %v190 = vrot.slane %v185, %v189
  %192 = vmatprep.subr.mxu0 0.0
  %193 = vmatpush1.msra.mxu0 %v56
  %194 = vmatprep.subr.mxu0 0.0
  %195 = vmatpush1.msra.mxu0 %v55
  %196 = vmatprep.subr.mxu0 0.0
  %197 = vmatpush1.msra.mxu0 %v54
  %198 = vmatprep.subr.mxu0 0.0
  %199 = vmatpush1.msra.mxu0 %v53
  %200 = vmatprep.subr.mxu0 0.0
  %201 = vmatpush1.msra.mxu0 %v52
  %202 = vmatprep.subr.mxu0 0.0
  %203 = vmatpush1.msra.mxu0 %v51
  %204 = vmatprep.subr.mxu0 0.0
  %205 = vmatpush1.msra.mxu0 %v50
  %206 = vmatprep.subr.mxu0 0.0
  %207 = vmatpush1.msra.mxu0 %v49
  %208 = vmatprep.subr.mxu0 0.0
  %209 = vmatpush1.msra.mxu0 %v48
  %210 = vmatprep.subr.mxu0 0.0
  %211 = vmatpush1.msra.mxu0 %v47
  %212 = vmatprep.subr.mxu0 0.0
  %213 = vmatpush1.msra.mxu0 %v46
  %214 = vmatprep.subr.mxu0 0.0
  %215 = vmatpush1.msra.mxu0 %v45
  %216 = vmatprep.subr.mxu0 0.0
  %217 = vmatpush1.msra.mxu0 %v44
  %218 = vmatprep.subr.mxu0 0.0
  %219 = vmatpush1.msra.mxu0 %v43
  %220 = vmatprep.subr.mxu0 0.0
  %221 = vmatpush1.msra.mxu0 %v42
  %222 = vmatprep.subr.mxu0 0.0
  %223 = vmatpush1.msra.mxu0 %v41
  %224 = vmatprep.subr.mxu0 0.0
  %225 = vmatpush2.msra.mxu0 %v72
  %226 = vmatprep.subr.mxu0 0.0
  %227 = vmatpush2.msra.mxu0 %v71
  %228 = vmatprep.subr.mxu0 0.0
  %229 = vmatpush2.msra.mxu0 %v70
  %230 = vmatprep.subr.mxu0 0.0
  %231 = vmatpush2.msra.mxu0 %v69
  %232 = vmatprep.subr.mxu0 0.0
  %233 = vmatpush2.msra.mxu0 %v68
  %234 = vmatprep.subr.mxu0 0.0
  %235 = vmatpush2.msra.mxu0 %v67
  %236 = vmatprep.subr.mxu0 0.0
  %237 = vmatpush2.msra.mxu0 %v66
  %238 = vmatprep.subr.mxu0 0.0
  %239 = vmatpush2.msra.mxu0 %v65
  %240 = vmatprep.subr.mxu0 0.0
  %241 = vmatpush2.msra.mxu0 %v64
  %242 = vmatprep.subr.mxu0 0.0
  %243 = vmatpush2.msra.mxu0 %v63
  %244 = vmatprep.subr.mxu0 0.0
  %245 = vmatpush2.msra.mxu0 %v62
  %246 = vmatprep.subr.mxu0 0.0
  %247 = vmatpush2.msra.mxu0 %v61
  %248 = vmatprep.subr.mxu0 0.0
  %249 = vmatpush2.msra.mxu0 %v60
  %250 = vmatprep.subr.mxu0 0.0
  %251 = vmatpush2.msra.mxu0 %v59
  %252 = vmatprep.subr.mxu0 0.0
  %253 = vmatpush2.msra.mxu0 %v58
  %254 = vmatprep.subr.mxu0 0.0
  %255 = vmatpush2.msra.mxu0 %v57
  %256 = vmatprep.mubr.f32.mxu0 %v33
  %257 = vmatmul.mubr.f32.gmra.mxu0 %v32
  %v258 = vpop.f32.mrf.mxu0
  %v259 = vadd.f32 %v190, %v258
  %v260 = vpop.f32.mrf.mxu0
  %261 = vdwg.mxu0
  %262 = vmatprep.subr.mxu0 0.0
  %263 = vmatpush1.msra.mxu0 %v88
  %264 = vmatprep.subr.mxu0 0.0
  %265 = vmatpush1.msra.mxu0 %v87
  %266 = vmatprep.subr.mxu0 0.0
  %267 = vmatpush1.msra.mxu0 %v86
  %268 = vmatprep.subr.mxu0 0.0
  %269 = vmatpush1.msra.mxu0 %v85
  %270 = vmatprep.subr.mxu0 0.0
  %271 = vmatpush1.msra.mxu0 %v84
  %272 = vmatprep.subr.mxu0 0.0
  %273 = vmatpush1.msra.mxu0 %v83
  %274 = vmatprep.subr.mxu0 0.0
  %275 = vmatpush1.msra.mxu0 %v82
  %276 = vmatprep.subr.mxu0 0.0
  %277 = vmatpush1.msra.mxu0 %v81
  %278 = vmatprep.subr.mxu0 0.0
  %279 = vmatpush1.msra.mxu0 %v80
  %280 = vmatprep.subr.mxu0 0.0
  %281 = vmatpush1.msra.mxu0 %v79
  %282 = vmatprep.subr.mxu0 0.0
  %283 = vmatpush1.msra.mxu0 %v78
  %284 = vmatprep.subr.mxu0 0.0
  %285 = vmatpush1.msra.mxu0 %v77
  %286 = vmatprep.subr.mxu0 0.0
  %287 = vmatpush1.msra.mxu0 %v76
  %288 = vmatprep.subr.mxu0 0.0
  %289 = vmatpush1.msra.mxu0 %v75
  %290 = vmatprep.subr.mxu0 0.0
  %291 = vmatpush1.msra.mxu0 %v74
  %292 = vmatprep.subr.mxu0 0.0
  %293 = vmatpush1.msra.mxu0 %v73
  %294 = vmatprep.subr.mxu0 0.0
  %295 = vmatpush2.msra.mxu0 %v104
  %296 = vmatprep.subr.mxu0 0.0
  %297 = vmatpush2.msra.mxu0 %v103
  %298 = vmatprep.subr.mxu0 0.0
  %299 = vmatpush2.msra.mxu0 %v102
  %300 = vmatprep.subr.mxu0 0.0
  %301 = vmatpush2.msra.mxu0 %v101
  %302 = vmatprep.subr.mxu0 0.0
  %303 = vmatpush2.msra.mxu0 %v100
  %304 = vmatprep.subr.mxu0 0.0
  %305 = vmatpush2.msra.mxu0 %v99
  %306 = vmatprep.subr.mxu0 0.0
  %307 = vmatpush2.msra.mxu0 %v98
  %308 = vmatprep.subr.mxu0 0.0
  %309 = vmatpush2.msra.mxu0 %v97
  %310 = vmatprep.subr.mxu0 0.0
  %311 = vmatpush2.msra.mxu0 %v96
  %312 = vmatprep.subr.mxu0 0.0
  %313 = vmatpush2.msra.mxu0 %v95
  %314 = vmatprep.subr.mxu0 0.0
  %315 = vmatpush2.msra.mxu0 %v94
  %316 = vmatprep.subr.mxu0 0.0
  %317 = vmatpush2.msra.mxu0 %v93
  %318 = vmatprep.subr.mxu0 0.0
  %319 = vmatpush2.msra.mxu0 %v92
  %320 = vmatprep.subr.mxu0 0.0
  %321 = vmatpush2.msra.mxu0 %v91
  %322 = vmatprep.subr.mxu0 0.0
  %323 = vmatpush2.msra.mxu0 %v90
  %324 = vmatprep.subr.mxu0 0.0
  %325 = vmatpush2.msra.mxu0 %v89
  %326 = vmatprep.mubr.f32.mxu0 %v35
  %327 = vmatmul.mubr.f32.gmra.mxu0 %v34
  %v328 = vpop.f32.mrf.mxu0
  %v329 = vadd.f32 %v259, %v328
  %v330 = vpop.f32.mrf.mxu0
  %331 = vdwg.mxu0
  %332 = vmatprep.subr.mxu0 0.0
  %333 = vmatpush1.msra.mxu0 %v120
  %334 = vmatprep.subr.mxu0 0.0
  %335 = vmatpush1.msra.mxu0 %v119
  %336 = vmatprep.subr.mxu0 0.0
  %337 = vmatpush1.msra.mxu0 %v118
  %338 = vmatprep.subr.mxu0 0.0
  %339 = vmatpush1.msra.mxu0 %v117
  %340 = vmatprep.subr.mxu0 0.0
  %341 = vmatpush1.msra.mxu0 %v116
  %342 = vmatprep.subr.mxu0 0.0
  %343 = vmatpush1.msra.mxu0 %v115
  %344 = vmatprep.subr.mxu0 0.0
  %345 = vmatpush1.msra.mxu0 %v114
  %346 = vmatprep.subr.mxu0 0.0
  %347 = vmatpush1.msra.mxu0 %v113
  %348 = vmatprep.subr.mxu0 0.0
  %349 = vmatpush1.msra.mxu0 %v112
  %350 = vmatprep.subr.mxu0 0.0
  %351 = vmatpush1.msra.mxu0 %v111
  %352 = vmatprep.subr.mxu0 0.0
  %353 = vmatpush1.msra.mxu0 %v110
  %354 = vmatprep.subr.mxu0 0.0
  %355 = vmatpush1.msra.mxu0 %v109
  %356 = vmatprep.subr.mxu0 0.0
  %357 = vmatpush1.msra.mxu0 %v108
  %358 = vmatprep.subr.mxu0 0.0
  %359 = vmatpush1.msra.mxu0 %v107
  %360 = vmatprep.subr.mxu0 0.0
  %361 = vmatpush1.msra.mxu0 %v106
  %362 = vmatprep.subr.mxu0 0.0
  %363 = vmatpush1.msra.mxu0 %v105
  %364 = vmatprep.subr.mxu0 0.0
  %365 = vmatpush2.msra.mxu0 %v136
  %366 = vmatprep.subr.mxu0 0.0
  %367 = vmatpush2.msra.mxu0 %v135
  %368 = vmatprep.subr.mxu0 0.0
  %369 = vmatpush2.msra.mxu0 %v134
  %370 = vmatprep.subr.mxu0 0.0
  %371 = vmatpush2.msra.mxu0 %v133
  %372 = vmatprep.subr.mxu0 0.0
  %373 = vmatpush2.msra.mxu0 %v132
  %374 = vmatprep.subr.mxu0 0.0
  %375 = vmatpush2.msra.mxu0 %v131
  %376 = vmatprep.subr.mxu0 0.0
  %377 = vmatpush2.msra.mxu0 %v130
  %378 = vmatprep.subr.mxu0 0.0
  %379 = vmatpush2.msra.mxu0 %v129
  %380 = vmatprep.subr.mxu0 0.0
  %381 = vmatpush2.msra.mxu0 %v128
  %382 = vmatprep.subr.mxu0 0.0
  %383 = vmatpush2.msra.mxu0 %v127
  %384 = vmatprep.subr.mxu0 0.0
  %385 = vmatpush2.msra.mxu0 %v126
  %386 = vmatprep.subr.mxu0 0.0
  %387 = vmatpush2.msra.mxu0 %v125
  %388 = vmatprep.subr.mxu0 0.0
  %389 = vmatpush2.msra.mxu0 %v124
  %390 = vmatprep.subr.mxu0 0.0
  %391 = vmatpush2.msra.mxu0 %v123
  %392 = vmatprep.subr.mxu0 0.0
  %393 = vmatpush2.msra.mxu0 %v122
  %394 = vmatprep.subr.mxu0 0.0
  %395 = vmatpush2.msra.mxu0 %v121
  %396 = vmatprep.mubr.f32.mxu0 %v37
  %397 = vmatmul.mubr.f32.gmra.mxu0 %v36
  %v398 = vpop.f32.mrf.mxu0
  %v399 = vadd.f32 %v329, %v398
  %v400 = vpop.f32.mrf.mxu0
  %401 = vdwg.mxu0
  %402 = vmatprep.subr.mxu0 0.0
  %403 = vmatpush1.msra.mxu0 %v152
  %404 = vmatprep.subr.mxu0 0.0
  %405 = vmatpush1.msra.mxu0 %v151
  %406 = vmatprep.subr.mxu0 0.0
  %407 = vmatpush1.msra.mxu0 %v150
  %408 = vmatprep.subr.mxu0 0.0
  %409 = vmatpush1.msra.mxu0 %v149
  %410 = vmatprep.subr.mxu0 0.0
  %411 = vmatpush1.msra.mxu0 %v148
  %412 = vmatprep.subr.mxu0 0.0
  %413 = vmatpush1.msra.mxu0 %v147
  %414 = vmatprep.subr.mxu0 0.0
  %415 = vmatpush1.msra.mxu0 %v146
  %416 = vmatprep.subr.mxu0 0.0
  %417 = vmatpush1.msra.mxu0 %v145
  %418 = vmatprep.subr.mxu0 0.0
  %419 = vmatpush1.msra.mxu0 %v144
  %420 = vmatprep.subr.mxu0 0.0
  %421 = vmatpush1.msra.mxu0 %v143
  %422 = vmatprep.subr.mxu0 0.0
  %423 = vmatpush1.msra.mxu0 %v142
  %424 = vmatprep.subr.mxu0 0.0
  %425 = vmatpush1.msra.mxu0 %v141
  %426 = vmatprep.subr.mxu0 0.0
  %427 = vmatpush1.msra.mxu0 %v140
  %428 = vmatprep.subr.mxu0 0.0
  %429 = vmatpush1.msra.mxu0 %v139
  %430 = vmatprep.subr.mxu0 0.0
  %431 = vmatpush1.msra.mxu0 %v138
  %432 = vmatprep.subr.mxu0 0.0
  %433 = vmatpush1.msra.mxu0 %v137
  %434 = vmatprep.subr.mxu0 0.0
  %435 = vmatpush2.msra.mxu0 %v168
  %436 = vmatprep.subr.mxu0 0.0
  %437 = vmatpush2.msra.mxu0 %v167
  %438 = vmatprep.subr.mxu0 0.0
  %439 = vmatpush2.msra.mxu0 %v166
  %440 = vmatprep.subr.mxu0 0.0
  %441 = vmatpush2.msra.mxu0 %v165
  %442 = vmatprep.subr.mxu0 0.0
  %443 = vmatpush2.msra.mxu0 %v164
  %444 = vmatprep.subr.mxu0 0.0
  %445 = vmatpush2.msra.mxu0 %v163
  %446 = vmatprep.subr.mxu0 0.0
  %447 = vmatpush2.msra.mxu0 %v162
  %448 = vmatprep.subr.mxu0 0.0
  %449 = vmatpush2.msra.mxu0 %v161
  %450 = vmatprep.subr.mxu0 0.0
  %451 = vmatpush2.msra.mxu0 %v160
  %452 = vmatprep.subr.mxu0 0.0
  %453 = vmatpush2.msra.mxu0 %v159
  %454 = vmatprep.subr.mxu0 0.0
  %455 = vmatpush2.msra.mxu0 %v158
  %456 = vmatprep.subr.mxu0 0.0
  %457 = vmatpush2.msra.mxu0 %v157
  %458 = vmatprep.subr.mxu0 0.0
  %459 = vmatpush2.msra.mxu0 %v156
  %460 = vmatprep.subr.mxu0 0.0
  %461 = vmatpush2.msra.mxu0 %v155
  %462 = vmatprep.subr.mxu0 0.0
  %463 = vmatpush2.msra.mxu0 %v154
  %464 = vmatprep.subr.mxu0 0.0
  %465 = vmatpush2.msra.mxu0 %v153
  %466 = vmatprep.mubr.f32.mxu0 %v39
  %467 = vmatmul.mubr.f32.gmra.mxu0 %v38
  %v468 = vpop.f32.mrf.mxu0
  %v469 = vadd.f32 %v399, %v468
  %v470 = vpop.f32.mrf.mxu0
  %471 = vdwg.mxu0
  %472 = vmatprep.subr.mxu0 0.0
  %473 = vmatpush1.msra.mxu0 %v184
  %474 = vmatprep.subr.mxu0 0.0
  %475 = vmatpush1.msra.mxu0 %v183
  %476 = vmatprep.subr.mxu0 0.0
  %477 = vmatpush1.msra.mxu0 %v182
  %478 = vmatprep.subr.mxu0 0.0
  %479 = vmatpush1.msra.mxu0 %v181
  %480 = vmatprep.subr.mxu0 0.0
  %481 = vmatpush1.msra.mxu0 %v180
  %482 = vmatprep.subr.mxu0 0.0
  %483 = vmatpush1.msra.mxu0 %v179
  %484 = vmatprep.subr.mxu0 0.0
  %485 = vmatpush1.msra.mxu0 %v178
  %486 = vmatprep.subr.mxu0 0.0
  %487 = vmatpush1.msra.mxu0 %v177
  %488 = vmatprep.subr.mxu0 0.0
  %489 = vmatpush1.msra.mxu0 %v176
  %490 = vmatprep.subr.mxu0 0.0
  %491 = vmatpush1.msra.mxu0 %v175
  %492 = vmatprep.subr.mxu0 0.0
  %493 = vmatpush1.msra.mxu0 %v174
  %494 = vmatprep.subr.mxu0 0.0
  %495 = vmatpush1.msra.mxu0 %v173
  %496 = vmatprep.subr.mxu0 0.0
  %497 = vmatpush1.msra.mxu0 %v172
  %498 = vmatprep.subr.mxu0 0.0
  %499 = vmatpush1.msra.mxu0 %v171
  %500 = vmatprep.subr.mxu0 0.0
  %501 = vmatpush1.msra.mxu0 %v170
  %502 = vmatprep.subr.mxu0 0.0
  %503 = vmatpush1.msra.mxu0 %v169
  %504 = vmatprep.subr.mxu0 0.0
  %505 = vmatpush2.msra.mxu0 0.0
  %506 = vmatprep.subr.mxu0 0.0
  %507 = vmatpush2.msra.mxu0 0.0
  %508 = vmatprep.subr.mxu0 0.0
  %509 = vmatpush2.msra.mxu0 0.0
  %510 = vmatprep.subr.mxu0 0.0
  %511 = vmatpush2.msra.mxu0 0.0
  %512 = vmatprep.subr.mxu0 0.0
  %513 = vmatpush2.msra.mxu0 0.0
  %514 = vmatprep.subr.mxu0 0.0
  %515 = vmatpush2.msra.mxu0 0.0
  %516 = vmatprep.subr.mxu0 0.0
  %517 = vmatpush2.msra.mxu0 0.0
  %518 = vmatprep.subr.mxu0 0.0
  %519 = vmatpush2.msra.mxu0 0.0
  %520 = vmatprep.subr.mxu0 0.0
  %521 = vmatpush2.msra.mxu0 0.0
  %522 = vmatprep.subr.mxu0 0.0
  %523 = vmatpush2.msra.mxu0 0.0
  %524 = vmatprep.subr.mxu0 0.0
  %525 = vmatpush2.msra.mxu0 0.0
  %526 = vmatprep.subr.mxu0 0.0
  %527 = vmatpush2.msra.mxu0 0.0
  %528 = vmatprep.subr.mxu0 0.0
  %529 = vmatpush2.msra.mxu0 0.0
  %530 = vmatprep.subr.mxu0 0.0
  %531 = vmatpush2.msra.mxu0 0.0
  %532 = vmatprep.subr.mxu0 0.0
  %533 = vmatpush2.msra.mxu0 0.0
  %534 = vmatprep.subr.mxu0 0.0
  %535 = vmatpush2.msra.mxu0 0.0
  %536 = vmatprep.mubr.f32.mxu0 0.0
  %537 = vmatmul.mubr.f32.gmra.mxu0 %v40
  %v538 = vpop.f32.mrf.mxu0
  %v539 = vadd.f32 %v469, %v538
  %v540 = vpop.f32.mrf.mxu0
  %541 = vdwg.mxu0
  %v542 = vtanh.pop %v539
  %v543 = vld [vmem:[%s3] sm:$0xff]
  %v544 = vld [vmem:[%s3 + $0x8] sm:$0xff]
  %v545 = vld [vmem:[%s3 + $0x10] sm:$0xff]
  %v546 = vld [vmem:[%s3 + $0x18] sm:$0xff]
  %v547 = vld [vmem:[%s3 + $0x20] sm:$0xff]
  %v548 = vld [vmem:[%s3 + $0x28] sm:$0xff]
  %v549 = vld [vmem:[%s3 + $0x30] sm:$0xff]
  %v550 = vld [vmem:[%s3 + $0x38] sm:$0xff]
  %v551 = vld [vmem:[%s3 + $0x40] sm:$0xff]
  %v552 = vld [vmem:[%s3 + $0x48] sm:$0xff]
  %v553 = vld [vmem:[%s3 + $0x50] sm:$0xff]
  %v554 = vld [vmem:[%s3 + $0x58] sm:$0xff]
  %v555 = vld [vmem:[%s3 + $0x60] sm:$0xff]
  %v556 = vld [vmem:[%s3 + $0x68] sm:$0xff]
  %v557 = vld [vmem:[%s3 + $0x70] sm:$0xff]
  %v558 = vld [vmem:[%s3 + $0x78] sm:$0xff]
  %v559 = vld [vmem:[%s4] sm:$0x1]
  %v561 = vlaneseq
  %v562 = vshrl.u32 %v561, 7
  %v563 = vsub.s32 0, %v562
  %v564 = vrot.slane %v559, %v563
  %566 = vmatprep.subr.mxu0 0.0
  %567 = vmatpush1.msra.mxu0 %v558
  %568 = vmatprep.subr.mxu0 0.0
  %569 = vmatpush1.msra.mxu0 %v557
  %570 = vmatprep.subr.mxu0 0.0
  %571 = vmatpush1.msra.mxu0 %v556
  %572 = vmatprep.subr.mxu0 0.0
  %573 = vmatpush1.msra.mxu0 %v555
  %574 = vmatprep.subr.mxu0 0.0
  %575 = vmatpush1.msra.mxu0 %v554
  %576 = vmatprep.subr.mxu0 0.0
  %577 = vmatpush1.msra.mxu0 %v553
  %578 = vmatprep.subr.mxu0 0.0
  %579 = vmatpush1.msra.mxu0 %v552
  %580 = vmatprep.subr.mxu0 0.0
  %581 = vmatpush1.msra.mxu0 %v551
  %582 = vmatprep.subr.mxu0 0.0
  %583 = vmatpush1.msra.mxu0 %v550
  %584 = vmatprep.subr.mxu0 0.0
  %585 = vmatpush1.msra.mxu0 %v549
  %586 = vmatprep.subr.mxu0 0.0
  %587 = vmatpush1.msra.mxu0 %v548
  %588 = vmatprep.subr.mxu0 0.0
  %589 = vmatpush1.msra.mxu0 %v547
  %590 = vmatprep.subr.mxu0 0.0
  %591 = vmatpush1.msra.mxu0 %v546
  %592 = vmatprep.subr.mxu0 0.0
  %593 = vmatpush1.msra.mxu0 %v545
  %594 = vmatprep.subr.mxu0 0.0
  %595 = vmatpush1.msra.mxu0 %v544
  %596 = vmatprep.subr.mxu0 0.0
  %597 = vmatpush1.msra.mxu0 %v543
  %598 = vmatprep.subr.mxu0 0.0
  %599 = vmatpush2.msra.mxu0 0.0
  %600 = vmatprep.subr.mxu0 0.0
  %601 = vmatpush2.msra.mxu0 0.0
  %602 = vmatprep.subr.mxu0 0.0
  %603 = vmatpush2.msra.mxu0 0.0
  %604 = vmatprep.subr.mxu0 0.0
  %605 = vmatpush2.msra.mxu0 0.0
  %606 = vmatprep.subr.mxu0 0.0
  %607 = vmatpush2.msra.mxu0 0.0
  %608 = vmatprep.subr.mxu0 0.0
  %609 = vmatpush2.msra.mxu0 0.0
  %610 = vmatprep.subr.mxu0 0.0
  %611 = vmatpush2.msra.mxu0 0.0
  %612 = vmatprep.subr.mxu0 0.0
  %613 = vmatpush2.msra.mxu0 0.0
  %614 = vmatprep.subr.mxu0 0.0
  %615 = vmatpush2.msra.mxu0 0.0
  %616 = vmatprep.subr.mxu0 0.0
  %617 = vmatpush2.msra.mxu0 0.0
  %618 = vmatprep.subr.mxu0 0.0
  %619 = vmatpush2.msra.mxu0 0.0
  %620 = vmatprep.subr.mxu0 0.0
  %621 = vmatpush2.msra.mxu0 0.0
  %622 = vmatprep.subr.mxu0 0.0
  %623 = vmatpush2.msra.mxu0 0.0
  %624 = vmatprep.subr.mxu0 0.0
  %625 = vmatpush2.msra.mxu0 0.0
  %626 = vmatprep.subr.mxu0 0.0
  %627 = vmatpush2.msra.mxu0 0.0
  %628 = vmatprep.subr.mxu0 0.0
  %629 = vmatpush2.msra.mxu0 0.0
  %630 = vmatprep.mubr.f32.mxu0 0.0
  %631 = vmatmul.mubr.f32.gmra.mxu0 %v542
  %v632 = vpop.f32.mrf.mxu0
  %v633 = vadd.f32 %v564, %v632
  %v634 = vpop.f32.mrf.mxu0
  %635 = vdwg.mxu0
  %v636 = vtanh.pop %v633
  %v637 = vld [vmem:[%s5] sm:$0xff]
  %v638 = vld [vmem:[%s5 + $0x8] sm:$0xff]
  %v639 = vld [vmem:[%s5 + $0x10] sm:$0xff]
  %v640 = vld [vmem:[%s5 + $0x18] sm:$0xff]
  %v641 = vld [vmem:[%s5 + $0x20] sm:$0xff]
  %v642 = vld [vmem:[%s5 + $0x28] sm:$0xff]
  %v643 = vld [vmem:[%s5 + $0x30] sm:$0xff]
  %v644 = vld [vmem:[%s5 + $0x38] sm:$0xff]
  %v645 = vld [vmem:[%s5 + $0x40] sm:$0xff]
  %v646 = vld [vmem:[%s5 + $0x48] sm:$0xff]
  %v647 = vld [vmem:[%s5 + $0x50] sm:$0xff]
  %v648 = vld [vmem:[%s5 + $0x58] sm:$0xff]
  %v649 = vld [vmem:[%s5 + $0x60] sm:$0xff]
  %v650 = vld [vmem:[%s5 + $0x68] sm:$0xff]
  %v651 = vld [vmem:[%s5 + $0x70] sm:$0xff]
  %v652 = vld [vmem:[%s5 + $0x78] sm:$0xff]
  %v653 = vld [vmem:[%s6] sm:$0x1]
  %v655 = vlaneseq
  %v656 = vshrl.u32 %v655, 7
  %v657 = vsub.s32 0, %v656
  %v658 = vrot.slane %v653, %v657
  %660 = vmatprep.subr.mxu0 0.0
  %661 = vmatpush1.msra.mxu0 %v652
  %662 = vmatprep.subr.mxu0 0.0
  %663 = vmatpush1.msra.mxu0 %v651
  %664 = vmatprep.subr.mxu0 0.0
  %665 = vmatpush1.msra.mxu0 %v650
  %666 = vmatprep.subr.mxu0 0.0
  %667 = vmatpush1.msra.mxu0 %v649
  %668 = vmatprep.subr.mxu0 0.0
  %669 = vmatpush1.msra.mxu0 %v648
  %670 = vmatprep.subr.mxu0 0.0
  %671 = vmatpush1.msra.mxu0 %v647
  %672 = vmatprep.subr.mxu0 0.0
  %673 = vmatpush1.msra.mxu0 %v646
  %674 = vmatprep.subr.mxu0 0.0
  %675 = vmatpush1.msra.mxu0 %v645
  %676 = vmatprep.subr.mxu0 0.0
  %677 = vmatpush1.msra.mxu0 %v644
  %678 = vmatprep.subr.mxu0 0.0
  %679 = vmatpush1.msra.mxu0 %v643
  %680 = vmatprep.subr.mxu0 0.0
  %681 = vmatpush1.msra.mxu0 %v642
  %682 = vmatprep.subr.mxu0 0.0
  %683 = vmatpush1.msra.mxu0 %v641
  %684 = vmatprep.subr.mxu0 0.0
  %685 = vmatpush1.msra.mxu0 %v640
  %686 = vmatprep.subr.mxu0 0.0
  %687 = vmatpush1.msra.mxu0 %v639
  %688 = vmatprep.subr.mxu0 0.0
  %689 = vmatpush1.msra.mxu0 %v638
  %690 = vmatprep.subr.mxu0 0.0
  %691 = vmatpush1.msra.mxu0 %v637
  %692 = vmatprep.subr.mxu0 0.0
  %693 = vmatpush2.msra.mxu0 0.0
  %694 = vmatprep.subr.mxu0 0.0
  %695 = vmatpush2.msra.mxu0 0.0
  %696 = vmatprep.subr.mxu0 0.0
  %697 = vmatpush2.msra.mxu0 0.0
  %698 = vmatprep.subr.mxu0 0.0
  %699 = vmatpush2.msra.mxu0 0.0
  %700 = vmatprep.subr.mxu0 0.0
  %701 = vmatpush2.msra.mxu0 0.0
  %702 = vmatprep.subr.mxu0 0.0
  %703 = vmatpush2.msra.mxu0 0.0
  %704 = vmatprep.subr.mxu0 0.0
  %705 = vmatpush2.msra.mxu0 0.0
  %706 = vmatprep.subr.mxu0 0.0
  %707 = vmatpush2.msra.mxu0 0.0
  %708 = vmatprep.subr.mxu0 0.0
  %709 = vmatpush2.msra.mxu0 0.0
  %710 = vmatprep.subr.mxu0 0.0
  %711 = vmatpush2.msra.mxu0 0.0
  %712 = vmatprep.subr.mxu0 0.0
  %713 = vmatpush2.msra.mxu0 0.0
  %714 = vmatprep.subr.mxu0 0.0
  %715 = vmatpush2.msra.mxu0 0.0
  %716 = vmatprep.subr.mxu0 0.0
  %717 = vmatpush2.msra.mxu0 0.0
  %718 = vmatprep.subr.mxu0 0.0
  %719 = vmatpush2.msra.mxu0 0.0
  %720 = vmatprep.subr.mxu0 0.0
  %721 = vmatpush2.msra.mxu0 0.0
  %722 = vmatprep.subr.mxu0 0.0
  %723 = vmatpush2.msra.mxu0 0.0
  %724 = vmatprep.mubr.f32.mxu0 0.0
  %725 = vmatmul.mubr.f32.gmra.mxu0 %v636
  %v726 = vpop.f32.mrf.mxu0
  %v727 = vadd.f32 %v658, %v726
  %v728 = vpop.f32.mrf.mxu0
  %729 = vdwg.mxu0
  %v730 = vmax.f32 %v727, -1.0
  %v731 = vmin.f32 %v730, 1.0
  %v732 = vld [vmem:[%s7] sm:$0xff]
  %v733 = vld [vmem:[%s7 + $0x8] sm:$0xff]
  %v734 = vld [vmem:[%s7 + $0x10] sm:$0xff]
  %v735 = vld [vmem:[%s7 + $0x18] sm:$0xff]
  %v736 = vld [vmem:[%s7 + $0x20] sm:$0xff]
  %v737 = vld [vmem:[%s7 + $0x28] sm:$0xff]
  %v738 = vld [vmem:[%s7 + $0x30] sm:$0xff]
  %v739 = vld [vmem:[%s7 + $0x38] sm:$0xff]
  %v740 = vld [vmem:[%s7 + $0x40] sm:$0xff]
  %v741 = vld [vmem:[%s7 + $0x48] sm:$0xff]
  %v742 = vld [vmem:[%s7 + $0x50] sm:$0xff]
  %v743 = vld [vmem:[%s7 + $0x58] sm:$0xff]
  %v744 = vld [vmem:[%s7 + $0x60] sm:$0xff]
  %v745 = vld [vmem:[%s7 + $0x68] sm:$0xff]
  %v746 = vld [vmem:[%s7 + $0x70] sm:$0xff]
  %v747 = vld [vmem:[%s7 + $0x78] sm:$0xff]
  %v748 = vld [vmem:[%s8] sm:$0x1]
  %v750 = vlaneseq
  %v751 = vshrl.u32 %v750, 7
  %v752 = vsub.s32 0, %v751
  %v753 = vrot.slane %v748, %v752
  %755 = vmatprep.subr.mxu0 0.0
  %756 = vmatpush1.msra.mxu0 %v747
  %757 = vmatprep.subr.mxu0 0.0
  %758 = vmatpush1.msra.mxu0 %v746
  %759 = vmatprep.subr.mxu0 0.0
  %760 = vmatpush1.msra.mxu0 %v745
  %761 = vmatprep.subr.mxu0 0.0
  %762 = vmatpush1.msra.mxu0 %v744
  %763 = vmatprep.subr.mxu0 0.0
  %764 = vmatpush1.msra.mxu0 %v743
  %765 = vmatprep.subr.mxu0 0.0
  %766 = vmatpush1.msra.mxu0 %v742
  %767 = vmatprep.subr.mxu0 0.0
  %768 = vmatpush1.msra.mxu0 %v741
  %769 = vmatprep.subr.mxu0 0.0
  %770 = vmatpush1.msra.mxu0 %v740
  %771 = vmatprep.subr.mxu0 0.0
  %772 = vmatpush1.msra.mxu0 %v739
  %773 = vmatprep.subr.mxu0 0.0
  %774 = vmatpush1.msra.mxu0 %v738
  %775 = vmatprep.subr.mxu0 0.0
  %776 = vmatpush1.msra.mxu0 %v737
  %777 = vmatprep.subr.mxu0 0.0
  %778 = vmatpush1.msra.mxu0 %v736
  %779 = vmatprep.subr.mxu0 0.0
  %780 = vmatpush1.msra.mxu0 %v735
  %781 = vmatprep.subr.mxu0 0.0
  %782 = vmatpush1.msra.mxu0 %v734
  %783 = vmatprep.subr.mxu0 0.0
  %784 = vmatpush1.msra.mxu0 %v733
  %785 = vmatprep.subr.mxu0 0.0
  %786 = vmatpush1.msra.mxu0 %v732
  %787 = vmatprep.subr.mxu0 0.0
  %788 = vmatpush2.msra.mxu0 0.0
  %789 = vmatprep.subr.mxu0 0.0
  %790 = vmatpush2.msra.mxu0 0.0
  %791 = vmatprep.subr.mxu0 0.0
  %792 = vmatpush2.msra.mxu0 0.0
  %793 = vmatprep.subr.mxu0 0.0
  %794 = vmatpush2.msra.mxu0 0.0
  %795 = vmatprep.subr.mxu0 0.0
  %796 = vmatpush2.msra.mxu0 0.0
  %797 = vmatprep.subr.mxu0 0.0
  %798 = vmatpush2.msra.mxu0 0.0
  %799 = vmatprep.subr.mxu0 0.0
  %800 = vmatpush2.msra.mxu0 0.0
  %801 = vmatprep.subr.mxu0 0.0
  %802 = vmatpush2.msra.mxu0 0.0
  %803 = vmatprep.subr.mxu0 0.0
  %804 = vmatpush2.msra.mxu0 0.0
  %805 = vmatprep.subr.mxu0 0.0
  %806 = vmatpush2.msra.mxu0 0.0
  %807 = vmatprep.subr.mxu0 0.0
  %808 = vmatpush2.msra.mxu0 0.0
  %809 = vmatprep.subr.mxu0 0.0
  %810 = vmatpush2.msra.mxu0 0.0
  %811 = vmatprep.subr.mxu0 0.0
  %812 = vmatpush2.msra.mxu0 0.0
  %813 = vmatprep.subr.mxu0 0.0
  %814 = vmatpush2.msra.mxu0 0.0
  %815 = vmatprep.subr.mxu0 0.0
  %816 = vmatpush2.msra.mxu0 0.0
  %817 = vmatprep.subr.mxu0 0.0
  %818 = vmatpush2.msra.mxu0 0.0
  %819 = vmatprep.mubr.f32.mxu0 0.0
  %820 = vmatmul.mubr.f32.gmra.mxu0 %v731
  %v821 = vpop.f32.mrf.mxu0
  %v822 = vadd.f32 %v753, %v821
  %v823 = vpop.f32.mrf.mxu0
  %824 = vdwg.mxu0
  %v825 = vmax.f32 %v822, -1.0
  %v826 = vmin.f32 %v825, 1.0
  %827 = vst [vmem:[%s9] sm:$0xff] %v826
  // Predicated region
  $region38: #{pilotnet_forward.11} parent=0 // pred_check
    _
  $region39: #{pilotnet_forward.11} parent=0 // pred_check_branch
    %829 = sbr.rel (0) target = $region41
  $region40: #{pilotnet_forward.11} parent=0 // pred_region
    _
  $region41: #{pilotnet_forward.11} parent=0 // pred_fallthru
    _
  // Predicated region
  $region42: #{pilotnet_forward.11} parent=0 // pred_check
    _
  $region43: #{pilotnet_forward.11} parent=0 // pred_check_branch
    %831 = sbr.rel (0) target = $region45
  $region44: #{pilotnet_forward.11} parent=0 // pred_region
    _
  $region45: #{pilotnet_forward.11} parent=0 // pred_fallthru
    _

</llo_original>
